<compile_context>
chip_gen: v5e
topology: v5e:2x2
jax: 0.10.0
libtpu: 0.0.40
codegen_flags: <defaults>
</compile_context>

<pallas_src>
import functools

import jax
import jax.numpy as jnp
from jax.experimental import pallas as pl
from jax.experimental.pallas import tpu as pltpu

NOISE = 64            # latent dim (nn.Linear(noise, 256))
H1, H2, H3 = 256, 512, 1024
OUT = 28 * 28         # 784


def _leaky_relu(x, slope=0.2):
    return jnp.where(x > 0, x, slope * x)


def generator_kernel(z_ref,
                     w1_ref, b1_ref,
                     w2_ref, b2_ref,
                     w3_ref, b3_ref,
                     w4_ref, b4_ref,
                     out_ref):
    # All weights arrive in bf16; activations are cast to bf16 right before
    # each dot, accumulation stays f32 (preferred_element_type).
    z = z_ref[...].astype(jnp.bfloat16)

    # Layer 1: (tb, noise) @ (noise, 256) + (1, 256)
    h = jnp.dot(z, w1_ref[...], preferred_element_type=jnp.float32)
    h = _leaky_relu(h + b1_ref[...])

    # Layer 2: (tb, 256) @ (256, 512)
    h = jnp.dot(h.astype(jnp.bfloat16), w2_ref[...],
                preferred_element_type=jnp.float32)
    h = _leaky_relu(h + b2_ref[...])

    # Layer 3: (tb, 512) @ (512, 1024)
    h = jnp.dot(h.astype(jnp.bfloat16), w3_ref[...],
                preferred_element_type=jnp.float32)
    h = _leaky_relu(h + b3_ref[...])

    # Layer 4: (tb, 1024) @ (1024, 784) + Tanh
    h = jnp.dot(h.astype(jnp.bfloat16), w4_ref[...],
                preferred_element_type=jnp.float32)
    h = jnp.tanh(h + b4_ref[...])

    out_ref[...] = h.astype(out_ref.dtype)


@functools.partial(jax.jit, static_argnames=("batch_tile",))
def generator_forward(z, kparams, batch_tile=128):
    """Fused generator MLP. Returns (B, 1, 28, 28) float32, matching PyTorch."""
    w1, b1, w2, b2, w3, b3, w4, b4 = kparams
    B, noise = z.shape

    # Clamp tile to the batch and pad the batch up to a tile multiple so any
    # batch size works (padding is sliced off afterwards; slice on the leading
    # dim is contiguous and cheap).
    tile = min(batch_tile, B)
    n_tiles = -(-B // tile)
    Bp = n_tiles * tile
    zp = z if Bp == B else jnp.pad(z, ((0, Bp - B), (0, 0)))

    full = lambda shape: pl.BlockSpec(shape, lambda i: (0, 0))  # resident, no re-DMA

    out = pl.pallas_call(
        generator_kernel,
        out_shape=jax.ShapeDtypeStruct((Bp, OUT), jnp.float32),
        grid_spec=pltpu.PrefetchScalarGridSpec(
            num_scalar_prefetch=0,
            grid=(n_tiles,),
            in_specs=[
                pl.BlockSpec((tile, noise), lambda i: (i, 0)),   # z tile
                full((noise, H1)), full((1, H1)),
                full((H1, H2)), full((1, H2)),
                full((H2, H3)), full((1, H3)),
                full((H3, OUT)), full((1, OUT)),
            ],
            out_specs=pl.BlockSpec((tile, OUT), lambda i: (i, 0)),
        ),
        compiler_params=pltpu.CompilerParams(
            dimension_semantics=("parallel",),   # shards batch tiles across TCs (v7x)
            vmem_limit_bytes=32 << 20,
        ),
    )(zp, w1, b1, w2, b2, w3, b3, w4, b4)

    img = out if Bp == B else out[:B]
    return img.reshape(B, 1, 28, 28)


def init_params(key):
    """Deterministic init matching nn.Linear shapes (f32, (in,out) layout)."""
    ks = jax.random.split(key, 8)

    def lin(kw, kb, din, dout):
        scale = 1.0 / jnp.sqrt(din)
        w = jax.random.uniform(kw, (din, dout), jnp.float32, -scale, scale)
        b = jax.random.uniform(kb, (1, dout), jnp.float32, -scale, scale)
        return w, b

    w1, b1 = lin(ks[0], ks[1], NOISE, H1)
    w2, b2 = lin(ks[2], ks[3], H1, H2)
    w3, b3 = lin(ks[4], ks[5], H2, H3)
    w4, b4 = lin(ks[6], ks[7], H3, OUT)
    return (w1, b1, w2, b2, w3, b3, w4, b4)


def prepare_params(params):
    """One-time conversion: weights -> bf16 (halves HBM traffic), biases f32."""
    w1, b1, w2, b2, w3, b3, w4, b4 = params
    bf = lambda w: w.astype(jnp.bfloat16)
    f32 = lambda b: b.reshape(1, -1).astype(jnp.float32)
    return (bf(w1), f32(b1), bf(w2), f32(b2), bf(w3), f32(b3), bf(w4), f32(b4))


def reference_forward_f32(z, params):
    w1, b1, w2, b2, w3, b3, w4, b4 = params
    h = _leaky_relu(z @ w1 + b1)
    h = _leaky_relu(h @ w2 + b2)
    h = _leaky_relu(h @ w3 + b3)
    h = jnp.tanh(h @ w4 + b4)
    return h.reshape(z.shape[0], 1, 28, 28)


def reference_forward_mixed(z, params):
    """Same bf16-inputs / f32-accumulate recipe as the kernel, in plain JAX."""
    w1, b1, w2, b2, w3, b3, w4, b4 = params
    bf = lambda x: x.astype(jnp.bfloat16)
    dot = lambda a, b: jnp.dot(bf(a), bf(b), preferred_element_type=jnp.float32)
    h = _leaky_relu(dot(z, w1) + b1)
    h = _leaky_relu(dot(h, w2) + b2)
    h = _leaky_relu(dot(h, w3) + b3)
    h = jnp.tanh(dot(h, w4) + b4)
    return h.reshape(z.shape[0], 1, 28, 28)


if __name__ == "__main__":
    key = jax.random.PRNGKey(0)
    kp, kz = jax.random.split(key)
    params = init_params(kp)
    kparams = prepare_params(params)          # bf16 weights, done once

    B = 16
    z = jax.random.normal(kz, (B, NOISE), jnp.float32)

    img = jax.block_until_ready(generator_forward(z, kparams))
    assert img.shape == (B, 1, 28, 28), img.shape

    # Tight check vs. a reference using the identical mixed-precision recipe,
    # and a loose check vs. the pure-f32 PyTorch-equivalent math.
    ref_mixed = reference_forward_mixed(z, params)
    ref_f32 = reference_forward_f32(z, params)
    assert jnp.allclose(img, ref_mixed, atol=2e-3, rtol=2e-3), "mismatch vs mixed ref"
    assert jnp.allclose(img, ref_f32, atol=5e-2, rtol=5e-2), "mismatch vs f32 ref"

    print("KERNEL_OK")
</pallas_src>

<mosaic_0001>
module attributes {stable_mosaic.version = 11 : i64} {
  func.func @generator_kernel(%arg0: i32, %arg1: memref<16x64xf32, #tpu.memory_space<vmem>>, %arg2: memref<64x256xbf16, #tpu.memory_space<vmem>>, %arg3: memref<1x256xf32, #tpu.memory_space<vmem>>, %arg4: memref<256x512xbf16, #tpu.memory_space<vmem>>, %arg5: memref<1x512xf32, #tpu.memory_space<vmem>>, %arg6: memref<512x1024xbf16, #tpu.memory_space<vmem>>, %arg7: memref<1x1024xf32, #tpu.memory_space<vmem>>, %arg8: memref<1024x784xbf16, #tpu.memory_space<vmem>>, %arg9: memref<1x784xf32, #tpu.memory_space<vmem>>, %arg10: memref<16x784xf32, #tpu.memory_space<vmem>>) attributes {dimension_semantics = [#tpu.dimension_semantics<parallel>], iteration_bounds = array<i64: 1>, scalar_prefetch = 0 : i64, scratch_operands = 0 : i64, tpu.core_type = #tpu.core_type<tc>, window_params = [{transform_indices = @transform_0, window_bounds = array<i64: 16, 64>}, {pipeline_mode = #tpu.pipeline_mode<synchronous>, transform_indices = @transform_1, window_bounds = array<i64: 64, 256>}, {pipeline_mode = #tpu.pipeline_mode<synchronous>, transform_indices = @transform_2, window_bounds = array<i64: 1, 256>}, {pipeline_mode = #tpu.pipeline_mode<synchronous>, transform_indices = @transform_3, window_bounds = array<i64: 256, 512>}, {pipeline_mode = #tpu.pipeline_mode<synchronous>, transform_indices = @transform_4, window_bounds = array<i64: 1, 512>}, {pipeline_mode = #tpu.pipeline_mode<synchronous>, transform_indices = @transform_5, window_bounds = array<i64: 512, 1024>}, {pipeline_mode = #tpu.pipeline_mode<synchronous>, transform_indices = @transform_6, window_bounds = array<i64: 1, 1024>}, {pipeline_mode = #tpu.pipeline_mode<synchronous>, transform_indices = @transform_7, window_bounds = array<i64: 1024, 784>}, {pipeline_mode = #tpu.pipeline_mode<synchronous>, transform_indices = @transform_8, window_bounds = array<i64: 1, 784>}, {transform_indices = @transform_9, window_bounds = array<i64: 16, 784>}]} {
    %c0 = arith.constant 0 : index
    %c0_0 = arith.constant 0 : index
    %0 = vector.load %arg1[%c0, %c0_0] : memref<16x64xf32, #tpu.memory_space<vmem>>, vector<16x64xf32>
    %1 = arith.truncf %0 : vector<16x64xf32> to vector<16x64xbf16>
    %c0_1 = arith.constant 0 : index
    %c0_2 = arith.constant 0 : index
    %2 = vector.load %arg2[%c0_1, %c0_2] : memref<64x256xbf16, #tpu.memory_space<vmem>>, vector<64x256xbf16>
    %cst = arith.constant dense<0.000000e+00> : vector<16x256xf32>
    %3 = tpu.matmul %1, %2, %cst {dimension_numbers = #tpu.dot_dimension_numbers<[1], [0], [0], [1], [0, 0, 1, 1], [], []>} : vector<16x64xbf16>, vector<64x256xbf16>, vector<16x256xf32> -> vector<16x256xf32>
    %c0_3 = arith.constant 0 : index
    %c0_4 = arith.constant 0 : index
    %4 = vector.load %arg3[%c0_3, %c0_4] : memref<1x256xf32, #tpu.memory_space<vmem>>, vector<1x256xf32>
    %5 = vector.broadcast %4 : vector<1x256xf32> to vector<16x256xf32>
    %6 = arith.addf %3, %5 : vector<16x256xf32>
    %cst_5 = arith.constant 0.000000e+00 : f32
    %7 = vector.broadcast %cst_5 : f32 to vector<16x256xf32>
    %8 = arith.cmpf ogt, %6, %7 : vector<16x256xf32>
    %cst_6 = arith.constant 2.000000e-01 : f32
    %9 = vector.broadcast %cst_6 : f32 to vector<16x256xf32>
    %10 = arith.mulf %9, %6 : vector<16x256xf32>
    %11 = arith.select %8, %6, %10 : vector<16x256xi1>, vector<16x256xf32>
    %12 = arith.truncf %11 : vector<16x256xf32> to vector<16x256xbf16>
    %c0_7 = arith.constant 0 : index
    %c0_8 = arith.constant 0 : index
    %13 = vector.load %arg4[%c0_7, %c0_8] : memref<256x512xbf16, #tpu.memory_space<vmem>>, vector<256x512xbf16>
    %cst_9 = arith.constant dense<0.000000e+00> : vector<16x512xf32>
    %14 = tpu.matmul %12, %13, %cst_9 {dimension_numbers = #tpu.dot_dimension_numbers<[1], [0], [0], [1], [0, 0, 1, 1], [], []>} : vector<16x256xbf16>, vector<256x512xbf16>, vector<16x512xf32> -> vector<16x512xf32>
    %c0_10 = arith.constant 0 : index
    %c0_11 = arith.constant 0 : index
    %15 = vector.load %arg5[%c0_10, %c0_11] : memref<1x512xf32, #tpu.memory_space<vmem>>, vector<1x512xf32>
    %16 = vector.broadcast %15 : vector<1x512xf32> to vector<16x512xf32>
    %17 = arith.addf %14, %16 : vector<16x512xf32>
    %cst_12 = arith.constant 0.000000e+00 : f32
    %18 = vector.broadcast %cst_12 : f32 to vector<16x512xf32>
    %19 = arith.cmpf ogt, %17, %18 : vector<16x512xf32>
    %cst_13 = arith.constant 2.000000e-01 : f32
    %20 = vector.broadcast %cst_13 : f32 to vector<16x512xf32>
    %21 = arith.mulf %20, %17 : vector<16x512xf32>
    %22 = arith.select %19, %17, %21 : vector<16x512xi1>, vector<16x512xf32>
    %23 = arith.truncf %22 : vector<16x512xf32> to vector<16x512xbf16>
    %c0_14 = arith.constant 0 : index
    %c0_15 = arith.constant 0 : index
    %24 = vector.load %arg6[%c0_14, %c0_15] : memref<512x1024xbf16, #tpu.memory_space<vmem>>, vector<512x1024xbf16>
    %cst_16 = arith.constant dense<0.000000e+00> : vector<16x1024xf32>
    %25 = tpu.matmul %23, %24, %cst_16 {dimension_numbers = #tpu.dot_dimension_numbers<[1], [0], [0], [1], [0, 0, 1, 1], [], []>} : vector<16x512xbf16>, vector<512x1024xbf16>, vector<16x1024xf32> -> vector<16x1024xf32>
    %c0_17 = arith.constant 0 : index
    %c0_18 = arith.constant 0 : index
    %26 = vector.load %arg7[%c0_17, %c0_18] : memref<1x1024xf32, #tpu.memory_space<vmem>>, vector<1x1024xf32>
    %27 = vector.broadcast %26 : vector<1x1024xf32> to vector<16x1024xf32>
    %28 = arith.addf %25, %27 : vector<16x1024xf32>
    %cst_19 = arith.constant 0.000000e+00 : f32
    %29 = vector.broadcast %cst_19 : f32 to vector<16x1024xf32>
    %30 = arith.cmpf ogt, %28, %29 : vector<16x1024xf32>
    %cst_20 = arith.constant 2.000000e-01 : f32
    %31 = vector.broadcast %cst_20 : f32 to vector<16x1024xf32>
    %32 = arith.mulf %31, %28 : vector<16x1024xf32>
    %33 = arith.select %30, %28, %32 : vector<16x1024xi1>, vector<16x1024xf32>
    %34 = arith.truncf %33 : vector<16x1024xf32> to vector<16x1024xbf16>
    %c0_21 = arith.constant 0 : index
    %c0_22 = arith.constant 0 : index
    %35 = vector.load %arg8[%c0_21, %c0_22] : memref<1024x784xbf16, #tpu.memory_space<vmem>>, vector<1024x784xbf16>
    %cst_23 = arith.constant dense<0.000000e+00> : vector<16x784xf32>
    %36 = tpu.matmul %34, %35, %cst_23 {dimension_numbers = #tpu.dot_dimension_numbers<[1], [0], [0], [1], [0, 0, 1, 1], [], []>} : vector<16x1024xbf16>, vector<1024x784xbf16>, vector<16x784xf32> -> vector<16x784xf32>
    %c0_24 = arith.constant 0 : index
    %c0_25 = arith.constant 0 : index
    %37 = vector.load %arg9[%c0_24, %c0_25] : memref<1x784xf32, #tpu.memory_space<vmem>>, vector<1x784xf32>
    %38 = vector.broadcast %37 : vector<1x784xf32> to vector<16x784xf32>
    %39 = arith.addf %36, %38 : vector<16x784xf32>
    %40 = math.tanh %39 : vector<16x784xf32>
    %c0_26 = arith.constant 0 : index
    %c0_27 = arith.constant 0 : index
    %41 = vector.load %arg10[%c0_26, %c0_27] : memref<16x784xf32, #tpu.memory_space<vmem>>, vector<16x784xf32>
    tpu.vector_store %arg10[%c0_26, %c0_27], %40 {strides = array<i32>} : memref<16x784xf32, #tpu.memory_space<vmem>>, vector<16x784xf32>,
    return
  }
  func.func @transform_0(%arg0: i32) -> (i32, i32) {
    %c0_i32 = arith.constant 0 : i32
    %c0_i32_0 = arith.constant 0 : i32
    return %arg0, %c0_i32 : i32, i32
  }
  func.func @transform_1(%arg0: i32) -> (i32, i32) {
    %c0_i32 = arith.constant 0 : i32
    %c0_i32_0 = arith.constant 0 : i32
    %c0_i32_1 = arith.constant 0 : i32
    return %c0_i32, %c0_i32_0 : i32, i32
  }
  func.func @transform_2(%arg0: i32) -> (i32, i32) {
    %c0_i32 = arith.constant 0 : i32
    %c0_i32_0 = arith.constant 0 : i32
    %c0_i32_1 = arith.constant 0 : i32
    return %c0_i32, %c0_i32_0 : i32, i32
  }
  func.func @transform_3(%arg0: i32) -> (i32, i32) {
    %c0_i32 = arith.constant 0 : i32
    %c0_i32_0 = arith.constant 0 : i32
    %c0_i32_1 = arith.constant 0 : i32
    return %c0_i32, %c0_i32_0 : i32, i32
  }
  func.func @transform_4(%arg0: i32) -> (i32, i32) {
    %c0_i32 = arith.constant 0 : i32
    %c0_i32_0 = arith.constant 0 : i32
    %c0_i32_1 = arith.constant 0 : i32
    return %c0_i32, %c0_i32_0 : i32, i32
  }
  func.func @transform_5(%arg0: i32) -> (i32, i32) {
    %c0_i32 = arith.constant 0 : i32
    %c0_i32_0 = arith.constant 0 : i32
    %c0_i32_1 = arith.constant 0 : i32
    return %c0_i32, %c0_i32_0 : i32, i32
  }
  func.func @transform_6(%arg0: i32) -> (i32, i32) {
    %c0_i32 = arith.constant 0 : i32
    %c0_i32_0 = arith.constant 0 : i32
    %c0_i32_1 = arith.constant 0 : i32
    return %c0_i32, %c0_i32_0 : i32, i32
  }
  func.func @transform_7(%arg0: i32) -> (i32, i32) {
    %c0_i32 = arith.constant 0 : i32
    %c0_i32_0 = arith.constant 0 : i32
    %c0_i32_1 = arith.constant 0 : i32
    return %c0_i32, %c0_i32_0 : i32, i32
  }
  func.func @transform_8(%arg0: i32) -> (i32, i32) {
    %c0_i32 = arith.constant 0 : i32
    %c0_i32_0 = arith.constant 0 : i32
    %c0_i32_1 = arith.constant 0 : i32
    return %c0_i32, %c0_i32_0 : i32, i32
  }
  func.func @transform_9(%arg0: i32) -> (i32, i32) {
    %c0_i32 = arith.constant 0 : i32
    %c0_i32_0 = arith.constant 0 : i32
    return %arg0, %c0_i32 : i32, i32
  }
}

</mosaic_0001>

<llo_original>
// kernel: generator_forward.1
$region0: #{generator_forward.1}
  #allocation0 [shape = 'u32[]', space=smem, size = 0x4, offset = 0x4, fixed_abs, tag = 'smem constant byte address 0x4 - core index']
  #allocation1 [shape = 'u32[72,128]{1,0:T(1,128)}', space=vmem, size = 0x9000, scoped, tag = 'internal scratch']
  %s0 = inlined_call_operand.vmem [shape: f32[16,64], index: 0, kind: input, shape index: {}]
  %s1 = inlined_call_operand.vmem [shape: bf16[64,256], index: 1, kind: input, shape index: {}]
  %s2 = inlined_call_operand.vmem [shape: f32[1,256], index: 2, kind: input, shape index: {}]
  %s3 = inlined_call_operand.vmem [shape: bf16[256,512], index: 3, kind: input, shape index: {}]
  %s4 = inlined_call_operand.vmem [shape: f32[1,512], index: 4, kind: input, shape index: {}]
  %s5 = inlined_call_operand.vmem [shape: bf16[512,1024], index: 5, kind: input, shape index: {}]
  %s6 = inlined_call_operand.vmem [shape: f32[1,1024], index: 6, kind: input, shape index: {}]
  %s7 = inlined_call_operand.vmem [shape: bf16[1024,784], index: 7, kind: input, shape index: {}]
  %s8 = inlined_call_operand.vmem [shape: f32[1,784], index: 8, kind: input, shape index: {}]
  %s9 = inlined_call_operand.vmem [shape: f32[16,784], index: 9, kind: output, shape index: {}]
  %s10 = sld [smem:[#allocation0]]
  $region46: #{generator_forward.1} parent=0
    _
  %s12 = ssub.s32 1, %s10
  %s13 = scalar_select 0, %s12, %s10
  // Predicated region
  $region2: #{generator_forward.1} parent=0 // pred_check
    _
  $region3: #{generator_forward.1} parent=0 // pred_check_branch
    %15 = sbr.rel (0) target = $region5
  $region4: #{generator_forward.1} parent=0 // pred_region
    _
  $region5: #{generator_forward.1} parent=0 // pred_fallthru
    _
  // Predicated region
  $region6: #{generator_forward.1} parent=0 // pred_check
    _
  $region7: #{generator_forward.1} parent=0 // pred_check_branch
    %17 = sbr.rel (0) target = $region9
  $region8: #{generator_forward.1} parent=0 // pred_region
    _
  $region9: #{generator_forward.1} parent=0 // pred_fallthru
    _
  // Predicated region
  $region10: #{generator_forward.1} parent=0 // pred_check
    _
  $region11: #{generator_forward.1} parent=0 // pred_check_branch
    %19 = sbr.rel (0) target = $region13
  $region12: #{generator_forward.1} parent=0 // pred_region
    _
  $region13: #{generator_forward.1} parent=0 // pred_fallthru
    _
  // Predicated region
  $region14: #{generator_forward.1} parent=0 // pred_check
    _
  $region15: #{generator_forward.1} parent=0 // pred_check_branch
    %21 = sbr.rel (0) target = $region17
  $region16: #{generator_forward.1} parent=0 // pred_region
    _
  $region17: #{generator_forward.1} parent=0 // pred_fallthru
    _
  // Predicated region
  $region18: #{generator_forward.1} parent=0 // pred_check
    _
  $region19: #{generator_forward.1} parent=0 // pred_check_branch
    %23 = sbr.rel (0) target = $region21
  $region20: #{generator_forward.1} parent=0 // pred_region
    _
  $region21: #{generator_forward.1} parent=0 // pred_fallthru
    _
  // Predicated region
  $region22: #{generator_forward.1} parent=0 // pred_check
    _
  $region23: #{generator_forward.1} parent=0 // pred_check_branch
    %25 = sbr.rel (0) target = $region25
  $region24: #{generator_forward.1} parent=0 // pred_region
    _
  $region25: #{generator_forward.1} parent=0 // pred_fallthru
    _
  // Predicated region
  $region26: #{generator_forward.1} parent=0 // pred_check
    _
  $region27: #{generator_forward.1} parent=0 // pred_check_branch
    %27 = sbr.rel (0) target = $region29
  $region28: #{generator_forward.1} parent=0 // pred_region
    _
  $region29: #{generator_forward.1} parent=0 // pred_fallthru
    _
  // Predicated region
  $region30: #{generator_forward.1} parent=0 // pred_check
    _
  $region31: #{generator_forward.1} parent=0 // pred_check_branch
    %29 = sbr.rel (0) target = $region33
  $region32: #{generator_forward.1} parent=0 // pred_region
    _
  $region33: #{generator_forward.1} parent=0 // pred_fallthru
    _
  // Predicated region
  $region34: #{generator_forward.1} parent=0 // pred_check
    _
  $region35: #{generator_forward.1} parent=0 // pred_check_branch
    %31 = sbr.rel (0) target = $region37
  $region36: #{generator_forward.1} parent=0 // pred_region
    _
  $region37: #{generator_forward.1} parent=0 // pred_fallthru
    _
  %v33 = vld [vmem:[%s0] sm:$0xff]
  %v34 = vld [vmem:[%s0 + $0x8] sm:$0xff]
  %v35 = vpack.c.bf16 %v34, %v33
  %v36 = vld [vmem:[%s1] sm:$0xff]
  %v37 = vld [vmem:[%s1 + $0x8] sm:$0xff]
  %v38 = vld [vmem:[%s1 + $0x10] sm:$0xff]
  %v39 = vld [vmem:[%s1 + $0x18] sm:$0xff]
  %v40 = vld [vmem:[%s1 + $0x20] sm:$0xff]
  %v41 = vld [vmem:[%s1 + $0x28] sm:$0xff]
  %v42 = vld [vmem:[%s1 + $0x30] sm:$0xff]
  %v43 = vld [vmem:[%s1 + $0x38] sm:$0xff]
  %v44 = vld [vmem:[%s2] sm:$0x3]
  %v46 = vperm.slane %v44, 0
  %v47 = vperm.slane %v44, 1
  %v58 = vunpack.c.l.b16 %v36
  %v59 = vunpack.c.h.b16 %v36
  %v60 = vunpack.c.l.b16 %v37
  %v61 = vunpack.c.h.b16 %v37
  %v62 = vunpack.c.l.b16 %v38
  %v63 = vunpack.c.h.b16 %v38
  %v64 = vunpack.c.l.b16 %v39
  %v65 = vunpack.c.h.b16 %v39
  %v66 = vunpack.c.l.b16 %v40
  %v67 = vunpack.c.h.b16 %v40
  %v68 = vunpack.c.l.b16 %v41
  %v69 = vunpack.c.h.b16 %v41
  %v70 = vunpack.c.l.b16 %v42
  %v71 = vunpack.c.h.b16 %v42
  %v72 = vunpack.c.l.b16 %v43
  %v73 = vunpack.c.h.b16 %v43
  %v74 = vpack.c.b16 %v60, %v58
  %v75 = vpack.c.b16 %v61, %v59
  %v76 = vpack.c.b16 %v64, %v62
  %v77 = vpack.c.b16 %v65, %v63
  %v78 = vpack.c.b16 %v68, %v66
  %v79 = vpack.c.b16 %v69, %v67
  %v80 = vpack.c.b16 %v72, %v70
  %v81 = vpack.c.b16 %v73, %v71
  %vm90 = vcmask 523264
  %v92 = vsel %vm90, %v35, 0
  %94 = vmatpush.bf16.msra.mxu0 0
  %95 = vmatpush.bf16.msra.mxu0 0
  %96 = vmatpush.bf16.msra.mxu0 0
  %97 = vmatpush.bf16.msra.mxu0 0
  %98 = vmatpush.bf16.msra.mxu0 %v80
  %99 = vmatpush.bf16.msra.mxu0 %v78
  %100 = vmatpush.bf16.msra.mxu0 %v76
  %101 = vmatpush.bf16.msra.mxu0 %v74
  %102 = vmatmul.bf16.gmra.mxu0 %v92
  %v103 = vpop.f32.mrf.mxu0
  %v104 = vadd.f32 %v46, %v103
  %v105 = vpop.f32.mrf.mxu0
  %v106 = vadd.f32 %v46, %v105
  %107 = vdwg.mxu0
  %108 = vmatpush.bf16.msra.mxu0 0
  %109 = vmatpush.bf16.msra.mxu0 0
  %110 = vmatpush.bf16.msra.mxu0 0
  %111 = vmatpush.bf16.msra.mxu0 0
  %112 = vmatpush.bf16.msra.mxu0 %v81
  %113 = vmatpush.bf16.msra.mxu0 %v79
  %114 = vmatpush.bf16.msra.mxu0 %v77
  %115 = vmatpush.bf16.msra.mxu0 %v75
  %116 = vmatmul.bf16.gmra.mxu0 %v92
  %v117 = vpop.f32.mrf.mxu0
  %v118 = vadd.f32 %v47, %v117
  %v119 = vpop.f32.mrf.mxu0
  %v120 = vadd.f32 %v47, %v119
  %121 = vdwg.mxu0
  %vm122 = vcmp.gt.f32.partialorder %v104, 0.0
  %vm123 = vcmp.gt.f32.partialorder %v118, 0.0
  %vm124 = vcmp.gt.f32.partialorder %v106, 0.0
  %vm125 = vcmp.gt.f32.partialorder %v120, 0.0
  %v126 = vmul.f32 %v104, 0.2
  %v127 = vmul.f32 %v118, 0.2
  %v128 = vmul.f32 %v106, 0.2
  %v129 = vmul.f32 %v120, 0.2
  %v130 = vsel %vm122, %v104, %v126
  %v131 = vsel %vm123, %v118, %v127
  %v132 = vsel %vm124, %v106, %v128
  %v133 = vsel %vm125, %v120, %v129
  %v134 = vpack.c.bf16 %v132, %v130
  %v135 = vpack.c.bf16 %v133, %v131
  %v136 = vld [vmem:[%s3] sm:$0xff]
  %v137 = vld [vmem:[%s3 + $0x8] sm:$0xff]
  %v138 = vld [vmem:[%s3 + $0x10] sm:$0xff]
  %v139 = vld [vmem:[%s3 + $0x18] sm:$0xff]
  %v140 = vld [vmem:[%s3 + $0x20] sm:$0xff]
  %v141 = vld [vmem:[%s3 + $0x28] sm:$0xff]
  %v142 = vld [vmem:[%s3 + $0x30] sm:$0xff]
  %v143 = vld [vmem:[%s3 + $0x38] sm:$0xff]
  %v144 = vld [vmem:[%s3 + $0x40] sm:$0xff]
  %v145 = vld [vmem:[%s3 + $0x48] sm:$0xff]
  %v146 = vld [vmem:[%s3 + $0x50] sm:$0xff]
  %v147 = vld [vmem:[%s3 + $0x58] sm:$0xff]
  %v148 = vld [vmem:[%s3 + $0x60] sm:$0xff]
  %v149 = vld [vmem:[%s3 + $0x68] sm:$0xff]
  %v150 = vld [vmem:[%s3 + $0x70] sm:$0xff]
  %v151 = vld [vmem:[%s3 + $0x78] sm:$0xff]
  %v152 = vld [vmem:[%s3 + $0x80] sm:$0xff]
  %v153 = vld [vmem:[%s3 + $0x88] sm:$0xff]
  %v154 = vld [vmem:[%s3 + $0x90] sm:$0xff]
  %v155 = vld [vmem:[%s3 + $0x98] sm:$0xff]
  %v156 = vld [vmem:[%s3 + $0xa0] sm:$0xff]
  %v157 = vld [vmem:[%s3 + $0xa8] sm:$0xff]
  %v158 = vld [vmem:[%s3 + $0xb0] sm:$0xff]
  %v159 = vld [vmem:[%s3 + $0xb8] sm:$0xff]
  %v160 = vld [vmem:[%s3 + $0xc0] sm:$0xff]
  %v161 = vld [vmem:[%s3 + $0xc8] sm:$0xff]
  %v162 = vld [vmem:[%s3 + $0xd0] sm:$0xff]
  %v163 = vld [vmem:[%s3 + $0xd8] sm:$0xff]
  %v164 = vld [vmem:[%s3 + $0xe0] sm:$0xff]
  %v165 = vld [vmem:[%s3 + $0xe8] sm:$0xff]
  %v166 = vld [vmem:[%s3 + $0xf0] sm:$0xff]
  %v167 = vld [vmem:[%s3 + $0xf8] sm:$0xff]
  %v168 = vld [vmem:[%s3 + $0x100] sm:$0xff]
  %v169 = vld [vmem:[%s3 + $0x108] sm:$0xff]
  %v170 = vld [vmem:[%s3 + $0x110] sm:$0xff]
  %v171 = vld [vmem:[%s3 + $0x118] sm:$0xff]
  %v172 = vld [vmem:[%s3 + $0x120] sm:$0xff]
  %v173 = vld [vmem:[%s3 + $0x128] sm:$0xff]
  %v174 = vld [vmem:[%s3 + $0x130] sm:$0xff]
  %v175 = vld [vmem:[%s3 + $0x138] sm:$0xff]
  %v176 = vld [vmem:[%s3 + $0x140] sm:$0xff]
  %v177 = vld [vmem:[%s3 + $0x148] sm:$0xff]
  %v178 = vld [vmem:[%s3 + $0x150] sm:$0xff]
  %v179 = vld [vmem:[%s3 + $0x158] sm:$0xff]
  %v180 = vld [vmem:[%s3 + $0x160] sm:$0xff]
  %v181 = vld [vmem:[%s3 + $0x168] sm:$0xff]
  %v182 = vld [vmem:[%s3 + $0x170] sm:$0xff]
  %v183 = vld [vmem:[%s3 + $0x178] sm:$0xff]
  %v184 = vld [vmem:[%s3 + $0x180] sm:$0xff]
  %v185 = vld [vmem:[%s3 + $0x188] sm:$0xff]
  %v186 = vld [vmem:[%s3 + $0x190] sm:$0xff]
  %v187 = vld [vmem:[%s3 + $0x198] sm:$0xff]
  %v188 = vld [vmem:[%s3 + $0x1a0] sm:$0xff]
  %v189 = vld [vmem:[%s3 + $0x1a8] sm:$0xff]
  %v190 = vld [vmem:[%s3 + $0x1b0] sm:$0xff]
  %v191 = vld [vmem:[%s3 + $0x1b8] sm:$0xff]
  %v192 = vld [vmem:[%s3 + $0x1c0] sm:$0xff]
  %v193 = vld [vmem:[%s3 + $0x1c8] sm:$0xff]
  %v194 = vld [vmem:[%s3 + $0x1d0] sm:$0xff]
  %v195 = vld [vmem:[%s3 + $0x1d8] sm:$0xff]
  %v196 = vld [vmem:[%s3 + $0x1e0] sm:$0xff]
  %v197 = vld [vmem:[%s3 + $0x1e8] sm:$0xff]
  %v198 = vld [vmem:[%s3 + $0x1f0] sm:$0xff]
  %v199 = vld [vmem:[%s3 + $0x1f8] sm:$0xff]
  %v200 = vld [vmem:[%s4] sm:$0xf]
  %v202 = vperm.slane %v200, 0
  %v203 = vperm.slane %v200, 1
  %v204 = vperm.slane %v200, 2
  %v205 = vperm.slane %v200, 3
  %v274 = vunpack.c.l.b16 %v136
  %v275 = vunpack.c.h.b16 %v136
  %v276 = vunpack.c.l.b16 %v137
  %v277 = vunpack.c.h.b16 %v137
  %v278 = vunpack.c.l.b16 %v138
  %v279 = vunpack.c.h.b16 %v138
  %v280 = vunpack.c.l.b16 %v139
  %v281 = vunpack.c.h.b16 %v139
  %v282 = vunpack.c.l.b16 %v140
  %v283 = vunpack.c.h.b16 %v140
  %v284 = vunpack.c.l.b16 %v141
  %v285 = vunpack.c.h.b16 %v141
  %v286 = vunpack.c.l.b16 %v142
  %v287 = vunpack.c.h.b16 %v142
  %v288 = vunpack.c.l.b16 %v143
  %v289 = vunpack.c.h.b16 %v143
  %v290 = vunpack.c.l.b16 %v144
  %v291 = vunpack.c.h.b16 %v144
  %v292 = vunpack.c.l.b16 %v145
  %v293 = vunpack.c.h.b16 %v145
  %v294 = vunpack.c.l.b16 %v146
  %v295 = vunpack.c.h.b16 %v146
  %v296 = vunpack.c.l.b16 %v147
  %v297 = vunpack.c.h.b16 %v147
  %v298 = vunpack.c.l.b16 %v148
  %v299 = vunpack.c.h.b16 %v148
  %v300 = vunpack.c.l.b16 %v149
  %v301 = vunpack.c.h.b16 %v149
  %v302 = vunpack.c.l.b16 %v150
  %v303 = vunpack.c.h.b16 %v150
  %v304 = vunpack.c.l.b16 %v151
  %v305 = vunpack.c.h.b16 %v151
  %v306 = vunpack.c.l.b16 %v152
  %v307 = vunpack.c.h.b16 %v152
  %v308 = vunpack.c.l.b16 %v153
  %v309 = vunpack.c.h.b16 %v153
  %v310 = vunpack.c.l.b16 %v154
  %v311 = vunpack.c.h.b16 %v154
  %v312 = vunpack.c.l.b16 %v155
  %v313 = vunpack.c.h.b16 %v155
  %v314 = vunpack.c.l.b16 %v156
  %v315 = vunpack.c.h.b16 %v156
  %v316 = vunpack.c.l.b16 %v157
  %v317 = vunpack.c.h.b16 %v157
  %v318 = vunpack.c.l.b16 %v158
  %v319 = vunpack.c.h.b16 %v158
  %v320 = vunpack.c.l.b16 %v159
  %v321 = vunpack.c.h.b16 %v159
  %v322 = vunpack.c.l.b16 %v160
  %v323 = vunpack.c.h.b16 %v160
  %v324 = vunpack.c.l.b16 %v161
  %v325 = vunpack.c.h.b16 %v161
  %v326 = vunpack.c.l.b16 %v162
  %v327 = vunpack.c.h.b16 %v162
  %v328 = vunpack.c.l.b16 %v163
  %v329 = vunpack.c.h.b16 %v163
  %v330 = vunpack.c.l.b16 %v164
  %v331 = vunpack.c.h.b16 %v164
  %v332 = vunpack.c.l.b16 %v165
  %v333 = vunpack.c.h.b16 %v165
  %v334 = vunpack.c.l.b16 %v166
  %v335 = vunpack.c.h.b16 %v166
  %v336 = vunpack.c.l.b16 %v167
  %v337 = vunpack.c.h.b16 %v167
  %v338 = vunpack.c.l.b16 %v168
  %v339 = vunpack.c.h.b16 %v168
  %v340 = vunpack.c.l.b16 %v169
  %v341 = vunpack.c.h.b16 %v169
  %v342 = vunpack.c.l.b16 %v170
  %v343 = vunpack.c.h.b16 %v170
  %v344 = vunpack.c.l.b16 %v171
  %v345 = vunpack.c.h.b16 %v171
  %v346 = vunpack.c.l.b16 %v172
  %v347 = vunpack.c.h.b16 %v172
  %v348 = vunpack.c.l.b16 %v173
  %v349 = vunpack.c.h.b16 %v173
  %v350 = vunpack.c.l.b16 %v174
  %v351 = vunpack.c.h.b16 %v174
  %v352 = vunpack.c.l.b16 %v175
  %v353 = vunpack.c.h.b16 %v175
  %v354 = vunpack.c.l.b16 %v176
  %v355 = vunpack.c.h.b16 %v176
  %v356 = vunpack.c.l.b16 %v177
  %v357 = vunpack.c.h.b16 %v177
  %v358 = vunpack.c.l.b16 %v178
  %v359 = vunpack.c.h.b16 %v178
  %v360 = vunpack.c.l.b16 %v179
  %v361 = vunpack.c.h.b16 %v179
  %v362 = vunpack.c.l.b16 %v180
  %v363 = vunpack.c.h.b16 %v180
  %v364 = vunpack.c.l.b16 %v181
  %v365 = vunpack.c.h.b16 %v181
  %v366 = vunpack.c.l.b16 %v182
  %v367 = vunpack.c.h.b16 %v182
  %v368 = vunpack.c.l.b16 %v183
  %v369 = vunpack.c.h.b16 %v183
  %v370 = vunpack.c.l.b16 %v184
  %v371 = vunpack.c.h.b16 %v184
  %v372 = vunpack.c.l.b16 %v185
  %v373 = vunpack.c.h.b16 %v185
  %v374 = vunpack.c.l.b16 %v186
  %v375 = vunpack.c.h.b16 %v186
  %v376 = vunpack.c.l.b16 %v187
  %v377 = vunpack.c.h.b16 %v187
  %v378 = vunpack.c.l.b16 %v188
  %v379 = vunpack.c.h.b16 %v188
  %v380 = vunpack.c.l.b16 %v189
  %v381 = vunpack.c.h.b16 %v189
  %v382 = vunpack.c.l.b16 %v190
  %v383 = vunpack.c.h.b16 %v190
  %v384 = vunpack.c.l.b16 %v191
  %v385 = vunpack.c.h.b16 %v191
  %v386 = vunpack.c.l.b16 %v192
  %v387 = vunpack.c.h.b16 %v192
  %v388 = vunpack.c.l.b16 %v193
  %v389 = vunpack.c.h.b16 %v193
  %v390 = vunpack.c.l.b16 %v194
  %v391 = vunpack.c.h.b16 %v194
  %v392 = vunpack.c.l.b16 %v195
  %v393 = vunpack.c.h.b16 %v195
  %v394 = vunpack.c.l.b16 %v196
  %v395 = vunpack.c.h.b16 %v196
  %v396 = vunpack.c.l.b16 %v197
  %v397 = vunpack.c.h.b16 %v197
  %v398 = vunpack.c.l.b16 %v198
  %v399 = vunpack.c.h.b16 %v198
  %v400 = vunpack.c.l.b16 %v199
  %v401 = vunpack.c.h.b16 %v199
  %v402 = vpack.c.b16 %v278, %v274
  %v403 = vpack.c.b16 %v279, %v275
  %v404 = vpack.c.b16 %v280, %v276
  %v405 = vpack.c.b16 %v281, %v277
  %v406 = vpack.c.b16 %v286, %v282
  %v407 = vpack.c.b16 %v287, %v283
  %v408 = vpack.c.b16 %v288, %v284
  %v409 = vpack.c.b16 %v289, %v285
  %v410 = vpack.c.b16 %v294, %v290
  %v411 = vpack.c.b16 %v295, %v291
  %v412 = vpack.c.b16 %v296, %v292
  %v413 = vpack.c.b16 %v297, %v293
  %v414 = vpack.c.b16 %v302, %v298
  %v415 = vpack.c.b16 %v303, %v299
  %v416 = vpack.c.b16 %v304, %v300
  %v417 = vpack.c.b16 %v305, %v301
  %v418 = vpack.c.b16 %v310, %v306
  %v419 = vpack.c.b16 %v311, %v307
  %v420 = vpack.c.b16 %v312, %v308
  %v421 = vpack.c.b16 %v313, %v309
  %v422 = vpack.c.b16 %v318, %v314
  %v423 = vpack.c.b16 %v319, %v315
  %v424 = vpack.c.b16 %v320, %v316
  %v425 = vpack.c.b16 %v321, %v317
  %v426 = vpack.c.b16 %v326, %v322
  %v427 = vpack.c.b16 %v327, %v323
  %v428 = vpack.c.b16 %v328, %v324
  %v429 = vpack.c.b16 %v329, %v325
  %v430 = vpack.c.b16 %v334, %v330
  %v431 = vpack.c.b16 %v335, %v331
  %v432 = vpack.c.b16 %v336, %v332
  %v433 = vpack.c.b16 %v337, %v333
  %v434 = vpack.c.b16 %v342, %v338
  %v435 = vpack.c.b16 %v343, %v339
  %v436 = vpack.c.b16 %v344, %v340
  %v437 = vpack.c.b16 %v345, %v341
  %v438 = vpack.c.b16 %v350, %v346
  %v439 = vpack.c.b16 %v351, %v347
  %v440 = vpack.c.b16 %v352, %v348
  %v441 = vpack.c.b16 %v353, %v349
  %v442 = vpack.c.b16 %v358, %v354
  %v443 = vpack.c.b16 %v359, %v355
  %v444 = vpack.c.b16 %v360, %v356
  %v445 = vpack.c.b16 %v361, %v357
  %v446 = vpack.c.b16 %v366, %v362
  %v447 = vpack.c.b16 %v367, %v363
  %v448 = vpack.c.b16 %v368, %v364
  %v449 = vpack.c.b16 %v369, %v365
  %v450 = vpack.c.b16 %v374, %v370
  %v451 = vpack.c.b16 %v375, %v371
  %v452 = vpack.c.b16 %v376, %v372
  %v453 = vpack.c.b16 %v377, %v373
  %v454 = vpack.c.b16 %v382, %v378
  %v455 = vpack.c.b16 %v383, %v379
  %v456 = vpack.c.b16 %v384, %v380
  %v457 = vpack.c.b16 %v385, %v381
  %v458 = vpack.c.b16 %v390, %v386
  %v459 = vpack.c.b16 %v391, %v387
  %v460 = vpack.c.b16 %v392, %v388
  %v461 = vpack.c.b16 %v393, %v389
  %v462 = vpack.c.b16 %v398, %v394
  %v463 = vpack.c.b16 %v399, %v395
  %v464 = vpack.c.b16 %v400, %v396
  %v465 = vpack.c.b16 %v401, %v397
  %530 = vmatpush.bf16.msra.mxu0 %v430
  %531 = vmatpush.bf16.msra.mxu0 %v426
  %532 = vmatpush.bf16.msra.mxu0 %v422
  %533 = vmatpush.bf16.msra.mxu0 %v418
  %534 = vmatpush.bf16.msra.mxu0 %v414
  %535 = vmatpush.bf16.msra.mxu0 %v410
  %536 = vmatpush.bf16.msra.mxu0 %v406
  %537 = vmatpush.bf16.msra.mxu0 %v402
  %538 = vmatmul.bf16.gmra.mxu0 %v134
  %v539 = vpop.f32.mrf.mxu0
  %v540 = vadd.f32 %v202, %v539
  %v541 = vpop.f32.mrf.mxu0
  %v542 = vadd.f32 %v202, %v541
  %543 = vdwg.mxu0
  %544 = vmatpush.bf16.msra.mxu0 %v462
  %545 = vmatpush.bf16.msra.mxu0 %v458
  %546 = vmatpush.bf16.msra.mxu0 %v454
  %547 = vmatpush.bf16.msra.mxu0 %v450
  %548 = vmatpush.bf16.msra.mxu0 %v446
  %549 = vmatpush.bf16.msra.mxu0 %v442
  %550 = vmatpush.bf16.msra.mxu0 %v438
  %551 = vmatpush.bf16.msra.mxu0 %v434
  %552 = vmatmul.bf16.gmra.mxu0 %v135
  %v553 = vpop.f32.mrf.mxu0
  %v554 = vadd.f32 %v540, %v553
  %v555 = vpop.f32.mrf.mxu0
  %v556 = vadd.f32 %v542, %v555
  %557 = vdwg.mxu0
  %558 = vmatpush.bf16.msra.mxu0 %v431
  %559 = vmatpush.bf16.msra.mxu0 %v427
  %560 = vmatpush.bf16.msra.mxu0 %v423
  %561 = vmatpush.bf16.msra.mxu0 %v419
  %562 = vmatpush.bf16.msra.mxu0 %v415
  %563 = vmatpush.bf16.msra.mxu0 %v411
  %564 = vmatpush.bf16.msra.mxu0 %v407
  %565 = vmatpush.bf16.msra.mxu0 %v403
  %566 = vmatmul.bf16.gmra.mxu0 %v134
  %v567 = vpop.f32.mrf.mxu0
  %v568 = vadd.f32 %v203, %v567
  %v569 = vpop.f32.mrf.mxu0
  %v570 = vadd.f32 %v203, %v569
  %571 = vdwg.mxu0
  %572 = vmatpush.bf16.msra.mxu0 %v463
  %573 = vmatpush.bf16.msra.mxu0 %v459
  %574 = vmatpush.bf16.msra.mxu0 %v455
  %575 = vmatpush.bf16.msra.mxu0 %v451
  %576 = vmatpush.bf16.msra.mxu0 %v447
  %577 = vmatpush.bf16.msra.mxu0 %v443
  %578 = vmatpush.bf16.msra.mxu0 %v439
  %579 = vmatpush.bf16.msra.mxu0 %v435
  %580 = vmatmul.bf16.gmra.mxu0 %v135
  %v581 = vpop.f32.mrf.mxu0
  %v582 = vadd.f32 %v568, %v581
  %v583 = vpop.f32.mrf.mxu0
  %v584 = vadd.f32 %v570, %v583
  %585 = vdwg.mxu0
  %586 = vmatpush.bf16.msra.mxu0 %v432
  %587 = vmatpush.bf16.msra.mxu0 %v428
  %588 = vmatpush.bf16.msra.mxu0 %v424
  %589 = vmatpush.bf16.msra.mxu0 %v420
  %590 = vmatpush.bf16.msra.mxu0 %v416
  %591 = vmatpush.bf16.msra.mxu0 %v412
  %592 = vmatpush.bf16.msra.mxu0 %v408
  %593 = vmatpush.bf16.msra.mxu0 %v404
  %594 = vmatmul.bf16.gmra.mxu0 %v134
  %v595 = vpop.f32.mrf.mxu0
  %v596 = vadd.f32 %v204, %v595
  %v597 = vpop.f32.mrf.mxu0
  %v598 = vadd.f32 %v204, %v597
  %599 = vdwg.mxu0
  %600 = vmatpush.bf16.msra.mxu0 %v464
  %601 = vmatpush.bf16.msra.mxu0 %v460
  %602 = vmatpush.bf16.msra.mxu0 %v456
  %603 = vmatpush.bf16.msra.mxu0 %v452
  %604 = vmatpush.bf16.msra.mxu0 %v448
  %605 = vmatpush.bf16.msra.mxu0 %v444
  %606 = vmatpush.bf16.msra.mxu0 %v440
  %607 = vmatpush.bf16.msra.mxu0 %v436
  %608 = vmatmul.bf16.gmra.mxu0 %v135
  %v609 = vpop.f32.mrf.mxu0
  %v610 = vadd.f32 %v596, %v609
  %v611 = vpop.f32.mrf.mxu0
  %v612 = vadd.f32 %v598, %v611
  %613 = vdwg.mxu0
  %614 = vmatpush.bf16.msra.mxu0 %v433
  %615 = vmatpush.bf16.msra.mxu0 %v429
  %616 = vmatpush.bf16.msra.mxu0 %v425
  %617 = vmatpush.bf16.msra.mxu0 %v421
  %618 = vmatpush.bf16.msra.mxu0 %v417
  %619 = vmatpush.bf16.msra.mxu0 %v413
  %620 = vmatpush.bf16.msra.mxu0 %v409
  %621 = vmatpush.bf16.msra.mxu0 %v405
  %622 = vmatmul.bf16.gmra.mxu0 %v134
  %v623 = vpop.f32.mrf.mxu0
  %v624 = vadd.f32 %v205, %v623
  %v625 = vpop.f32.mrf.mxu0
  %v626 = vadd.f32 %v205, %v625
  %627 = vdwg.mxu0
  %628 = vmatpush.bf16.msra.mxu0 %v465
  %629 = vmatpush.bf16.msra.mxu0 %v461
  %630 = vmatpush.bf16.msra.mxu0 %v457
  %631 = vmatpush.bf16.msra.mxu0 %v453
  %632 = vmatpush.bf16.msra.mxu0 %v449
  %633 = vmatpush.bf16.msra.mxu0 %v445
  %634 = vmatpush.bf16.msra.mxu0 %v441
  %635 = vmatpush.bf16.msra.mxu0 %v437
  %636 = vmatmul.bf16.gmra.mxu0 %v135
  %v637 = vpop.f32.mrf.mxu0
  %v638 = vadd.f32 %v624, %v637
  %v639 = vpop.f32.mrf.mxu0
  %v640 = vadd.f32 %v626, %v639
  %641 = vdwg.mxu0
  %vm642 = vcmp.gt.f32.partialorder %v554, 0.0
  %vm643 = vcmp.gt.f32.partialorder %v582, 0.0
  %vm644 = vcmp.gt.f32.partialorder %v610, 0.0
  %vm645 = vcmp.gt.f32.partialorder %v638, 0.0
  %vm646 = vcmp.gt.f32.partialorder %v556, 0.0
  %vm647 = vcmp.gt.f32.partialorder %v584, 0.0
  %vm648 = vcmp.gt.f32.partialorder %v612, 0.0
  %vm649 = vcmp.gt.f32.partialorder %v640, 0.0
  %v650 = vmul.f32 %v554, 0.2
  %v651 = vmul.f32 %v582, 0.2
  %v652 = vmul.f32 %v610, 0.2
  %v653 = vmul.f32 %v638, 0.2
  %v654 = vmul.f32 %v556, 0.2
  %v655 = vmul.f32 %v584, 0.2
  %v656 = vmul.f32 %v612, 0.2
  %v657 = vmul.f32 %v640, 0.2
  %v658 = vsel %vm642, %v554, %v650
  %v659 = vsel %vm643, %v582, %v651
  %v660 = vsel %vm644, %v610, %v652
  %v661 = vsel %vm645, %v638, %v653
  %v662 = vsel %vm646, %v556, %v654
  %v663 = vsel %vm647, %v584, %v655
  %v664 = vsel %vm648, %v612, %v656
  %v665 = vsel %vm649, %v640, %v657
  %v666 = vpack.c.bf16 %v662, %v658
  %v667 = vpack.c.bf16 %v663, %v659
  %v668 = vpack.c.bf16 %v664, %v660
  %v669 = vpack.c.bf16 %v665, %v661
  %v670 = vld [vmem:[%s5] sm:$0xff]
  %v671 = vld [vmem:[%s5 + $0x8] sm:$0xff]
  %v672 = vld [vmem:[%s5 + $0x10] sm:$0xff]
  %v673 = vld [vmem:[%s5 + $0x18] sm:$0xff]
  %v674 = vld [vmem:[%s5 + $0x20] sm:$0xff]
  %v675 = vld [vmem:[%s5 + $0x28] sm:$0xff]
  %v676 = vld [vmem:[%s5 + $0x30] sm:$0xff]
  %v677 = vld [vmem:[%s5 + $0x38] sm:$0xff]
  %v678 = vld [vmem:[%s5 + $0x40] sm:$0xff]
  %v679 = vld [vmem:[%s5 + $0x48] sm:$0xff]
  %v680 = vld [vmem:[%s5 + $0x50] sm:$0xff]
  %v681 = vld [vmem:[%s5 + $0x58] sm:$0xff]
  %v682 = vld [vmem:[%s5 + $0x60] sm:$0xff]
  %v683 = vld [vmem:[%s5 + $0x68] sm:$0xff]
  %v684 = vld [vmem:[%s5 + $0x70] sm:$0xff]
  %v685 = vld [vmem:[%s5 + $0x78] sm:$0xff]
  %v686 = vld [vmem:[%s5 + $0x80] sm:$0xff]
  %v687 = vld [vmem:[%s5 + $0x88] sm:$0xff]
  %v688 = vld [vmem:[%s5 + $0x90] sm:$0xff]
  %v689 = vld [vmem:[%s5 + $0x98] sm:$0xff]
  %v690 = vld [vmem:[%s5 + $0xa0] sm:$0xff]
  %v691 = vld [vmem:[%s5 + $0xa8] sm:$0xff]
  %v692 = vld [vmem:[%s5 + $0xb0] sm:$0xff]
  %v693 = vld [vmem:[%s5 + $0xb8] sm:$0xff]
  %v694 = vld [vmem:[%s5 + $0xc0] sm:$0xff]
  %v695 = vld [vmem:[%s5 + $0xc8] sm:$0xff]
  %v696 = vld [vmem:[%s5 + $0xd0] sm:$0xff]
  %v697 = vld [vmem:[%s5 + $0xd8] sm:$0xff]
  %v698 = vld [vmem:[%s5 + $0xe0] sm:$0xff]
  %v699 = vld [vmem:[%s5 + $0xe8] sm:$0xff]
  %v700 = vld [vmem:[%s5 + $0xf0] sm:$0xff]
  %v701 = vld [vmem:[%s5 + $0xf8] sm:$0xff]
  %v702 = vld [vmem:[%s5 + $0x100] sm:$0xff]
  %v703 = vld [vmem:[%s5 + $0x108] sm:$0xff]
  %v704 = vld [vmem:[%s5 + $0x110] sm:$0xff]
  %v705 = vld [vmem:[%s5 + $0x118] sm:$0xff]
  %v706 = vld [vmem:[%s5 + $0x120] sm:$0xff]
  %v707 = vld [vmem:[%s5 + $0x128] sm:$0xff]
  %v708 = vld [vmem:[%s5 + $0x130] sm:$0xff]
  %v709 = vld [vmem:[%s5 + $0x138] sm:$0xff]
  %v710 = vld [vmem:[%s5 + $0x140] sm:$0xff]
  %v711 = vld [vmem:[%s5 + $0x148] sm:$0xff]
  %v712 = vld [vmem:[%s5 + $0x150] sm:$0xff]
  %v713 = vld [vmem:[%s5 + $0x158] sm:$0xff]
  %v714 = vld [vmem:[%s5 + $0x160] sm:$0xff]
  %v715 = vld [vmem:[%s5 + $0x168] sm:$0xff]
  %v716 = vld [vmem:[%s5 + $0x170] sm:$0xff]
  %v717 = vld [vmem:[%s5 + $0x178] sm:$0xff]
  %v718 = vld [vmem:[%s5 + $0x180] sm:$0xff]
  %v719 = vld [vmem:[%s5 + $0x188] sm:$0xff]
  %v720 = vld [vmem:[%s5 + $0x190] sm:$0xff]
  %v721 = vld [vmem:[%s5 + $0x198] sm:$0xff]
  %v722 = vld [vmem:[%s5 + $0x1a0] sm:$0xff]
  %v723 = vld [vmem:[%s5 + $0x1a8] sm:$0xff]
  %v724 = vld [vmem:[%s5 + $0x1b0] sm:$0xff]
  %v725 = vld [vmem:[%s5 + $0x1b8] sm:$0xff]
  %v726 = vld [vmem:[%s5 + $0x1c0] sm:$0xff]
  %v727 = vld [vmem:[%s5 + $0x1c8] sm:$0xff]
  %v728 = vld [vmem:[%s5 + $0x1d0] sm:$0xff]
  %v729 = vld [vmem:[%s5 + $0x1d8] sm:$0xff]
  %v730 = vld [vmem:[%s5 + $0x1e0] sm:$0xff]
  %v731 = vld [vmem:[%s5 + $0x1e8] sm:$0xff]
  %v732 = vld [vmem:[%s5 + $0x1f0] sm:$0xff]
  %v733 = vld [vmem:[%s5 + $0x1f8] sm:$0xff]
  %v734 = vld [vmem:[%s5 + $0x200] sm:$0xff]
  %v735 = vld [vmem:[%s5 + $0x208] sm:$0xff]
  %v736 = vld [vmem:[%s5 + $0x210] sm:$0xff]
  %v737 = vld [vmem:[%s5 + $0x218] sm:$0xff]
  %v738 = vld [vmem:[%s5 + $0x220] sm:$0xff]
  %v739 = vld [vmem:[%s5 + $0x228] sm:$0xff]
  %v740 = vld [vmem:[%s5 + $0x230] sm:$0xff]
  %v741 = vld [vmem:[%s5 + $0x238] sm:$0xff]
  %v742 = vld [vmem:[%s5 + $0x240] sm:$0xff]
  %v743 = vld [vmem:[%s5 + $0x248] sm:$0xff]
  %v744 = vld [vmem:[%s5 + $0x250] sm:$0xff]
  %v745 = vld [vmem:[%s5 + $0x258] sm:$0xff]
  %v746 = vld [vmem:[%s5 + $0x260] sm:$0xff]
  %v747 = vld [vmem:[%s5 + $0x268] sm:$0xff]
  %v748 = vld [vmem:[%s5 + $0x270] sm:$0xff]
  %v749 = vld [vmem:[%s5 + $0x278] sm:$0xff]
  %v750 = vld [vmem:[%s5 + $0x280] sm:$0xff]
  %v751 = vld [vmem:[%s5 + $0x288] sm:$0xff]
  %v752 = vld [vmem:[%s5 + $0x290] sm:$0xff]
  %v753 = vld [vmem:[%s5 + $0x298] sm:$0xff]
  %v754 = vld [vmem:[%s5 + $0x2a0] sm:$0xff]
  %v755 = vld [vmem:[%s5 + $0x2a8] sm:$0xff]
  %v756 = vld [vmem:[%s5 + $0x2b0] sm:$0xff]
  %v757 = vld [vmem:[%s5 + $0x2b8] sm:$0xff]
  %v758 = vld [vmem:[%s5 + $0x2c0] sm:$0xff]
  %v759 = vld [vmem:[%s5 + $0x2c8] sm:$0xff]
  %v760 = vld [vmem:[%s5 + $0x2d0] sm:$0xff]
  %v761 = vld [vmem:[%s5 + $0x2d8] sm:$0xff]
  %v762 = vld [vmem:[%s5 + $0x2e0] sm:$0xff]
  %v763 = vld [vmem:[%s5 + $0x2e8] sm:$0xff]
  %v764 = vld [vmem:[%s5 + $0x2f0] sm:$0xff]
  %v765 = vld [vmem:[%s5 + $0x2f8] sm:$0xff]
  %v766 = vld [vmem:[%s5 + $0x300] sm:$0xff]
  %v767 = vld [vmem:[%s5 + $0x308] sm:$0xff]
  %v768 = vld [vmem:[%s5 + $0x310] sm:$0xff]
  %v769 = vld [vmem:[%s5 + $0x318] sm:$0xff]
  %v770 = vld [vmem:[%s5 + $0x320] sm:$0xff]
  %v771 = vld [vmem:[%s5 + $0x328] sm:$0xff]
  %v772 = vld [vmem:[%s5 + $0x330] sm:$0xff]
  %v773 = vld [vmem:[%s5 + $0x338] sm:$0xff]
  %v774 = vld [vmem:[%s5 + $0x340] sm:$0xff]
  %v775 = vld [vmem:[%s5 + $0x348] sm:$0xff]
  %v776 = vld [vmem:[%s5 + $0x350] sm:$0xff]
  %v777 = vld [vmem:[%s5 + $0x358] sm:$0xff]
  %v778 = vld [vmem:[%s5 + $0x360] sm:$0xff]
  %v779 = vld [vmem:[%s5 + $0x368] sm:$0xff]
  %v780 = vld [vmem:[%s5 + $0x370] sm:$0xff]
  %v781 = vld [vmem:[%s5 + $0x378] sm:$0xff]
  %v782 = vld [vmem:[%s5 + $0x380] sm:$0xff]
  %v783 = vld [vmem:[%s5 + $0x388] sm:$0xff]
  %v784 = vld [vmem:[%s5 + $0x390] sm:$0xff]
  %v785 = vld [vmem:[%s5 + $0x398] sm:$0xff]
  %v786 = vld [vmem:[%s5 + $0x3a0] sm:$0xff]
  %v787 = vld [vmem:[%s5 + $0x3a8] sm:$0xff]
  %v788 = vld [vmem:[%s5 + $0x3b0] sm:$0xff]
  %v789 = vld [vmem:[%s5 + $0x3b8] sm:$0xff]
  %v790 = vld [vmem:[%s5 + $0x3c0] sm:$0xff]
  %v791 = vld [vmem:[%s5 + $0x3c8] sm:$0xff]
  %v792 = vld [vmem:[%s5 + $0x3d0] sm:$0xff]
  %v793 = vld [vmem:[%s5 + $0x3d8] sm:$0xff]
  %v794 = vld [vmem:[%s5 + $0x3e0] sm:$0xff]
  %v795 = vld [vmem:[%s5 + $0x3e8] sm:$0xff]
  %v796 = vld [vmem:[%s5 + $0x3f0] sm:$0xff]
  %v797 = vld [vmem:[%s5 + $0x3f8] sm:$0xff]
  %v798 = vld [vmem:[%s5 + $0x400] sm:$0xff]
  %v799 = vld [vmem:[%s5 + $0x408] sm:$0xff]
  %v800 = vld [vmem:[%s5 + $0x410] sm:$0xff]
  %v801 = vld [vmem:[%s5 + $0x418] sm:$0xff]
  %v802 = vld [vmem:[%s5 + $0x420] sm:$0xff]
  %v803 = vld [vmem:[%s5 + $0x428] sm:$0xff]
  %v804 = vld [vmem:[%s5 + $0x430] sm:$0xff]
  %v805 = vld [vmem:[%s5 + $0x438] sm:$0xff]
  %v806 = vld [vmem:[%s5 + $0x440] sm:$0xff]
  %v807 = vld [vmem:[%s5 + $0x448] sm:$0xff]
  %v808 = vld [vmem:[%s5 + $0x450] sm:$0xff]
  %v809 = vld [vmem:[%s5 + $0x458] sm:$0xff]
  %v810 = vld [vmem:[%s5 + $0x460] sm:$0xff]
  %v811 = vld [vmem:[%s5 + $0x468] sm:$0xff]
  %v812 = vld [vmem:[%s5 + $0x470] sm:$0xff]
  %v813 = vld [vmem:[%s5 + $0x478] sm:$0xff]
  %v814 = vld [vmem:[%s5 + $0x480] sm:$0xff]
  %v815 = vld [vmem:[%s5 + $0x488] sm:$0xff]
  %v816 = vld [vmem:[%s5 + $0x490] sm:$0xff]
  %v817 = vld [vmem:[%s5 + $0x498] sm:$0xff]
  %v818 = vld [vmem:[%s5 + $0x4a0] sm:$0xff]
  %v819 = vld [vmem:[%s5 + $0x4a8] sm:$0xff]
  %v820 = vld [vmem:[%s5 + $0x4b0] sm:$0xff]
  %v821 = vld [vmem:[%s5 + $0x4b8] sm:$0xff]
  %v822 = vld [vmem:[%s5 + $0x4c0] sm:$0xff]
  %v823 = vld [vmem:[%s5 + $0x4c8] sm:$0xff]
  %v824 = vld [vmem:[%s5 + $0x4d0] sm:$0xff]
  %v825 = vld [vmem:[%s5 + $0x4d8] sm:$0xff]
  %v826 = vld [vmem:[%s5 + $0x4e0] sm:$0xff]
  %v827 = vld [vmem:[%s5 + $0x4e8] sm:$0xff]
  %v828 = vld [vmem:[%s5 + $0x4f0] sm:$0xff]
  %v829 = vld [vmem:[%s5 + $0x4f8] sm:$0xff]
  %v830 = vld [vmem:[%s5 + $0x500] sm:$0xff]
  %v831 = vld [vmem:[%s5 + $0x508] sm:$0xff]
  %v832 = vld [vmem:[%s5 + $0x510] sm:$0xff]
  %v833 = vld [vmem:[%s5 + $0x518] sm:$0xff]
  %v834 = vld [vmem:[%s5 + $0x520] sm:$0xff]
  %v835 = vld [vmem:[%s5 + $0x528] sm:$0xff]
  %v836 = vld [vmem:[%s5 + $0x530] sm:$0xff]
  %v837 = vld [vmem:[%s5 + $0x538] sm:$0xff]
  %v838 = vld [vmem:[%s5 + $0x540] sm:$0xff]
  %v839 = vld [vmem:[%s5 + $0x548] sm:$0xff]
  %v840 = vld [vmem:[%s5 + $0x550] sm:$0xff]
  %v841 = vld [vmem:[%s5 + $0x558] sm:$0xff]
  %v842 = vld [vmem:[%s5 + $0x560] sm:$0xff]
  %v843 = vld [vmem:[%s5 + $0x568] sm:$0xff]
  %v844 = vld [vmem:[%s5 + $0x570] sm:$0xff]
  %v845 = vld [vmem:[%s5 + $0x578] sm:$0xff]
  %v846 = vld [vmem:[%s5 + $0x580] sm:$0xff]
  %v847 = vld [vmem:[%s5 + $0x588] sm:$0xff]
  %v848 = vld [vmem:[%s5 + $0x590] sm:$0xff]
  %v849 = vld [vmem:[%s5 + $0x598] sm:$0xff]
  %v850 = vld [vmem:[%s5 + $0x5a0] sm:$0xff]
  %v851 = vld [vmem:[%s5 + $0x5a8] sm:$0xff]
  %v852 = vld [vmem:[%s5 + $0x5b0] sm:$0xff]
  %v853 = vld [vmem:[%s5 + $0x5b8] sm:$0xff]
  %v854 = vld [vmem:[%s5 + $0x5c0] sm:$0xff]
  %v855 = vld [vmem:[%s5 + $0x5c8] sm:$0xff]
  %v856 = vld [vmem:[%s5 + $0x5d0] sm:$0xff]
  %v857 = vld [vmem:[%s5 + $0x5d8] sm:$0xff]
  %v858 = vld [vmem:[%s5 + $0x5e0] sm:$0xff]
  %v859 = vld [vmem:[%s5 + $0x5e8] sm:$0xff]
  %v860 = vld [vmem:[%s5 + $0x5f0] sm:$0xff]
  %v861 = vld [vmem:[%s5 + $0x5f8] sm:$0xff]
  %v862 = vld [vmem:[%s5 + $0x600] sm:$0xff]
  %v863 = vld [vmem:[%s5 + $0x608] sm:$0xff]
  %v864 = vld [vmem:[%s5 + $0x610] sm:$0xff]
  %v865 = vld [vmem:[%s5 + $0x618] sm:$0xff]
  %v866 = vld [vmem:[%s5 + $0x620] sm:$0xff]
  %v867 = vld [vmem:[%s5 + $0x628] sm:$0xff]
  %v868 = vld [vmem:[%s5 + $0x630] sm:$0xff]
  %v869 = vld [vmem:[%s5 + $0x638] sm:$0xff]
  %v870 = vld [vmem:[%s5 + $0x640] sm:$0xff]
  %v871 = vld [vmem:[%s5 + $0x648] sm:$0xff]
  %v872 = vld [vmem:[%s5 + $0x650] sm:$0xff]
  %v873 = vld [vmem:[%s5 + $0x658] sm:$0xff]
  %v874 = vld [vmem:[%s5 + $0x660] sm:$0xff]
  %v875 = vld [vmem:[%s5 + $0x668] sm:$0xff]
  %v876 = vld [vmem:[%s5 + $0x670] sm:$0xff]
  %v877 = vld [vmem:[%s5 + $0x678] sm:$0xff]
  %v878 = vld [vmem:[%s5 + $0x680] sm:$0xff]
  %v879 = vld [vmem:[%s5 + $0x688] sm:$0xff]
  %v880 = vld [vmem:[%s5 + $0x690] sm:$0xff]
  %v881 = vld [vmem:[%s5 + $0x698] sm:$0xff]
  %v882 = vld [vmem:[%s5 + $0x6a0] sm:$0xff]
  %v883 = vld [vmem:[%s5 + $0x6a8] sm:$0xff]
  %v884 = vld [vmem:[%s5 + $0x6b0] sm:$0xff]
  %v885 = vld [vmem:[%s5 + $0x6b8] sm:$0xff]
  %v886 = vld [vmem:[%s5 + $0x6c0] sm:$0xff]
  %v887 = vld [vmem:[%s5 + $0x6c8] sm:$0xff]
  %v888 = vld [vmem:[%s5 + $0x6d0] sm:$0xff]
  %v889 = vld [vmem:[%s5 + $0x6d8] sm:$0xff]
  %v890 = vld [vmem:[%s5 + $0x6e0] sm:$0xff]
  %v891 = vld [vmem:[%s5 + $0x6e8] sm:$0xff]
  %v892 = vld [vmem:[%s5 + $0x6f0] sm:$0xff]
  %v893 = vld [vmem:[%s5 + $0x6f8] sm:$0xff]
  %v894 = vld [vmem:[%s5 + $0x700] sm:$0xff]
  %v895 = vld [vmem:[%s5 + $0x708] sm:$0xff]
  %v896 = vld [vmem:[%s5 + $0x710] sm:$0xff]
  %v897 = vld [vmem:[%s5 + $0x718] sm:$0xff]
  %v898 = vld [vmem:[%s5 + $0x720] sm:$0xff]
  %v899 = vld [vmem:[%s5 + $0x728] sm:$0xff]
  %v900 = vld [vmem:[%s5 + $0x730] sm:$0xff]
  %v901 = vld [vmem:[%s5 + $0x738] sm:$0xff]
  %v902 = vld [vmem:[%s5 + $0x740] sm:$0xff]
  %v903 = vld [vmem:[%s5 + $0x748] sm:$0xff]
  %v904 = vld [vmem:[%s5 + $0x750] sm:$0xff]
  %v905 = vld [vmem:[%s5 + $0x758] sm:$0xff]
  %v906 = vld [vmem:[%s5 + $0x760] sm:$0xff]
  %v907 = vld [vmem:[%s5 + $0x768] sm:$0xff]
  %v908 = vld [vmem:[%s5 + $0x770] sm:$0xff]
  %v909 = vld [vmem:[%s5 + $0x778] sm:$0xff]
  %v910 = vld [vmem:[%s5 + $0x780] sm:$0xff]
  %v911 = vld [vmem:[%s5 + $0x788] sm:$0xff]
  %v912 = vld [vmem:[%s5 + $0x790] sm:$0xff]
  %v913 = vld [vmem:[%s5 + $0x798] sm:$0xff]
  %v914 = vld [vmem:[%s5 + $0x7a0] sm:$0xff]
  %v915 = vld [vmem:[%s5 + $0x7a8] sm:$0xff]
  %v916 = vld [vmem:[%s5 + $0x7b0] sm:$0xff]
  %v917 = vld [vmem:[%s5 + $0x7b8] sm:$0xff]
  %v918 = vld [vmem:[%s5 + $0x7c0] sm:$0xff]
  %v919 = vld [vmem:[%s5 + $0x7c8] sm:$0xff]
  %v920 = vld [vmem:[%s5 + $0x7d0] sm:$0xff]
  %v921 = vld [vmem:[%s5 + $0x7d8] sm:$0xff]
  %v922 = vld [vmem:[%s5 + $0x7e0] sm:$0xff]
  %v923 = vld [vmem:[%s5 + $0x7e8] sm:$0xff]
  %v924 = vld [vmem:[%s5 + $0x7f0] sm:$0xff]
  %v925 = vld [vmem:[%s5 + $0x7f8] sm:$0xff]
  %v926 = vld [vmem:[%s6] sm:$0xff]
  %v928 = vperm.slane %v926, 0
  %v929 = vperm.slane %v926, 1
  %v930 = vperm.slane %v926, 2
  %v931 = vperm.slane %v926, 3
  %v932 = vperm.slane %v926, 4
  %v933 = vperm.slane %v926, 5
  %v934 = vperm.slane %v926, 6
  %v935 = vperm.slane %v926, 7
  %v1200 = vunpack.c.l.b16 %v670
  %v1201 = vunpack.c.h.b16 %v670
  %v1202 = vunpack.c.l.b16 %v671
  %v1203 = vunpack.c.h.b16 %v671
  %v1204 = vunpack.c.l.b16 %v672
  %v1205 = vunpack.c.h.b16 %v672
  %v1206 = vunpack.c.l.b16 %v673
  %v1207 = vunpack.c.h.b16 %v673
  %v1208 = vunpack.c.l.b16 %v674
  %v1209 = vunpack.c.h.b16 %v674
  %v1210 = vunpack.c.l.b16 %v675
  %v1211 = vunpack.c.h.b16 %v675
  %v1212 = vunpack.c.l.b16 %v676
  %v1213 = vunpack.c.h.b16 %v676
  %v1214 = vunpack.c.l.b16 %v677
  %v1215 = vunpack.c.h.b16 %v677
  %v1216 = vunpack.c.l.b16 %v678
  %v1217 = vunpack.c.h.b16 %v678
  %v1218 = vunpack.c.l.b16 %v679
  %v1219 = vunpack.c.h.b16 %v679
  %v1220 = vunpack.c.l.b16 %v680
  %v1221 = vunpack.c.h.b16 %v680
  %v1222 = vunpack.c.l.b16 %v681
  %v1223 = vunpack.c.h.b16 %v681
  %v1224 = vunpack.c.l.b16 %v682
  %v1225 = vunpack.c.h.b16 %v682
  %v1226 = vunpack.c.l.b16 %v683
  %v1227 = vunpack.c.h.b16 %v683
  %v1228 = vunpack.c.l.b16 %v684
  %v1229 = vunpack.c.h.b16 %v684
  %v1230 = vunpack.c.l.b16 %v685
  %v1231 = vunpack.c.h.b16 %v685
  %v1232 = vunpack.c.l.b16 %v686
  %v1233 = vunpack.c.h.b16 %v686
  %v1234 = vunpack.c.l.b16 %v687
  %v1235 = vunpack.c.h.b16 %v687
  %v1236 = vunpack.c.l.b16 %v688
  %v1237 = vunpack.c.h.b16 %v688
  %v1238 = vunpack.c.l.b16 %v689
  %v1239 = vunpack.c.h.b16 %v689
  %v1240 = vunpack.c.l.b16 %v690
  %v1241 = vunpack.c.h.b16 %v690
  %v1242 = vunpack.c.l.b16 %v691
  %v1243 = vunpack.c.h.b16 %v691
  %v1244 = vunpack.c.l.b16 %v692
  %v1245 = vunpack.c.h.b16 %v692
  %v1246 = vunpack.c.l.b16 %v693
  %v1247 = vunpack.c.h.b16 %v693
  %v1248 = vunpack.c.l.b16 %v694
  %v1249 = vunpack.c.h.b16 %v694
  %v1250 = vunpack.c.l.b16 %v695
  %v1251 = vunpack.c.h.b16 %v695
  %v1252 = vunpack.c.l.b16 %v696
  %v1253 = vunpack.c.h.b16 %v696
  %v1254 = vunpack.c.l.b16 %v697
  %v1255 = vunpack.c.h.b16 %v697
  %v1256 = vunpack.c.l.b16 %v698
  %v1257 = vunpack.c.h.b16 %v698
  %v1258 = vunpack.c.l.b16 %v699
  %v1259 = vunpack.c.h.b16 %v699
  %v1260 = vunpack.c.l.b16 %v700
  %v1261 = vunpack.c.h.b16 %v700
  %v1262 = vunpack.c.l.b16 %v701
  %v1263 = vunpack.c.h.b16 %v701
  %v1264 = vunpack.c.l.b16 %v702
  %v1265 = vunpack.c.h.b16 %v702
  %v1266 = vunpack.c.l.b16 %v703
  %v1267 = vunpack.c.h.b16 %v703
  %v1268 = vunpack.c.l.b16 %v704
  %v1269 = vunpack.c.h.b16 %v704
  %v1270 = vunpack.c.l.b16 %v705
  %v1271 = vunpack.c.h.b16 %v705
  %v1272 = vunpack.c.l.b16 %v706
  %v1273 = vunpack.c.h.b16 %v706
  %v1274 = vunpack.c.l.b16 %v707
  %v1275 = vunpack.c.h.b16 %v707
  %v1276 = vunpack.c.l.b16 %v708
  %v1277 = vunpack.c.h.b16 %v708
  %v1278 = vunpack.c.l.b16 %v709
  %v1279 = vunpack.c.h.b16 %v709
  %v1280 = vunpack.c.l.b16 %v710
  %v1281 = vunpack.c.h.b16 %v710
  %v1282 = vunpack.c.l.b16 %v711
  %v1283 = vunpack.c.h.b16 %v711
  %v1284 = vunpack.c.l.b16 %v712
  %v1285 = vunpack.c.h.b16 %v712
  %v1286 = vunpack.c.l.b16 %v713
  %v1287 = vunpack.c.h.b16 %v713
  %v1288 = vunpack.c.l.b16 %v714
  %v1289 = vunpack.c.h.b16 %v714
  %v1290 = vunpack.c.l.b16 %v715
  %v1291 = vunpack.c.h.b16 %v715
  %v1292 = vunpack.c.l.b16 %v716
  %v1293 = vunpack.c.h.b16 %v716
  %v1294 = vunpack.c.l.b16 %v717
  %v1295 = vunpack.c.h.b16 %v717
  %v1296 = vunpack.c.l.b16 %v718
  %v1297 = vunpack.c.h.b16 %v718
  %v1298 = vunpack.c.l.b16 %v719
  %v1299 = vunpack.c.h.b16 %v719
  %v1300 = vunpack.c.l.b16 %v720
  %v1301 = vunpack.c.h.b16 %v720
  %v1302 = vunpack.c.l.b16 %v721
  %v1303 = vunpack.c.h.b16 %v721
  %v1304 = vunpack.c.l.b16 %v722
  %v1305 = vunpack.c.h.b16 %v722
  %v1306 = vunpack.c.l.b16 %v723
  %v1307 = vunpack.c.h.b16 %v723
  %v1308 = vunpack.c.l.b16 %v724
  %v1309 = vunpack.c.h.b16 %v724
  %v1310 = vunpack.c.l.b16 %v725
  %v1311 = vunpack.c.h.b16 %v725
  %v1312 = vunpack.c.l.b16 %v726
  %v1313 = vunpack.c.h.b16 %v726
  %v1314 = vunpack.c.l.b16 %v727
  %v1315 = vunpack.c.h.b16 %v727
  %v1316 = vunpack.c.l.b16 %v728
  %v1317 = vunpack.c.h.b16 %v728
  %v1318 = vunpack.c.l.b16 %v729
  %v1319 = vunpack.c.h.b16 %v729
  %v1320 = vunpack.c.l.b16 %v730
  %v1321 = vunpack.c.h.b16 %v730
  %v1322 = vunpack.c.l.b16 %v731
  %v1323 = vunpack.c.h.b16 %v731
  %v1324 = vunpack.c.l.b16 %v732
  %v1325 = vunpack.c.h.b16 %v732
  %v1326 = vunpack.c.l.b16 %v733
  %v1327 = vunpack.c.h.b16 %v733
  %v1328 = vunpack.c.l.b16 %v734
  %v1329 = vunpack.c.h.b16 %v734
  %v1330 = vunpack.c.l.b16 %v735
  %v1331 = vunpack.c.h.b16 %v735
  %v1332 = vunpack.c.l.b16 %v736
  %v1333 = vunpack.c.h.b16 %v736
  %v1334 = vunpack.c.l.b16 %v737
  %v1335 = vunpack.c.h.b16 %v737
  %v1336 = vunpack.c.l.b16 %v738
  %v1337 = vunpack.c.h.b16 %v738
  %v1338 = vunpack.c.l.b16 %v739
  %v1339 = vunpack.c.h.b16 %v739
  %v1340 = vunpack.c.l.b16 %v740
  %v1341 = vunpack.c.h.b16 %v740
  %v1342 = vunpack.c.l.b16 %v741
  %v1343 = vunpack.c.h.b16 %v741
  %v1344 = vunpack.c.l.b16 %v742
  %v1345 = vunpack.c.h.b16 %v742
  %v1346 = vunpack.c.l.b16 %v743
  %v1347 = vunpack.c.h.b16 %v743
  %v1348 = vunpack.c.l.b16 %v744
  %v1349 = vunpack.c.h.b16 %v744
  %v1350 = vunpack.c.l.b16 %v745
  %v1351 = vunpack.c.h.b16 %v745
  %v1352 = vunpack.c.l.b16 %v746
  %v1353 = vunpack.c.h.b16 %v746
  %v1354 = vunpack.c.l.b16 %v747
  %v1355 = vunpack.c.h.b16 %v747
  %v1356 = vunpack.c.l.b16 %v748
  %v1357 = vunpack.c.h.b16 %v748
  %v1358 = vunpack.c.l.b16 %v749
  %v1359 = vunpack.c.h.b16 %v749
  %v1360 = vunpack.c.l.b16 %v750
  %v1361 = vunpack.c.h.b16 %v750
  %v1362 = vunpack.c.l.b16 %v751
  %v1363 = vunpack.c.h.b16 %v751
  %v1364 = vunpack.c.l.b16 %v752
  %v1365 = vunpack.c.h.b16 %v752
  %v1366 = vunpack.c.l.b16 %v753
  %v1367 = vunpack.c.h.b16 %v753
  %v1368 = vunpack.c.l.b16 %v754
  %v1369 = vunpack.c.h.b16 %v754
  %v1370 = vunpack.c.l.b16 %v755
  %v1371 = vunpack.c.h.b16 %v755
  %v1372 = vunpack.c.l.b16 %v756
  %v1373 = vunpack.c.h.b16 %v756
  %v1374 = vunpack.c.l.b16 %v757
  %v1375 = vunpack.c.h.b16 %v757
  %v1376 = vunpack.c.l.b16 %v758
  %v1377 = vunpack.c.h.b16 %v758
  %v1378 = vunpack.c.l.b16 %v759
  %v1379 = vunpack.c.h.b16 %v759
  %v1380 = vunpack.c.l.b16 %v760
  %v1381 = vunpack.c.h.b16 %v760
  %v1382 = vunpack.c.l.b16 %v761
  %v1383 = vunpack.c.h.b16 %v761
  %v1384 = vunpack.c.l.b16 %v762
  %v1385 = vunpack.c.h.b16 %v762
  %v1386 = vunpack.c.l.b16 %v763
  %v1387 = vunpack.c.h.b16 %v763
  %v1388 = vunpack.c.l.b16 %v764
  %v1389 = vunpack.c.h.b16 %v764
  %v1390 = vunpack.c.l.b16 %v765
  %v1391 = vunpack.c.h.b16 %v765
  %v1392 = vunpack.c.l.b16 %v766
  %v1393 = vunpack.c.h.b16 %v766
  %v1394 = vunpack.c.l.b16 %v767
  %v1395 = vunpack.c.h.b16 %v767
  %v1396 = vunpack.c.l.b16 %v768
  %v1397 = vunpack.c.h.b16 %v768
  %v1398 = vunpack.c.l.b16 %v769
  %v1399 = vunpack.c.h.b16 %v769
  %v1400 = vunpack.c.l.b16 %v770
  %v1401 = vunpack.c.h.b16 %v770
  %v1402 = vunpack.c.l.b16 %v771
  %v1403 = vunpack.c.h.b16 %v771
  %v1404 = vunpack.c.l.b16 %v772
  %v1405 = vunpack.c.h.b16 %v772
  %v1406 = vunpack.c.l.b16 %v773
  %v1407 = vunpack.c.h.b16 %v773
  %v1408 = vunpack.c.l.b16 %v774
  %v1409 = vunpack.c.h.b16 %v774
  %v1410 = vunpack.c.l.b16 %v775
  %v1411 = vunpack.c.h.b16 %v775
  %v1412 = vunpack.c.l.b16 %v776
  %v1413 = vunpack.c.h.b16 %v776
  %v1414 = vunpack.c.l.b16 %v777
  %v1415 = vunpack.c.h.b16 %v777
  %v1416 = vunpack.c.l.b16 %v778
  %v1417 = vunpack.c.h.b16 %v778
  %v1418 = vunpack.c.l.b16 %v779
  %v1419 = vunpack.c.h.b16 %v779
  %v1420 = vunpack.c.l.b16 %v780
  %v1421 = vunpack.c.h.b16 %v780
  %v1422 = vunpack.c.l.b16 %v781
  %v1423 = vunpack.c.h.b16 %v781
  %v1424 = vunpack.c.l.b16 %v782
  %v1425 = vunpack.c.h.b16 %v782
  %v1426 = vunpack.c.l.b16 %v783
  %v1427 = vunpack.c.h.b16 %v783
  %v1428 = vunpack.c.l.b16 %v784
  %v1429 = vunpack.c.h.b16 %v784
  %v1430 = vunpack.c.l.b16 %v785
  %v1431 = vunpack.c.h.b16 %v785
  %v1432 = vunpack.c.l.b16 %v786
  %v1433 = vunpack.c.h.b16 %v786
  %v1434 = vunpack.c.l.b16 %v787
  %v1435 = vunpack.c.h.b16 %v787
  %v1436 = vunpack.c.l.b16 %v788
  %v1437 = vunpack.c.h.b16 %v788
  %v1438 = vunpack.c.l.b16 %v789
  %v1439 = vunpack.c.h.b16 %v789
  %v1440 = vunpack.c.l.b16 %v790
  %v1441 = vunpack.c.h.b16 %v790
  %v1442 = vunpack.c.l.b16 %v791
  %v1443 = vunpack.c.h.b16 %v791
  %v1444 = vunpack.c.l.b16 %v792
  %v1445 = vunpack.c.h.b16 %v792
  %v1446 = vunpack.c.l.b16 %v793
  %v1447 = vunpack.c.h.b16 %v793
  %v1448 = vunpack.c.l.b16 %v794
  %v1449 = vunpack.c.h.b16 %v794
  %v1450 = vunpack.c.l.b16 %v795
  %v1451 = vunpack.c.h.b16 %v795
  %v1452 = vunpack.c.l.b16 %v796
  %v1453 = vunpack.c.h.b16 %v796
  %v1454 = vunpack.c.l.b16 %v797
  %v1455 = vunpack.c.h.b16 %v797
  %v1456 = vunpack.c.l.b16 %v798
  %v1457 = vunpack.c.h.b16 %v798
  %v1458 = vunpack.c.l.b16 %v799
  %v1459 = vunpack.c.h.b16 %v799
  %v1460 = vunpack.c.l.b16 %v800
  %v1461 = vunpack.c.h.b16 %v800
  %v1462 = vunpack.c.l.b16 %v801
  %v1463 = vunpack.c.h.b16 %v801
  %v1464 = vunpack.c.l.b16 %v802
  %v1465 = vunpack.c.h.b16 %v802
  %v1466 = vunpack.c.l.b16 %v803
  %v1467 = vunpack.c.h.b16 %v803
  %v1468 = vunpack.c.l.b16 %v804
  %v1469 = vunpack.c.h.b16 %v804
  %v1470 = vunpack.c.l.b16 %v805
  %v1471 = vunpack.c.h.b16 %v805
  %v1472 = vunpack.c.l.b16 %v806
  %v1473 = vunpack.c.h.b16 %v806
  %v1474 = vunpack.c.l.b16 %v807
  %v1475 = vunpack.c.h.b16 %v807
  %v1476 = vunpack.c.l.b16 %v808
  %v1477 = vunpack.c.h.b16 %v808
  %v1478 = vunpack.c.l.b16 %v809
  %v1479 = vunpack.c.h.b16 %v809
  %v1480 = vunpack.c.l.b16 %v810
  %v1481 = vunpack.c.h.b16 %v810
  %v1482 = vunpack.c.l.b16 %v811
  %v1483 = vunpack.c.h.b16 %v811
  %v1484 = vunpack.c.l.b16 %v812
  %v1485 = vunpack.c.h.b16 %v812
  %v1486 = vunpack.c.l.b16 %v813
  %v1487 = vunpack.c.h.b16 %v813
  %v1488 = vunpack.c.l.b16 %v814
  %v1489 = vunpack.c.h.b16 %v814
  %v1490 = vunpack.c.l.b16 %v815
  %v1491 = vunpack.c.h.b16 %v815
  %v1492 = vunpack.c.l.b16 %v816
  %v1493 = vunpack.c.h.b16 %v816
  %v1494 = vunpack.c.l.b16 %v817
  %v1495 = vunpack.c.h.b16 %v817
  %v1496 = vunpack.c.l.b16 %v818
  %v1497 = vunpack.c.h.b16 %v818
  %v1498 = vunpack.c.l.b16 %v819
  %v1499 = vunpack.c.h.b16 %v819
  %v1500 = vunpack.c.l.b16 %v820
  %v1501 = vunpack.c.h.b16 %v820
  %v1502 = vunpack.c.l.b16 %v821
  %v1503 = vunpack.c.h.b16 %v821
  %v1504 = vunpack.c.l.b16 %v822
  %v1505 = vunpack.c.h.b16 %v822
  %v1506 = vunpack.c.l.b16 %v823
  %v1507 = vunpack.c.h.b16 %v823
  %v1508 = vunpack.c.l.b16 %v824
  %v1509 = vunpack.c.h.b16 %v824
  %v1510 = vunpack.c.l.b16 %v825
  %v1511 = vunpack.c.h.b16 %v825
  %v1512 = vunpack.c.l.b16 %v826
  %v1513 = vunpack.c.h.b16 %v826
  %v1514 = vunpack.c.l.b16 %v827
  %v1515 = vunpack.c.h.b16 %v827
  %v1516 = vunpack.c.l.b16 %v828
  %v1517 = vunpack.c.h.b16 %v828
  %v1518 = vunpack.c.l.b16 %v829
  %v1519 = vunpack.c.h.b16 %v829
  %v1520 = vunpack.c.l.b16 %v830
  %v1521 = vunpack.c.h.b16 %v830
  %v1522 = vunpack.c.l.b16 %v831
  %v1523 = vunpack.c.h.b16 %v831
  %v1524 = vunpack.c.l.b16 %v832
  %v1525 = vunpack.c.h.b16 %v832
  %v1526 = vunpack.c.l.b16 %v833
  %v1527 = vunpack.c.h.b16 %v833
  %v1528 = vunpack.c.l.b16 %v834
  %v1529 = vunpack.c.h.b16 %v834
  %v1530 = vunpack.c.l.b16 %v835
  %v1531 = vunpack.c.h.b16 %v835
  %v1532 = vunpack.c.l.b16 %v836
  %v1533 = vunpack.c.h.b16 %v836
  %v1534 = vunpack.c.l.b16 %v837
  %v1535 = vunpack.c.h.b16 %v837
  %v1536 = vunpack.c.l.b16 %v838
  %v1537 = vunpack.c.h.b16 %v838
  %v1538 = vunpack.c.l.b16 %v839
  %v1539 = vunpack.c.h.b16 %v839
  %v1540 = vunpack.c.l.b16 %v840
  %v1541 = vunpack.c.h.b16 %v840
  %v1542 = vunpack.c.l.b16 %v841
  %v1543 = vunpack.c.h.b16 %v841
  %v1544 = vunpack.c.l.b16 %v842
  %v1545 = vunpack.c.h.b16 %v842
  %v1546 = vunpack.c.l.b16 %v843
  %v1547 = vunpack.c.h.b16 %v843
  %v1548 = vunpack.c.l.b16 %v844
  %v1549 = vunpack.c.h.b16 %v844
  %v1550 = vunpack.c.l.b16 %v845
  %v1551 = vunpack.c.h.b16 %v845
  %v1552 = vunpack.c.l.b16 %v846
  %v1553 = vunpack.c.h.b16 %v846
  %v1554 = vunpack.c.l.b16 %v847
  %v1555 = vunpack.c.h.b16 %v847
  %v1556 = vunpack.c.l.b16 %v848
  %v1557 = vunpack.c.h.b16 %v848
  %v1558 = vunpack.c.l.b16 %v849
  %v1559 = vunpack.c.h.b16 %v849
  %v1560 = vunpack.c.l.b16 %v850
  %v1561 = vunpack.c.h.b16 %v850
  %v1562 = vunpack.c.l.b16 %v851
  %v1563 = vunpack.c.h.b16 %v851
  %v1564 = vunpack.c.l.b16 %v852
  %v1565 = vunpack.c.h.b16 %v852
  %v1566 = vunpack.c.l.b16 %v853
  %v1567 = vunpack.c.h.b16 %v853
  %v1568 = vunpack.c.l.b16 %v854
  %v1569 = vunpack.c.h.b16 %v854
  %v1570 = vunpack.c.l.b16 %v855
  %v1571 = vunpack.c.h.b16 %v855
  %v1572 = vunpack.c.l.b16 %v856
  %v1573 = vunpack.c.h.b16 %v856
  %v1574 = vunpack.c.l.b16 %v857
  %v1575 = vunpack.c.h.b16 %v857
  %v1576 = vunpack.c.l.b16 %v858
  %v1577 = vunpack.c.h.b16 %v858
  %v1578 = vunpack.c.l.b16 %v859
  %v1579 = vunpack.c.h.b16 %v859
  %v1580 = vunpack.c.l.b16 %v860
  %v1581 = vunpack.c.h.b16 %v860
  %v1582 = vunpack.c.l.b16 %v861
  %v1583 = vunpack.c.h.b16 %v861
  %v1584 = vunpack.c.l.b16 %v862
  %v1585 = vunpack.c.h.b16 %v862
  %v1586 = vunpack.c.l.b16 %v863
  %v1587 = vunpack.c.h.b16 %v863
  %v1588 = vunpack.c.l.b16 %v864
  %v1589 = vunpack.c.h.b16 %v864
  %v1590 = vunpack.c.l.b16 %v865
  %v1591 = vunpack.c.h.b16 %v865
  %v1592 = vunpack.c.l.b16 %v866
  %v1593 = vunpack.c.h.b16 %v866
  %v1594 = vunpack.c.l.b16 %v867
  %v1595 = vunpack.c.h.b16 %v867
  %v1596 = vunpack.c.l.b16 %v868
  %v1597 = vunpack.c.h.b16 %v868
  %v1598 = vunpack.c.l.b16 %v869
  %v1599 = vunpack.c.h.b16 %v869
  %v1600 = vunpack.c.l.b16 %v870
  %v1601 = vunpack.c.h.b16 %v870
  %v1602 = vunpack.c.l.b16 %v871
  %v1603 = vunpack.c.h.b16 %v871
  %v1604 = vunpack.c.l.b16 %v872
  %v1605 = vunpack.c.h.b16 %v872
  %v1606 = vunpack.c.l.b16 %v873
  %v1607 = vunpack.c.h.b16 %v873
  %v1608 = vunpack.c.l.b16 %v874
  %v1609 = vunpack.c.h.b16 %v874
  %v1610 = vunpack.c.l.b16 %v875
  %v1611 = vunpack.c.h.b16 %v875
  %v1612 = vunpack.c.l.b16 %v876
  %v1613 = vunpack.c.h.b16 %v876
  %v1614 = vunpack.c.l.b16 %v877
  %v1615 = vunpack.c.h.b16 %v877
  %v1616 = vunpack.c.l.b16 %v878
  %v1617 = vunpack.c.h.b16 %v878
  %v1618 = vunpack.c.l.b16 %v879
  %v1619 = vunpack.c.h.b16 %v879
  %v1620 = vunpack.c.l.b16 %v880
  %v1621 = vunpack.c.h.b16 %v880
  %v1622 = vunpack.c.l.b16 %v881
  %v1623 = vunpack.c.h.b16 %v881
  %v1624 = vunpack.c.l.b16 %v882
  %v1625 = vunpack.c.h.b16 %v882
  %v1626 = vunpack.c.l.b16 %v883
  %v1627 = vunpack.c.h.b16 %v883
  %v1628 = vunpack.c.l.b16 %v884
  %v1629 = vunpack.c.h.b16 %v884
  %v1630 = vunpack.c.l.b16 %v885
  %v1631 = vunpack.c.h.b16 %v885
  %v1632 = vunpack.c.l.b16 %v886
  %v1633 = vunpack.c.h.b16 %v886
  %v1634 = vunpack.c.l.b16 %v887
  %v1635 = vunpack.c.h.b16 %v887
  %v1636 = vunpack.c.l.b16 %v888
  %v1637 = vunpack.c.h.b16 %v888
  %v1638 = vunpack.c.l.b16 %v889
  %v1639 = vunpack.c.h.b16 %v889
  %v1640 = vunpack.c.l.b16 %v890
  %v1641 = vunpack.c.h.b16 %v890
  %v1642 = vunpack.c.l.b16 %v891
  %v1643 = vunpack.c.h.b16 %v891
  %v1644 = vunpack.c.l.b16 %v892
  %v1645 = vunpack.c.h.b16 %v892
  %v1646 = vunpack.c.l.b16 %v893
  %v1647 = vunpack.c.h.b16 %v893
  %v1648 = vunpack.c.l.b16 %v894
  %v1649 = vunpack.c.h.b16 %v894
  %v1650 = vunpack.c.l.b16 %v895
  %v1651 = vunpack.c.h.b16 %v895
  %v1652 = vunpack.c.l.b16 %v896
  %v1653 = vunpack.c.h.b16 %v896
  %v1654 = vunpack.c.l.b16 %v897
  %v1655 = vunpack.c.h.b16 %v897
  %v1656 = vunpack.c.l.b16 %v898
  %v1657 = vunpack.c.h.b16 %v898
  %v1658 = vunpack.c.l.b16 %v899
  %v1659 = vunpack.c.h.b16 %v899
  %v1660 = vunpack.c.l.b16 %v900
  %v1661 = vunpack.c.h.b16 %v900
  %v1662 = vunpack.c.l.b16 %v901
  %v1663 = vunpack.c.h.b16 %v901
  %v1664 = vunpack.c.l.b16 %v902
  %v1665 = vunpack.c.h.b16 %v902
  %v1666 = vunpack.c.l.b16 %v903
  %v1667 = vunpack.c.h.b16 %v903
  %v1668 = vunpack.c.l.b16 %v904
  %v1669 = vunpack.c.h.b16 %v904
  %v1670 = vunpack.c.l.b16 %v905
  %v1671 = vunpack.c.h.b16 %v905
  %v1672 = vunpack.c.l.b16 %v906
  %v1673 = vunpack.c.h.b16 %v906
  %v1674 = vunpack.c.l.b16 %v907
  %v1675 = vunpack.c.h.b16 %v907
  %v1676 = vunpack.c.l.b16 %v908
  %v1677 = vunpack.c.h.b16 %v908
  %v1678 = vunpack.c.l.b16 %v909
  %v1679 = vunpack.c.h.b16 %v909
  %v1680 = vunpack.c.l.b16 %v910
  %v1681 = vunpack.c.h.b16 %v910
  %v1682 = vunpack.c.l.b16 %v911
  %v1683 = vunpack.c.h.b16 %v911
  %v1684 = vunpack.c.l.b16 %v912
  %v1685 = vunpack.c.h.b16 %v912
  %v1686 = vunpack.c.l.b16 %v913
  %v1687 = vunpack.c.h.b16 %v913
  %v1688 = vunpack.c.l.b16 %v914
  %v1689 = vunpack.c.h.b16 %v914
  %v1690 = vunpack.c.l.b16 %v915
  %v1691 = vunpack.c.h.b16 %v915
  %v1692 = vunpack.c.l.b16 %v916
  %v1693 = vunpack.c.h.b16 %v916
  %v1694 = vunpack.c.l.b16 %v917
  %v1695 = vunpack.c.h.b16 %v917
  %v1696 = vunpack.c.l.b16 %v918
  %v1697 = vunpack.c.h.b16 %v918
  %v1698 = vunpack.c.l.b16 %v919
  %v1699 = vunpack.c.h.b16 %v919
  %v1700 = vunpack.c.l.b16 %v920
  %v1701 = vunpack.c.h.b16 %v920
  %v1702 = vunpack.c.l.b16 %v921
  %v1703 = vunpack.c.h.b16 %v921
  %v1704 = vunpack.c.l.b16 %v922
  %v1705 = vunpack.c.h.b16 %v922
  %v1706 = vunpack.c.l.b16 %v923
  %v1707 = vunpack.c.h.b16 %v923
  %v1708 = vunpack.c.l.b16 %v924
  %v1709 = vunpack.c.h.b16 %v924
  %v1710 = vunpack.c.l.b16 %v925
  %v1711 = vunpack.c.h.b16 %v925
  %v1712 = vpack.c.b16 %v1208, %v1200
  %v1713 = vpack.c.b16 %v1209, %v1201
  %v1714 = vpack.c.b16 %v1210, %v1202
  %v1715 = vpack.c.b16 %v1211, %v1203
  %v1716 = vpack.c.b16 %v1212, %v1204
  %v1717 = vpack.c.b16 %v1213, %v1205
  %v1718 = vpack.c.b16 %v1214, %v1206
  %v1719 = vpack.c.b16 %v1215, %v1207
  %v1720 = vpack.c.b16 %v1224, %v1216
  %v1721 = vpack.c.b16 %v1225, %v1217
  %v1722 = vpack.c.b16 %v1226, %v1218
  %v1723 = vpack.c.b16 %v1227, %v1219
  %v1724 = vpack.c.b16 %v1228, %v1220
  %v1725 = vpack.c.b16 %v1229, %v1221
  %v1726 = vpack.c.b16 %v1230, %v1222
  %v1727 = vpack.c.b16 %v1231, %v1223
  %v1728 = vpack.c.b16 %v1240, %v1232
  %v1729 = vpack.c.b16 %v1241, %v1233
  %v1730 = vpack.c.b16 %v1242, %v1234
  %v1731 = vpack.c.b16 %v1243, %v1235
  %v1732 = vpack.c.b16 %v1244, %v1236
  %v1733 = vpack.c.b16 %v1245, %v1237
  %v1734 = vpack.c.b16 %v1246, %v1238
  %v1735 = vpack.c.b16 %v1247, %v1239
  %v1736 = vpack.c.b16 %v1256, %v1248
  %v1737 = vpack.c.b16 %v1257, %v1249
  %v1738 = vpack.c.b16 %v1258, %v1250
  %v1739 = vpack.c.b16 %v1259, %v1251
  %v1740 = vpack.c.b16 %v1260, %v1252
  %v1741 = vpack.c.b16 %v1261, %v1253
  %v1742 = vpack.c.b16 %v1262, %v1254
  %v1743 = vpack.c.b16 %v1263, %v1255
  %v1744 = vpack.c.b16 %v1272, %v1264
  %v1745 = vpack.c.b16 %v1273, %v1265
  %v1746 = vpack.c.b16 %v1274, %v1266
  %v1747 = vpack.c.b16 %v1275, %v1267
  %v1748 = vpack.c.b16 %v1276, %v1268
  %v1749 = vpack.c.b16 %v1277, %v1269
  %v1750 = vpack.c.b16 %v1278, %v1270
  %v1751 = vpack.c.b16 %v1279, %v1271
  %v1752 = vpack.c.b16 %v1288, %v1280
  %v1753 = vpack.c.b16 %v1289, %v1281
  %v1754 = vpack.c.b16 %v1290, %v1282
  %v1755 = vpack.c.b16 %v1291, %v1283
  %v1756 = vpack.c.b16 %v1292, %v1284
  %v1757 = vpack.c.b16 %v1293, %v1285
  %v1758 = vpack.c.b16 %v1294, %v1286
  %v1759 = vpack.c.b16 %v1295, %v1287
  %v1760 = vpack.c.b16 %v1304, %v1296
  %v1761 = vpack.c.b16 %v1305, %v1297
  %v1762 = vpack.c.b16 %v1306, %v1298
  %v1763 = vpack.c.b16 %v1307, %v1299
  %v1764 = vpack.c.b16 %v1308, %v1300
  %v1765 = vpack.c.b16 %v1309, %v1301
  %v1766 = vpack.c.b16 %v1310, %v1302
  %v1767 = vpack.c.b16 %v1311, %v1303
  %v1768 = vpack.c.b16 %v1320, %v1312
  %v1769 = vpack.c.b16 %v1321, %v1313
  %v1770 = vpack.c.b16 %v1322, %v1314
  %v1771 = vpack.c.b16 %v1323, %v1315
  %v1772 = vpack.c.b16 %v1324, %v1316
  %v1773 = vpack.c.b16 %v1325, %v1317
  %v1774 = vpack.c.b16 %v1326, %v1318
  %v1775 = vpack.c.b16 %v1327, %v1319
  %v1776 = vpack.c.b16 %v1336, %v1328
  %v1777 = vpack.c.b16 %v1337, %v1329
  %v1778 = vpack.c.b16 %v1338, %v1330
  %v1779 = vpack.c.b16 %v1339, %v1331
  %v1780 = vpack.c.b16 %v1340, %v1332
  %v1781 = vpack.c.b16 %v1341, %v1333
  %v1782 = vpack.c.b16 %v1342, %v1334
  %v1783 = vpack.c.b16 %v1343, %v1335
  %v1784 = vpack.c.b16 %v1352, %v1344
  %v1785 = vpack.c.b16 %v1353, %v1345
  %v1786 = vpack.c.b16 %v1354, %v1346
  %v1787 = vpack.c.b16 %v1355, %v1347
  %v1788 = vpack.c.b16 %v1356, %v1348
  %v1789 = vpack.c.b16 %v1357, %v1349
  %v1790 = vpack.c.b16 %v1358, %v1350
  %v1791 = vpack.c.b16 %v1359, %v1351
  %v1792 = vpack.c.b16 %v1368, %v1360
  %v1793 = vpack.c.b16 %v1369, %v1361
  %v1794 = vpack.c.b16 %v1370, %v1362
  %v1795 = vpack.c.b16 %v1371, %v1363
  %v1796 = vpack.c.b16 %v1372, %v1364
  %v1797 = vpack.c.b16 %v1373, %v1365
  %v1798 = vpack.c.b16 %v1374, %v1366
  %v1799 = vpack.c.b16 %v1375, %v1367
  %v1800 = vpack.c.b16 %v1384, %v1376
  %v1801 = vpack.c.b16 %v1385, %v1377
  %v1802 = vpack.c.b16 %v1386, %v1378
  %v1803 = vpack.c.b16 %v1387, %v1379
  %v1804 = vpack.c.b16 %v1388, %v1380
  %v1805 = vpack.c.b16 %v1389, %v1381
  %v1806 = vpack.c.b16 %v1390, %v1382
  %v1807 = vpack.c.b16 %v1391, %v1383
  %v1808 = vpack.c.b16 %v1400, %v1392
  %v1809 = vpack.c.b16 %v1401, %v1393
  %v1810 = vpack.c.b16 %v1402, %v1394
  %v1811 = vpack.c.b16 %v1403, %v1395
  %v1812 = vpack.c.b16 %v1404, %v1396
  %v1813 = vpack.c.b16 %v1405, %v1397
  %v1814 = vpack.c.b16 %v1406, %v1398
  %v1815 = vpack.c.b16 %v1407, %v1399
  %v1816 = vpack.c.b16 %v1416, %v1408
  %v1817 = vpack.c.b16 %v1417, %v1409
  %v1818 = vpack.c.b16 %v1418, %v1410
  %v1819 = vpack.c.b16 %v1419, %v1411
  %v1820 = vpack.c.b16 %v1420, %v1412
  %v1821 = vpack.c.b16 %v1421, %v1413
  %v1822 = vpack.c.b16 %v1422, %v1414
  %v1823 = vpack.c.b16 %v1423, %v1415
  %v1824 = vpack.c.b16 %v1432, %v1424
  %v1825 = vpack.c.b16 %v1433, %v1425
  %v1826 = vpack.c.b16 %v1434, %v1426
  %v1827 = vpack.c.b16 %v1435, %v1427
  %v1828 = vpack.c.b16 %v1436, %v1428
  %v1829 = vpack.c.b16 %v1437, %v1429
  %v1830 = vpack.c.b16 %v1438, %v1430
  %v1831 = vpack.c.b16 %v1439, %v1431
  %v1832 = vpack.c.b16 %v1448, %v1440
  %v1833 = vpack.c.b16 %v1449, %v1441
  %v1834 = vpack.c.b16 %v1450, %v1442
  %v1835 = vpack.c.b16 %v1451, %v1443
  %v1836 = vpack.c.b16 %v1452, %v1444
  %v1837 = vpack.c.b16 %v1453, %v1445
  %v1838 = vpack.c.b16 %v1454, %v1446
  %v1839 = vpack.c.b16 %v1455, %v1447
  %v1840 = vpack.c.b16 %v1464, %v1456
  %v1841 = vpack.c.b16 %v1465, %v1457
  %v1842 = vpack.c.b16 %v1466, %v1458
  %v1843 = vpack.c.b16 %v1467, %v1459
  %v1844 = vpack.c.b16 %v1468, %v1460
  %v1845 = vpack.c.b16 %v1469, %v1461
  %v1846 = vpack.c.b16 %v1470, %v1462
  %v1847 = vpack.c.b16 %v1471, %v1463
  %v1848 = vpack.c.b16 %v1480, %v1472
  %v1849 = vpack.c.b16 %v1481, %v1473
  %v1850 = vpack.c.b16 %v1482, %v1474
  %v1851 = vpack.c.b16 %v1483, %v1475
  %v1852 = vpack.c.b16 %v1484, %v1476
  %v1853 = vpack.c.b16 %v1485, %v1477
  %v1854 = vpack.c.b16 %v1486, %v1478
  %v1855 = vpack.c.b16 %v1487, %v1479
  %v1856 = vpack.c.b16 %v1496, %v1488
  %v1857 = vpack.c.b16 %v1497, %v1489
  %v1858 = vpack.c.b16 %v1498, %v1490
  %v1859 = vpack.c.b16 %v1499, %v1491
  %v1860 = vpack.c.b16 %v1500, %v1492
  %v1861 = vpack.c.b16 %v1501, %v1493
  %v1862 = vpack.c.b16 %v1502, %v1494
  %v1863 = vpack.c.b16 %v1503, %v1495
  %v1864 = vpack.c.b16 %v1512, %v1504
  %v1865 = vpack.c.b16 %v1513, %v1505
  %v1866 = vpack.c.b16 %v1514, %v1506
  %v1867 = vpack.c.b16 %v1515, %v1507
  %v1868 = vpack.c.b16 %v1516, %v1508
  %v1869 = vpack.c.b16 %v1517, %v1509
  %v1870 = vpack.c.b16 %v1518, %v1510
  %v1871 = vpack.c.b16 %v1519, %v1511
  %v1872 = vpack.c.b16 %v1528, %v1520
  %v1873 = vpack.c.b16 %v1529, %v1521
  %v1874 = vpack.c.b16 %v1530, %v1522
  %v1875 = vpack.c.b16 %v1531, %v1523
  %v1876 = vpack.c.b16 %v1532, %v1524
  %v1877 = vpack.c.b16 %v1533, %v1525
  %v1878 = vpack.c.b16 %v1534, %v1526
  %v1879 = vpack.c.b16 %v1535, %v1527
  %v1880 = vpack.c.b16 %v1544, %v1536
  %v1881 = vpack.c.b16 %v1545, %v1537
  %v1882 = vpack.c.b16 %v1546, %v1538
  %v1883 = vpack.c.b16 %v1547, %v1539
  %v1884 = vpack.c.b16 %v1548, %v1540
  %v1885 = vpack.c.b16 %v1549, %v1541
  %v1886 = vpack.c.b16 %v1550, %v1542
  %v1887 = vpack.c.b16 %v1551, %v1543
  %v1888 = vpack.c.b16 %v1560, %v1552
  %v1889 = vpack.c.b16 %v1561, %v1553
  %v1890 = vpack.c.b16 %v1562, %v1554
  %v1891 = vpack.c.b16 %v1563, %v1555
  %v1892 = vpack.c.b16 %v1564, %v1556
  %v1893 = vpack.c.b16 %v1565, %v1557
  %v1894 = vpack.c.b16 %v1566, %v1558
  %v1895 = vpack.c.b16 %v1567, %v1559
  %v1896 = vpack.c.b16 %v1576, %v1568
  %v1897 = vpack.c.b16 %v1577, %v1569
  %v1898 = vpack.c.b16 %v1578, %v1570
  %v1899 = vpack.c.b16 %v1579, %v1571
  %v1900 = vpack.c.b16 %v1580, %v1572
  %v1901 = vpack.c.b16 %v1581, %v1573
  %v1902 = vpack.c.b16 %v1582, %v1574
  %v1903 = vpack.c.b16 %v1583, %v1575
  %v1904 = vpack.c.b16 %v1592, %v1584
  %v1905 = vpack.c.b16 %v1593, %v1585
  %v1906 = vpack.c.b16 %v1594, %v1586
  %v1907 = vpack.c.b16 %v1595, %v1587
  %v1908 = vpack.c.b16 %v1596, %v1588
  %v1909 = vpack.c.b16 %v1597, %v1589
  %v1910 = vpack.c.b16 %v1598, %v1590
  %v1911 = vpack.c.b16 %v1599, %v1591
  %v1912 = vpack.c.b16 %v1608, %v1600
  %v1913 = vpack.c.b16 %v1609, %v1601
  %v1914 = vpack.c.b16 %v1610, %v1602
  %v1915 = vpack.c.b16 %v1611, %v1603
  %v1916 = vpack.c.b16 %v1612, %v1604
  %v1917 = vpack.c.b16 %v1613, %v1605
  %v1918 = vpack.c.b16 %v1614, %v1606
  %v1919 = vpack.c.b16 %v1615, %v1607
  %v1920 = vpack.c.b16 %v1624, %v1616
  %v1921 = vpack.c.b16 %v1625, %v1617
  %v1922 = vpack.c.b16 %v1626, %v1618
  %v1923 = vpack.c.b16 %v1627, %v1619
  %v1924 = vpack.c.b16 %v1628, %v1620
  %v1925 = vpack.c.b16 %v1629, %v1621
  %v1926 = vpack.c.b16 %v1630, %v1622
  %v1927 = vpack.c.b16 %v1631, %v1623
  %v1928 = vpack.c.b16 %v1640, %v1632
  %v1929 = vpack.c.b16 %v1641, %v1633
  %v1930 = vpack.c.b16 %v1642, %v1634
  %v1931 = vpack.c.b16 %v1643, %v1635
  %v1932 = vpack.c.b16 %v1644, %v1636
  %v1933 = vpack.c.b16 %v1645, %v1637
  %v1934 = vpack.c.b16 %v1646, %v1638
  %v1935 = vpack.c.b16 %v1647, %v1639
  %v1936 = vpack.c.b16 %v1656, %v1648
  %v1937 = vpack.c.b16 %v1657, %v1649
  %v1938 = vpack.c.b16 %v1658, %v1650
  %v1939 = vpack.c.b16 %v1659, %v1651
  %v1940 = vpack.c.b16 %v1660, %v1652
  %v1941 = vpack.c.b16 %v1661, %v1653
  %v1942 = vpack.c.b16 %v1662, %v1654
  %v1943 = vpack.c.b16 %v1663, %v1655
  %v1944 = vpack.c.b16 %v1672, %v1664
  %v1945 = vpack.c.b16 %v1673, %v1665
  %v1946 = vpack.c.b16 %v1674, %v1666
  %v1947 = vpack.c.b16 %v1675, %v1667
  %v1948 = vpack.c.b16 %v1676, %v1668
  %v1949 = vpack.c.b16 %v1677, %v1669
  %v1950 = vpack.c.b16 %v1678, %v1670
  %v1951 = vpack.c.b16 %v1679, %v1671
  %v1952 = vpack.c.b16 %v1688, %v1680
  %v1953 = vpack.c.b16 %v1689, %v1681
  %v1954 = vpack.c.b16 %v1690, %v1682
  %v1955 = vpack.c.b16 %v1691, %v1683
  %v1956 = vpack.c.b16 %v1692, %v1684
  %v1957 = vpack.c.b16 %v1693, %v1685
  %v1958 = vpack.c.b16 %v1694, %v1686
  %v1959 = vpack.c.b16 %v1695, %v1687
  %v1960 = vpack.c.b16 %v1704, %v1696
  %v1961 = vpack.c.b16 %v1705, %v1697
  %v1962 = vpack.c.b16 %v1706, %v1698
  %v1963 = vpack.c.b16 %v1707, %v1699
  %v1964 = vpack.c.b16 %v1708, %v1700
  %v1965 = vpack.c.b16 %v1709, %v1701
  %v1966 = vpack.c.b16 %v1710, %v1702
  %v1967 = vpack.c.b16 %v1711, %v1703
  %2224 = vmatpush.bf16.msra.mxu0 %v1768
  %2225 = vmatpush.bf16.msra.mxu0 %v1760
  %2226 = vmatpush.bf16.msra.mxu0 %v1752
  %2227 = vmatpush.bf16.msra.mxu0 %v1744
  %2228 = vmatpush.bf16.msra.mxu0 %v1736
  %2229 = vmatpush.bf16.msra.mxu0 %v1728
  %2230 = vmatpush.bf16.msra.mxu0 %v1720
  %2231 = vmatpush.bf16.msra.mxu0 %v1712
  %2232 = vmatmul.bf16.gmra.mxu0 %v666
  %v2233 = vpop.f32.mrf.mxu0
  %v2234 = vadd.f32 %v928, %v2233
  %v2235 = vpop.f32.mrf.mxu0
  %v2236 = vadd.f32 %v928, %v2235
  %2237 = vdwg.mxu0
  %2238 = vmatpush.bf16.msra.mxu0 %v1832
  %2239 = vmatpush.bf16.msra.mxu0 %v1824
  %2240 = vmatpush.bf16.msra.mxu0 %v1816
  %2241 = vmatpush.bf16.msra.mxu0 %v1808
  %2242 = vmatpush.bf16.msra.mxu0 %v1800
  %2243 = vmatpush.bf16.msra.mxu0 %v1792
  %2244 = vmatpush.bf16.msra.mxu0 %v1784
  %2245 = vmatpush.bf16.msra.mxu0 %v1776
  %2246 = vmatmul.bf16.gmra.mxu0 %v667
  %v2247 = vpop.f32.mrf.mxu0
  %v2248 = vadd.f32 %v2234, %v2247
  %v2249 = vpop.f32.mrf.mxu0
  %v2250 = vadd.f32 %v2236, %v2249
  %2251 = vdwg.mxu0
  %2252 = vmatpush.bf16.msra.mxu0 %v1896
  %2253 = vmatpush.bf16.msra.mxu0 %v1888
  %2254 = vmatpush.bf16.msra.mxu0 %v1880
  %2255 = vmatpush.bf16.msra.mxu0 %v1872
  %2256 = vmatpush.bf16.msra.mxu0 %v1864
  %2257 = vmatpush.bf16.msra.mxu0 %v1856
  %2258 = vmatpush.bf16.msra.mxu0 %v1848
  %2259 = vmatpush.bf16.msra.mxu0 %v1840
  %2260 = vmatmul.bf16.gmra.mxu0 %v668
  %v2261 = vpop.f32.mrf.mxu0
  %v2262 = vadd.f32 %v2248, %v2261
  %v2263 = vpop.f32.mrf.mxu0
  %v2264 = vadd.f32 %v2250, %v2263
  %2265 = vdwg.mxu0
  %2266 = vmatpush.bf16.msra.mxu0 %v1960
  %2267 = vmatpush.bf16.msra.mxu0 %v1952
  %2268 = vmatpush.bf16.msra.mxu0 %v1944
  %2269 = vmatpush.bf16.msra.mxu0 %v1936
  %2270 = vmatpush.bf16.msra.mxu0 %v1928
  %2271 = vmatpush.bf16.msra.mxu0 %v1920
  %2272 = vmatpush.bf16.msra.mxu0 %v1912
  %2273 = vmatpush.bf16.msra.mxu0 %v1904
  %2274 = vmatmul.bf16.gmra.mxu0 %v669
  %v2275 = vpop.f32.mrf.mxu0
  %v2276 = vadd.f32 %v2262, %v2275
  %v2277 = vpop.f32.mrf.mxu0
  %v2278 = vadd.f32 %v2264, %v2277
  %2279 = vdwg.mxu0
  %2280 = vmatpush.bf16.msra.mxu0 %v1769
  %2281 = vmatpush.bf16.msra.mxu0 %v1761
  %2282 = vmatpush.bf16.msra.mxu0 %v1753
  %2283 = vmatpush.bf16.msra.mxu0 %v1745
  %2284 = vmatpush.bf16.msra.mxu0 %v1737
  %2285 = vmatpush.bf16.msra.mxu0 %v1729
  %2286 = vmatpush.bf16.msra.mxu0 %v1721
  %2287 = vmatpush.bf16.msra.mxu0 %v1713
  %2288 = vmatmul.bf16.gmra.mxu0 %v666
  %v2289 = vpop.f32.mrf.mxu0
  %v2290 = vadd.f32 %v929, %v2289
  %v2291 = vpop.f32.mrf.mxu0
  %v2292 = vadd.f32 %v929, %v2291
  %2293 = vdwg.mxu0
  %2294 = vmatpush.bf16.msra.mxu0 %v1833
  %2295 = vmatpush.bf16.msra.mxu0 %v1825
  %2296 = vmatpush.bf16.msra.mxu0 %v1817
  %2297 = vmatpush.bf16.msra.mxu0 %v1809
  %2298 = vmatpush.bf16.msra.mxu0 %v1801
  %2299 = vmatpush.bf16.msra.mxu0 %v1793
  %2300 = vmatpush.bf16.msra.mxu0 %v1785
  %2301 = vmatpush.bf16.msra.mxu0 %v1777
  %2302 = vmatmul.bf16.gmra.mxu0 %v667
  %v2303 = vpop.f32.mrf.mxu0
  %v2304 = vadd.f32 %v2290, %v2303
  %v2305 = vpop.f32.mrf.mxu0
  %v2306 = vadd.f32 %v2292, %v2305
  %2307 = vdwg.mxu0
  %2308 = vmatpush.bf16.msra.mxu0 %v1897
  %2309 = vmatpush.bf16.msra.mxu0 %v1889
  %2310 = vmatpush.bf16.msra.mxu0 %v1881
  %2311 = vmatpush.bf16.msra.mxu0 %v1873
  %2312 = vmatpush.bf16.msra.mxu0 %v1865
  %2313 = vmatpush.bf16.msra.mxu0 %v1857
  %2314 = vmatpush.bf16.msra.mxu0 %v1849
  %2315 = vmatpush.bf16.msra.mxu0 %v1841
  %2316 = vmatmul.bf16.gmra.mxu0 %v668
  %v2317 = vpop.f32.mrf.mxu0
  %v2318 = vadd.f32 %v2304, %v2317
  %v2319 = vpop.f32.mrf.mxu0
  %v2320 = vadd.f32 %v2306, %v2319
  %2321 = vdwg.mxu0
  %2322 = vmatpush.bf16.msra.mxu0 %v1961
  %2323 = vmatpush.bf16.msra.mxu0 %v1953
  %2324 = vmatpush.bf16.msra.mxu0 %v1945
  %2325 = vmatpush.bf16.msra.mxu0 %v1937
  %2326 = vmatpush.bf16.msra.mxu0 %v1929
  %2327 = vmatpush.bf16.msra.mxu0 %v1921
  %2328 = vmatpush.bf16.msra.mxu0 %v1913
  %2329 = vmatpush.bf16.msra.mxu0 %v1905
  %2330 = vmatmul.bf16.gmra.mxu0 %v669
  %v2331 = vpop.f32.mrf.mxu0
  %v2332 = vadd.f32 %v2318, %v2331
  %v2333 = vpop.f32.mrf.mxu0
  %v2334 = vadd.f32 %v2320, %v2333
  %2335 = vdwg.mxu0
  %2336 = vmatpush.bf16.msra.mxu0 %v1770
  %2337 = vmatpush.bf16.msra.mxu0 %v1762
  %2338 = vmatpush.bf16.msra.mxu0 %v1754
  %2339 = vmatpush.bf16.msra.mxu0 %v1746
  %2340 = vmatpush.bf16.msra.mxu0 %v1738
  %2341 = vmatpush.bf16.msra.mxu0 %v1730
  %2342 = vmatpush.bf16.msra.mxu0 %v1722
  %2343 = vmatpush.bf16.msra.mxu0 %v1714
  %2344 = vmatmul.bf16.gmra.mxu0 %v666
  %v2345 = vpop.f32.mrf.mxu0
  %v2346 = vadd.f32 %v930, %v2345
  %v2347 = vpop.f32.mrf.mxu0
  %v2348 = vadd.f32 %v930, %v2347
  %2349 = vdwg.mxu0
  %2350 = vmatpush.bf16.msra.mxu0 %v1834
  %2351 = vmatpush.bf16.msra.mxu0 %v1826
  %2352 = vmatpush.bf16.msra.mxu0 %v1818
  %2353 = vmatpush.bf16.msra.mxu0 %v1810
  %2354 = vmatpush.bf16.msra.mxu0 %v1802
  %2355 = vmatpush.bf16.msra.mxu0 %v1794
  %2356 = vmatpush.bf16.msra.mxu0 %v1786
  %2357 = vmatpush.bf16.msra.mxu0 %v1778
  %2358 = vmatmul.bf16.gmra.mxu0 %v667
  %v2359 = vpop.f32.mrf.mxu0
  %v2360 = vadd.f32 %v2346, %v2359
  %v2361 = vpop.f32.mrf.mxu0
  %v2362 = vadd.f32 %v2348, %v2361
  %2363 = vdwg.mxu0
  %2364 = vmatpush.bf16.msra.mxu0 %v1898
  %2365 = vmatpush.bf16.msra.mxu0 %v1890
  %2366 = vmatpush.bf16.msra.mxu0 %v1882
  %2367 = vmatpush.bf16.msra.mxu0 %v1874
  %2368 = vmatpush.bf16.msra.mxu0 %v1866
  %2369 = vmatpush.bf16.msra.mxu0 %v1858
  %2370 = vmatpush.bf16.msra.mxu0 %v1850
  %2371 = vmatpush.bf16.msra.mxu0 %v1842
  %2372 = vmatmul.bf16.gmra.mxu0 %v668
  %v2373 = vpop.f32.mrf.mxu0
  %v2374 = vadd.f32 %v2360, %v2373
  %v2375 = vpop.f32.mrf.mxu0
  %v2376 = vadd.f32 %v2362, %v2375
  %2377 = vdwg.mxu0
  %2378 = vmatpush.bf16.msra.mxu0 %v1962
  %2379 = vmatpush.bf16.msra.mxu0 %v1954
  %2380 = vmatpush.bf16.msra.mxu0 %v1946
  %2381 = vmatpush.bf16.msra.mxu0 %v1938
  %2382 = vmatpush.bf16.msra.mxu0 %v1930
  %2383 = vmatpush.bf16.msra.mxu0 %v1922
  %2384 = vmatpush.bf16.msra.mxu0 %v1914
  %2385 = vmatpush.bf16.msra.mxu0 %v1906
  %2386 = vmatmul.bf16.gmra.mxu0 %v669
  %v2387 = vpop.f32.mrf.mxu0
  %v2388 = vadd.f32 %v2374, %v2387
  %v2389 = vpop.f32.mrf.mxu0
  %v2390 = vadd.f32 %v2376, %v2389
  %2391 = vdwg.mxu0
  %2392 = vmatpush.bf16.msra.mxu0 %v1771
  %2393 = vmatpush.bf16.msra.mxu0 %v1763
  %2394 = vmatpush.bf16.msra.mxu0 %v1755
  %2395 = vmatpush.bf16.msra.mxu0 %v1747
  %2396 = vmatpush.bf16.msra.mxu0 %v1739
  %2397 = vmatpush.bf16.msra.mxu0 %v1731
  %2398 = vmatpush.bf16.msra.mxu0 %v1723
  %2399 = vmatpush.bf16.msra.mxu0 %v1715
  %2400 = vmatmul.bf16.gmra.mxu0 %v666
  %v2401 = vpop.f32.mrf.mxu0
  %v2402 = vadd.f32 %v931, %v2401
  %v2403 = vpop.f32.mrf.mxu0
  %v2404 = vadd.f32 %v931, %v2403
  %2405 = vdwg.mxu0
  %2406 = vmatpush.bf16.msra.mxu0 %v1835
  %2407 = vmatpush.bf16.msra.mxu0 %v1827
  %2408 = vmatpush.bf16.msra.mxu0 %v1819
  %2409 = vmatpush.bf16.msra.mxu0 %v1811
  %2410 = vmatpush.bf16.msra.mxu0 %v1803
  %2411 = vmatpush.bf16.msra.mxu0 %v1795
  %2412 = vmatpush.bf16.msra.mxu0 %v1787
  %2413 = vmatpush.bf16.msra.mxu0 %v1779
  %2414 = vmatmul.bf16.gmra.mxu0 %v667
  %v2415 = vpop.f32.mrf.mxu0
  %v2416 = vadd.f32 %v2402, %v2415
  %v2417 = vpop.f32.mrf.mxu0
  %v2418 = vadd.f32 %v2404, %v2417
  %2419 = vdwg.mxu0
  %2420 = vmatpush.bf16.msra.mxu0 %v1899
  %2421 = vmatpush.bf16.msra.mxu0 %v1891
  %2422 = vmatpush.bf16.msra.mxu0 %v1883
  %2423 = vmatpush.bf16.msra.mxu0 %v1875
  %2424 = vmatpush.bf16.msra.mxu0 %v1867
  %2425 = vmatpush.bf16.msra.mxu0 %v1859
  %2426 = vmatpush.bf16.msra.mxu0 %v1851
  %2427 = vmatpush.bf16.msra.mxu0 %v1843
  %2428 = vmatmul.bf16.gmra.mxu0 %v668
  %v2429 = vpop.f32.mrf.mxu0
  %v2430 = vadd.f32 %v2416, %v2429
  %v2431 = vpop.f32.mrf.mxu0
  %v2432 = vadd.f32 %v2418, %v2431
  %2433 = vdwg.mxu0
  %2434 = vmatpush.bf16.msra.mxu0 %v1963
  %2435 = vmatpush.bf16.msra.mxu0 %v1955
  %2436 = vmatpush.bf16.msra.mxu0 %v1947
  %2437 = vmatpush.bf16.msra.mxu0 %v1939
  %2438 = vmatpush.bf16.msra.mxu0 %v1931
  %2439 = vmatpush.bf16.msra.mxu0 %v1923
  %2440 = vmatpush.bf16.msra.mxu0 %v1915
  %2441 = vmatpush.bf16.msra.mxu0 %v1907
  %2442 = vmatmul.bf16.gmra.mxu0 %v669
  %v2443 = vpop.f32.mrf.mxu0
  %v2444 = vadd.f32 %v2430, %v2443
  %v2445 = vpop.f32.mrf.mxu0
  %v2446 = vadd.f32 %v2432, %v2445
  %2447 = vdwg.mxu0
  %2448 = vmatpush.bf16.msra.mxu0 %v1772
  %2449 = vmatpush.bf16.msra.mxu0 %v1764
  %2450 = vmatpush.bf16.msra.mxu0 %v1756
  %2451 = vmatpush.bf16.msra.mxu0 %v1748
  %2452 = vmatpush.bf16.msra.mxu0 %v1740
  %2453 = vmatpush.bf16.msra.mxu0 %v1732
  %2454 = vmatpush.bf16.msra.mxu0 %v1724
  %2455 = vmatpush.bf16.msra.mxu0 %v1716
  %2456 = vmatmul.bf16.gmra.mxu0 %v666
  %v2457 = vpop.f32.mrf.mxu0
  %v2458 = vadd.f32 %v932, %v2457
  %v2459 = vpop.f32.mrf.mxu0
  %v2460 = vadd.f32 %v932, %v2459
  %2461 = vdwg.mxu0
  %2462 = vmatpush.bf16.msra.mxu0 %v1836
  %2463 = vmatpush.bf16.msra.mxu0 %v1828
  %2464 = vmatpush.bf16.msra.mxu0 %v1820
  %2465 = vmatpush.bf16.msra.mxu0 %v1812
  %2466 = vmatpush.bf16.msra.mxu0 %v1804
  %2467 = vmatpush.bf16.msra.mxu0 %v1796
  %2468 = vmatpush.bf16.msra.mxu0 %v1788
  %2469 = vmatpush.bf16.msra.mxu0 %v1780
  %2470 = vmatmul.bf16.gmra.mxu0 %v667
  %v2471 = vpop.f32.mrf.mxu0
  %v2472 = vadd.f32 %v2458, %v2471
  %v2473 = vpop.f32.mrf.mxu0
  %v2474 = vadd.f32 %v2460, %v2473
  %2475 = vdwg.mxu0
  %2476 = vmatpush.bf16.msra.mxu0 %v1900
  %2477 = vmatpush.bf16.msra.mxu0 %v1892
  %2478 = vmatpush.bf16.msra.mxu0 %v1884
  %2479 = vmatpush.bf16.msra.mxu0 %v1876
  %2480 = vmatpush.bf16.msra.mxu0 %v1868
  %2481 = vmatpush.bf16.msra.mxu0 %v1860
  %2482 = vmatpush.bf16.msra.mxu0 %v1852
  %2483 = vmatpush.bf16.msra.mxu0 %v1844
  %2484 = vmatmul.bf16.gmra.mxu0 %v668
  %v2485 = vpop.f32.mrf.mxu0
  %v2486 = vadd.f32 %v2472, %v2485
  %v2487 = vpop.f32.mrf.mxu0
  %v2488 = vadd.f32 %v2474, %v2487
  %2489 = vdwg.mxu0
  %2490 = vmatpush.bf16.msra.mxu0 %v1964
  %2491 = vmatpush.bf16.msra.mxu0 %v1956
  %2492 = vmatpush.bf16.msra.mxu0 %v1948
  %2493 = vmatpush.bf16.msra.mxu0 %v1940
  %2494 = vmatpush.bf16.msra.mxu0 %v1932
  %2495 = vmatpush.bf16.msra.mxu0 %v1924
  %2496 = vmatpush.bf16.msra.mxu0 %v1916
  %2497 = vmatpush.bf16.msra.mxu0 %v1908
  %2498 = vmatmul.bf16.gmra.mxu0 %v669
  %v2499 = vpop.f32.mrf.mxu0
  %v2500 = vadd.f32 %v2486, %v2499
  %v2501 = vpop.f32.mrf.mxu0
  %v2502 = vadd.f32 %v2488, %v2501
  %2503 = vdwg.mxu0
  %2504 = vmatpush.bf16.msra.mxu0 %v1773
  %2505 = vmatpush.bf16.msra.mxu0 %v1765
  %2506 = vmatpush.bf16.msra.mxu0 %v1757
  %2507 = vmatpush.bf16.msra.mxu0 %v1749
  %2508 = vmatpush.bf16.msra.mxu0 %v1741
  %2509 = vmatpush.bf16.msra.mxu0 %v1733
  %2510 = vmatpush.bf16.msra.mxu0 %v1725
  %2511 = vmatpush.bf16.msra.mxu0 %v1717
  %2512 = vmatmul.bf16.gmra.mxu0 %v666
  %v2513 = vpop.f32.mrf.mxu0
  %v2514 = vadd.f32 %v933, %v2513
  %v2515 = vpop.f32.mrf.mxu0
  %v2516 = vadd.f32 %v933, %v2515
  %2517 = vdwg.mxu0
  %2518 = vmatpush.bf16.msra.mxu0 %v1837
  %2519 = vmatpush.bf16.msra.mxu0 %v1829
  %2520 = vmatpush.bf16.msra.mxu0 %v1821
  %2521 = vmatpush.bf16.msra.mxu0 %v1813
  %2522 = vmatpush.bf16.msra.mxu0 %v1805
  %2523 = vmatpush.bf16.msra.mxu0 %v1797
  %2524 = vmatpush.bf16.msra.mxu0 %v1789
  %2525 = vmatpush.bf16.msra.mxu0 %v1781
  %2526 = vmatmul.bf16.gmra.mxu0 %v667
  %v2527 = vpop.f32.mrf.mxu0
  %v2528 = vadd.f32 %v2514, %v2527
  %v2529 = vpop.f32.mrf.mxu0
  %v2530 = vadd.f32 %v2516, %v2529
  %2531 = vdwg.mxu0
  %2532 = vmatpush.bf16.msra.mxu0 %v1901
  %2533 = vmatpush.bf16.msra.mxu0 %v1893
  %2534 = vmatpush.bf16.msra.mxu0 %v1885
  %2535 = vmatpush.bf16.msra.mxu0 %v1877
  %2536 = vmatpush.bf16.msra.mxu0 %v1869
  %2537 = vmatpush.bf16.msra.mxu0 %v1861
  %2538 = vmatpush.bf16.msra.mxu0 %v1853
  %2539 = vmatpush.bf16.msra.mxu0 %v1845
  %2540 = vmatmul.bf16.gmra.mxu0 %v668
  %v2541 = vpop.f32.mrf.mxu0
  %v2542 = vadd.f32 %v2528, %v2541
  %v2543 = vpop.f32.mrf.mxu0
  %v2544 = vadd.f32 %v2530, %v2543
  %2545 = vdwg.mxu0
  %2546 = vmatpush.bf16.msra.mxu0 %v1965
  %2547 = vmatpush.bf16.msra.mxu0 %v1957
  %2548 = vmatpush.bf16.msra.mxu0 %v1949
  %2549 = vmatpush.bf16.msra.mxu0 %v1941
  %2550 = vmatpush.bf16.msra.mxu0 %v1933
  %2551 = vmatpush.bf16.msra.mxu0 %v1925
  %2552 = vmatpush.bf16.msra.mxu0 %v1917
  %2553 = vmatpush.bf16.msra.mxu0 %v1909
  %2554 = vmatmul.bf16.gmra.mxu0 %v669
  %v2555 = vpop.f32.mrf.mxu0
  %v2556 = vadd.f32 %v2542, %v2555
  %v2557 = vpop.f32.mrf.mxu0
  %v2558 = vadd.f32 %v2544, %v2557
  %2559 = vdwg.mxu0
  %2560 = vmatpush.bf16.msra.mxu0 %v1774
  %2561 = vmatpush.bf16.msra.mxu0 %v1766
  %2562 = vmatpush.bf16.msra.mxu0 %v1758
  %2563 = vmatpush.bf16.msra.mxu0 %v1750
  %2564 = vmatpush.bf16.msra.mxu0 %v1742
  %2565 = vmatpush.bf16.msra.mxu0 %v1734
  %2566 = vmatpush.bf16.msra.mxu0 %v1726
  %2567 = vmatpush.bf16.msra.mxu0 %v1718
  %2568 = vmatmul.bf16.gmra.mxu0 %v666
  %v2569 = vpop.f32.mrf.mxu0
  %v2570 = vadd.f32 %v934, %v2569
  %v2571 = vpop.f32.mrf.mxu0
  %v2572 = vadd.f32 %v934, %v2571
  %2573 = vdwg.mxu0
  %2574 = vmatpush.bf16.msra.mxu0 %v1838
  %2575 = vmatpush.bf16.msra.mxu0 %v1830
  %2576 = vmatpush.bf16.msra.mxu0 %v1822
  %2577 = vmatpush.bf16.msra.mxu0 %v1814
  %2578 = vmatpush.bf16.msra.mxu0 %v1806
  %2579 = vmatpush.bf16.msra.mxu0 %v1798
  %2580 = vmatpush.bf16.msra.mxu0 %v1790
  %2581 = vmatpush.bf16.msra.mxu0 %v1782
  %2582 = vmatmul.bf16.gmra.mxu0 %v667
  %v2583 = vpop.f32.mrf.mxu0
  %v2584 = vadd.f32 %v2570, %v2583
  %v2585 = vpop.f32.mrf.mxu0
  %v2586 = vadd.f32 %v2572, %v2585
  %2587 = vdwg.mxu0
  %2588 = vmatpush.bf16.msra.mxu0 %v1902
  %2589 = vmatpush.bf16.msra.mxu0 %v1894
  %2590 = vmatpush.bf16.msra.mxu0 %v1886
  %2591 = vmatpush.bf16.msra.mxu0 %v1878
  %2592 = vmatpush.bf16.msra.mxu0 %v1870
  %2593 = vmatpush.bf16.msra.mxu0 %v1862
  %2594 = vmatpush.bf16.msra.mxu0 %v1854
  %2595 = vmatpush.bf16.msra.mxu0 %v1846
  %2596 = vmatmul.bf16.gmra.mxu0 %v668
  %v2597 = vpop.f32.mrf.mxu0
  %v2598 = vadd.f32 %v2584, %v2597
  %v2599 = vpop.f32.mrf.mxu0
  %v2600 = vadd.f32 %v2586, %v2599
  %2601 = vdwg.mxu0
  %2602 = vmatpush.bf16.msra.mxu0 %v1966
  %2603 = vmatpush.bf16.msra.mxu0 %v1958
  %2604 = vmatpush.bf16.msra.mxu0 %v1950
  %2605 = vmatpush.bf16.msra.mxu0 %v1942
  %2606 = vmatpush.bf16.msra.mxu0 %v1934
  %2607 = vmatpush.bf16.msra.mxu0 %v1926
  %2608 = vmatpush.bf16.msra.mxu0 %v1918
  %2609 = vmatpush.bf16.msra.mxu0 %v1910
  %2610 = vmatmul.bf16.gmra.mxu0 %v669
  %v2611 = vpop.f32.mrf.mxu0
  %v2612 = vadd.f32 %v2598, %v2611
  %v2613 = vpop.f32.mrf.mxu0
  %v2614 = vadd.f32 %v2600, %v2613
  %2615 = vdwg.mxu0
  %2616 = vmatpush.bf16.msra.mxu0 %v1775
  %2617 = vmatpush.bf16.msra.mxu0 %v1767
  %2618 = vmatpush.bf16.msra.mxu0 %v1759
  %2619 = vmatpush.bf16.msra.mxu0 %v1751
  %2620 = vmatpush.bf16.msra.mxu0 %v1743
  %2621 = vmatpush.bf16.msra.mxu0 %v1735
  %2622 = vmatpush.bf16.msra.mxu0 %v1727
  %2623 = vmatpush.bf16.msra.mxu0 %v1719
  %2624 = vmatmul.bf16.gmra.mxu0 %v666
  %v2625 = vpop.f32.mrf.mxu0
  %v2626 = vadd.f32 %v935, %v2625
  %v2627 = vpop.f32.mrf.mxu0
  %v2628 = vadd.f32 %v935, %v2627
  %2629 = vdwg.mxu0
  %2630 = vmatpush.bf16.msra.mxu0 %v1839
  %2631 = vmatpush.bf16.msra.mxu0 %v1831
  %2632 = vmatpush.bf16.msra.mxu0 %v1823
  %2633 = vmatpush.bf16.msra.mxu0 %v1815
  %2634 = vmatpush.bf16.msra.mxu0 %v1807
  %2635 = vmatpush.bf16.msra.mxu0 %v1799
  %2636 = vmatpush.bf16.msra.mxu0 %v1791
  %2637 = vmatpush.bf16.msra.mxu0 %v1783
  %2638 = vmatmul.bf16.gmra.mxu0 %v667
  %v2639 = vpop.f32.mrf.mxu0
  %v2640 = vadd.f32 %v2626, %v2639
  %v2641 = vpop.f32.mrf.mxu0
  %v2642 = vadd.f32 %v2628, %v2641
  %2643 = vdwg.mxu0
  %2644 = vmatpush.bf16.msra.mxu0 %v1903
  %2645 = vmatpush.bf16.msra.mxu0 %v1895
  %2646 = vmatpush.bf16.msra.mxu0 %v1887
  %2647 = vmatpush.bf16.msra.mxu0 %v1879
  %2648 = vmatpush.bf16.msra.mxu0 %v1871
  %2649 = vmatpush.bf16.msra.mxu0 %v1863
  %2650 = vmatpush.bf16.msra.mxu0 %v1855
  %2651 = vmatpush.bf16.msra.mxu0 %v1847
  %2652 = vmatmul.bf16.gmra.mxu0 %v668
  %v2653 = vpop.f32.mrf.mxu0
  %v2654 = vadd.f32 %v2640, %v2653
  %v2655 = vpop.f32.mrf.mxu0
  %v2656 = vadd.f32 %v2642, %v2655
  %2657 = vdwg.mxu0
  %2658 = vmatpush.bf16.msra.mxu0 %v1967
  %2659 = vmatpush.bf16.msra.mxu0 %v1959
  %2660 = vmatpush.bf16.msra.mxu0 %v1951
  %2661 = vmatpush.bf16.msra.mxu0 %v1943
  %2662 = vmatpush.bf16.msra.mxu0 %v1935
  %2663 = vmatpush.bf16.msra.mxu0 %v1927
  %2664 = vmatpush.bf16.msra.mxu0 %v1919
  %2665 = vmatpush.bf16.msra.mxu0 %v1911
  %2666 = vmatmul.bf16.gmra.mxu0 %v669
  %v2667 = vpop.f32.mrf.mxu0
  %v2668 = vadd.f32 %v2654, %v2667
  %v2669 = vpop.f32.mrf.mxu0
  %v2670 = vadd.f32 %v2656, %v2669
  %2671 = vdwg.mxu0
  %vm2672 = vcmp.gt.f32.partialorder %v2276, 0.0
  %vm2673 = vcmp.gt.f32.partialorder %v2332, 0.0
  %vm2674 = vcmp.gt.f32.partialorder %v2388, 0.0
  %vm2675 = vcmp.gt.f32.partialorder %v2444, 0.0
  %vm2676 = vcmp.gt.f32.partialorder %v2500, 0.0
  %vm2677 = vcmp.gt.f32.partialorder %v2556, 0.0
  %vm2678 = vcmp.gt.f32.partialorder %v2612, 0.0
  %vm2679 = vcmp.gt.f32.partialorder %v2668, 0.0
  %vm2680 = vcmp.gt.f32.partialorder %v2278, 0.0
  %vm2681 = vcmp.gt.f32.partialorder %v2334, 0.0
  %vm2682 = vcmp.gt.f32.partialorder %v2390, 0.0
  %vm2683 = vcmp.gt.f32.partialorder %v2446, 0.0
  %vm2684 = vcmp.gt.f32.partialorder %v2502, 0.0
  %vm2685 = vcmp.gt.f32.partialorder %v2558, 0.0
  %vm2686 = vcmp.gt.f32.partialorder %v2614, 0.0
  %vm2687 = vcmp.gt.f32.partialorder %v2670, 0.0
  %v2688 = vmul.f32 %v2276, 0.2
  %v2689 = vmul.f32 %v2332, 0.2
  %v2690 = vmul.f32 %v2388, 0.2
  %v2691 = vmul.f32 %v2444, 0.2
  %v2692 = vmul.f32 %v2500, 0.2
  %v2693 = vmul.f32 %v2556, 0.2
  %v2694 = vmul.f32 %v2612, 0.2
  %v2695 = vmul.f32 %v2668, 0.2
  %v2696 = vmul.f32 %v2278, 0.2
  %v2697 = vmul.f32 %v2334, 0.2
  %v2698 = vmul.f32 %v2390, 0.2
  %v2699 = vmul.f32 %v2446, 0.2
  %v2700 = vmul.f32 %v2502, 0.2
  %v2701 = vmul.f32 %v2558, 0.2
  %v2702 = vmul.f32 %v2614, 0.2
  %v2703 = vmul.f32 %v2670, 0.2
  %v2704 = vsel %vm2672, %v2276, %v2688
  %v2705 = vsel %vm2673, %v2332, %v2689
  %v2706 = vsel %vm2674, %v2388, %v2690
  %v2707 = vsel %vm2675, %v2444, %v2691
  %v2708 = vsel %vm2676, %v2500, %v2692
  %v2709 = vsel %vm2677, %v2556, %v2693
  %v2710 = vsel %vm2678, %v2612, %v2694
  %v2711 = vsel %vm2679, %v2668, %v2695
  %v2712 = vsel %vm2680, %v2278, %v2696
  %v2713 = vsel %vm2681, %v2334, %v2697
  %v2714 = vsel %vm2682, %v2390, %v2698
  %v2715 = vsel %vm2683, %v2446, %v2699
  %v2716 = vsel %vm2684, %v2502, %v2700
  %v2717 = vsel %vm2685, %v2558, %v2701
  %v2718 = vsel %vm2686, %v2614, %v2702
  %v2719 = vsel %vm2687, %v2670, %v2703
  %v2720 = vpack.c.bf16 %v2712, %v2704
  %v2721 = vpack.c.bf16 %v2713, %v2705
  %v2722 = vpack.c.bf16 %v2714, %v2706
  %v2723 = vpack.c.bf16 %v2715, %v2707
  %v2724 = vpack.c.bf16 %v2716, %v2708
  %v2725 = vpack.c.bf16 %v2717, %v2709
  %v2726 = vpack.c.bf16 %v2718, %v2710
  %v2727 = vpack.c.bf16 %v2719, %v2711
  %v2728 = vld [vmem:[%s7] sm:$0xff]
  %v2729 = vld [vmem:[%s7 + $0x8] sm:$0xff]
  %v2730 = vld [vmem:[%s7 + $0x10] sm:$0xff]
  %v2731 = vld [vmem:[%s7 + $0x18] sm:$0xf]
  %v2732 = vld [vmem:[%s7 + $0x1c] sm:$0xff]
  %v2733 = vld [vmem:[%s7 + $0x24] sm:$0xff]
  %v2734 = vld [vmem:[%s7 + $0x2c] sm:$0xff]
  %v2735 = vld [vmem:[%s7 + $0x34] sm:$0xf]
  %v2736 = vld [vmem:[%s7 + $0x38] sm:$0xff]
  %v2737 = vld [vmem:[%s7 + $0x40] sm:$0xff]
  %v2738 = vld [vmem:[%s7 + $0x48] sm:$0xff]
  %v2739 = vld [vmem:[%s7 + $0x50] sm:$0xf]
  %v2740 = vld [vmem:[%s7 + $0x54] sm:$0xff]
  %v2741 = vld [vmem:[%s7 + $0x5c] sm:$0xff]
  %v2742 = vld [vmem:[%s7 + $0x64] sm:$0xff]
  %v2743 = vld [vmem:[%s7 + $0x6c] sm:$0xf]
  %v2744 = vld [vmem:[%s7 + $0x70] sm:$0xff]
  %v2745 = vld [vmem:[%s7 + $0x78] sm:$0xff]
  %v2746 = vld [vmem:[%s7 + $0x80] sm:$0xff]
  %v2747 = vld [vmem:[%s7 + $0x88] sm:$0xf]
  %v2748 = vld [vmem:[%s7 + $0x8c] sm:$0xff]
  %v2749 = vld [vmem:[%s7 + $0x94] sm:$0xff]
  %v2750 = vld [vmem:[%s7 + $0x9c] sm:$0xff]
  %v2751 = vld [vmem:[%s7 + $0xa4] sm:$0xf]
  %v2752 = vld [vmem:[%s7 + $0xa8] sm:$0xff]
  %v2753 = vld [vmem:[%s7 + $0xb0] sm:$0xff]
  %v2754 = vld [vmem:[%s7 + $0xb8] sm:$0xff]
  %v2755 = vld [vmem:[%s7 + $0xc0] sm:$0xf]
  %v2756 = vld [vmem:[%s7 + $0xc4] sm:$0xff]
  %v2757 = vld [vmem:[%s7 + $0xcc] sm:$0xff]
  %v2758 = vld [vmem:[%s7 + $0xd4] sm:$0xff]
  %v2759 = vld [vmem:[%s7 + $0xdc] sm:$0xf]
  %v2760 = vld [vmem:[%s7 + $0xe0] sm:$0xff]
  %v2761 = vld [vmem:[%s7 + $0xe8] sm:$0xff]
  %v2762 = vld [vmem:[%s7 + $0xf0] sm:$0xff]
  %v2763 = vld [vmem:[%s7 + $0xf8] sm:$0xf]
  %v2764 = vld [vmem:[%s7 + $0xfc] sm:$0xff]
  %v2765 = vld [vmem:[%s7 + $0x104] sm:$0xff]
  %v2766 = vld [vmem:[%s7 + $0x10c] sm:$0xff]
  %v2767 = vld [vmem:[%s7 + $0x114] sm:$0xf]
  %v2768 = vld [vmem:[%s7 + $0x118] sm:$0xff]
  %v2769 = vld [vmem:[%s7 + $0x120] sm:$0xff]
  %v2770 = vld [vmem:[%s7 + $0x128] sm:$0xff]
  %v2771 = vld [vmem:[%s7 + $0x130] sm:$0xf]
  %v2772 = vld [vmem:[%s7 + $0x134] sm:$0xff]
  %v2773 = vld [vmem:[%s7 + $0x13c] sm:$0xff]
  %v2774 = vld [vmem:[%s7 + $0x144] sm:$0xff]
  %v2775 = vld [vmem:[%s7 + $0x14c] sm:$0xf]
  %v2776 = vld [vmem:[%s7 + $0x150] sm:$0xff]
  %v2777 = vld [vmem:[%s7 + $0x158] sm:$0xff]
  %v2778 = vld [vmem:[%s7 + $0x160] sm:$0xff]
  %v2779 = vld [vmem:[%s7 + $0x168] sm:$0xf]
  %v2780 = vld [vmem:[%s7 + $0x16c] sm:$0xff]
  %v2781 = vld [vmem:[%s7 + $0x174] sm:$0xff]
  %v2782 = vld [vmem:[%s7 + $0x17c] sm:$0xff]
  %v2783 = vld [vmem:[%s7 + $0x184] sm:$0xf]
  %v2784 = vld [vmem:[%s7 + $0x188] sm:$0xff]
  %v2785 = vld [vmem:[%s7 + $0x190] sm:$0xff]
  %v2786 = vld [vmem:[%s7 + $0x198] sm:$0xff]
  %v2787 = vld [vmem:[%s7 + $0x1a0] sm:$0xf]
  %v2788 = vld [vmem:[%s7 + $0x1a4] sm:$0xff]
  %v2789 = vld [vmem:[%s7 + $0x1ac] sm:$0xff]
  %v2790 = vld [vmem:[%s7 + $0x1b4] sm:$0xff]
  %v2791 = vld [vmem:[%s7 + $0x1bc] sm:$0xf]
  %v2792 = vld [vmem:[%s7 + $0x1c0] sm:$0xff]
  %v2793 = vld [vmem:[%s7 + $0x1c8] sm:$0xff]
  %v2794 = vld [vmem:[%s7 + $0x1d0] sm:$0xff]
  %v2795 = vld [vmem:[%s7 + $0x1d8] sm:$0xf]
  %v2796 = vld [vmem:[%s7 + $0x1dc] sm:$0xff]
  %v2797 = vld [vmem:[%s7 + $0x1e4] sm:$0xff]
  %v2798 = vld [vmem:[%s7 + $0x1ec] sm:$0xff]
  %v2799 = vld [vmem:[%s7 + $0x1f4] sm:$0xf]
  %v2800 = vld [vmem:[%s7 + $0x1f8] sm:$0xff]
  %v2801 = vld [vmem:[%s7 + $0x200] sm:$0xff]
  %v2802 = vld [vmem:[%s7 + $0x208] sm:$0xff]
  %v2803 = vld [vmem:[%s7 + $0x210] sm:$0xf]
  %v2804 = vld [vmem:[%s7 + $0x214] sm:$0xff]
  %v2805 = vld [vmem:[%s7 + $0x21c] sm:$0xff]
  %v2806 = vld [vmem:[%s7 + $0x224] sm:$0xff]
  %v2807 = vld [vmem:[%s7 + $0x22c] sm:$0xf]
  %v2808 = vld [vmem:[%s7 + $0x230] sm:$0xff]
  %v2809 = vld [vmem:[%s7 + $0x238] sm:$0xff]
  %v2810 = vld [vmem:[%s7 + $0x240] sm:$0xff]
  %v2811 = vld [vmem:[%s7 + $0x248] sm:$0xf]
  %v2812 = vld [vmem:[%s7 + $0x24c] sm:$0xff]
  %v2813 = vld [vmem:[%s7 + $0x254] sm:$0xff]
  %v2814 = vld [vmem:[%s7 + $0x25c] sm:$0xff]
  %v2815 = vld [vmem:[%s7 + $0x264] sm:$0xf]
  %v2816 = vld [vmem:[%s7 + $0x268] sm:$0xff]
  %v2817 = vld [vmem:[%s7 + $0x270] sm:$0xff]
  %v2818 = vld [vmem:[%s7 + $0x278] sm:$0xff]
  %v2819 = vld [vmem:[%s7 + $0x280] sm:$0xf]
  %v2820 = vld [vmem:[%s7 + $0x284] sm:$0xff]
  %v2821 = vld [vmem:[%s7 + $0x28c] sm:$0xff]
  %v2822 = vld [vmem:[%s7 + $0x294] sm:$0xff]
  %v2823 = vld [vmem:[%s7 + $0x29c] sm:$0xf]
  %v2824 = vld [vmem:[%s7 + $0x2a0] sm:$0xff]
  %v2825 = vld [vmem:[%s7 + $0x2a8] sm:$0xff]
  %v2826 = vld [vmem:[%s7 + $0x2b0] sm:$0xff]
  %v2827 = vld [vmem:[%s7 + $0x2b8] sm:$0xf]
  %v2828 = vld [vmem:[%s7 + $0x2bc] sm:$0xff]
  %v2829 = vld [vmem:[%s7 + $0x2c4] sm:$0xff]
  %v2830 = vld [vmem:[%s7 + $0x2cc] sm:$0xff]
  %v2831 = vld [vmem:[%s7 + $0x2d4] sm:$0xf]
  %v2832 = vld [vmem:[%s7 + $0x2d8] sm:$0xff]
  %v2833 = vld [vmem:[%s7 + $0x2e0] sm:$0xff]
  %v2834 = vld [vmem:[%s7 + $0x2e8] sm:$0xff]
  %v2835 = vld [vmem:[%s7 + $0x2f0] sm:$0xf]
  %v2836 = vld [vmem:[%s7 + $0x2f4] sm:$0xff]
  %v2837 = vld [vmem:[%s7 + $0x2fc] sm:$0xff]
  %v2838 = vld [vmem:[%s7 + $0x304] sm:$0xff]
  %v2839 = vld [vmem:[%s7 + $0x30c] sm:$0xf]
  %v2840 = vld [vmem:[%s7 + $0x310] sm:$0xff]
  %v2841 = vld [vmem:[%s7 + $0x318] sm:$0xff]
  %v2842 = vld [vmem:[%s7 + $0x320] sm:$0xff]
  %v2843 = vld [vmem:[%s7 + $0x328] sm:$0xf]
  %v2844 = vld [vmem:[%s7 + $0x32c] sm:$0xff]
  %v2845 = vld [vmem:[%s7 + $0x334] sm:$0xff]
  %v2846 = vld [vmem:[%s7 + $0x33c] sm:$0xff]
  %v2847 = vld [vmem:[%s7 + $0x344] sm:$0xf]
  %v2848 = vld [vmem:[%s7 + $0x348] sm:$0xff]
  %v2849 = vld [vmem:[%s7 + $0x350] sm:$0xff]
  %v2850 = vld [vmem:[%s7 + $0x358] sm:$0xff]
  %v2851 = vld [vmem:[%s7 + $0x360] sm:$0xf]
  %v2852 = vld [vmem:[%s7 + $0x364] sm:$0xff]
  %v2853 = vld [vmem:[%s7 + $0x36c] sm:$0xff]
  %v2854 = vld [vmem:[%s7 + $0x374] sm:$0xff]
  %v2855 = vld [vmem:[%s7 + $0x37c] sm:$0xf]
  %v2856 = vld [vmem:[%s7 + $0x380] sm:$0xff]
  %v2857 = vld [vmem:[%s7 + $0x388] sm:$0xff]
  %v2858 = vld [vmem:[%s7 + $0x390] sm:$0xff]
  %v2859 = vld [vmem:[%s7 + $0x398] sm:$0xf]
  %v2860 = vld [vmem:[%s7 + $0x39c] sm:$0xff]
  %v2861 = vld [vmem:[%s7 + $0x3a4] sm:$0xff]
  %v2862 = vld [vmem:[%s7 + $0x3ac] sm:$0xff]
  %v2863 = vld [vmem:[%s7 + $0x3b4] sm:$0xf]
  %v2864 = vld [vmem:[%s7 + $0x3b8] sm:$0xff]
  %v2865 = vld [vmem:[%s7 + $0x3c0] sm:$0xff]
  %v2866 = vld [vmem:[%s7 + $0x3c8] sm:$0xff]
  %v2867 = vld [vmem:[%s7 + $0x3d0] sm:$0xf]
  %v2868 = vld [vmem:[%s7 + $0x3d4] sm:$0xff]
  %v2869 = vld [vmem:[%s7 + $0x3dc] sm:$0xff]
  %v2870 = vld [vmem:[%s7 + $0x3e4] sm:$0xff]
  %v2871 = vld [vmem:[%s7 + $0x3ec] sm:$0xf]
  %v2872 = vld [vmem:[%s7 + $0x3f0] sm:$0xff]
  %v2873 = vld [vmem:[%s7 + $0x3f8] sm:$0xff]
  %v2874 = vld [vmem:[%s7 + $0x400] sm:$0xff]
  %v2875 = vld [vmem:[%s7 + $0x408] sm:$0xf]
  %v2876 = vld [vmem:[%s7 + $0x40c] sm:$0xff]
  %v2877 = vld [vmem:[%s7 + $0x414] sm:$0xff]
  %v2878 = vld [vmem:[%s7 + $0x41c] sm:$0xff]
  %v2879 = vld [vmem:[%s7 + $0x424] sm:$0xf]
  %v2880 = vld [vmem:[%s7 + $0x428] sm:$0xff]
  %v2881 = vld [vmem:[%s7 + $0x430] sm:$0xff]
  %v2882 = vld [vmem:[%s7 + $0x438] sm:$0xff]
  %v2883 = vld [vmem:[%s7 + $0x440] sm:$0xf]
  %v2884 = vld [vmem:[%s7 + $0x444] sm:$0xff]
  %v2885 = vld [vmem:[%s7 + $0x44c] sm:$0xff]
  %v2886 = vld [vmem:[%s7 + $0x454] sm:$0xff]
  %v2887 = vld [vmem:[%s7 + $0x45c] sm:$0xf]
  %v2888 = vld [vmem:[%s7 + $0x460] sm:$0xff]
  %v2889 = vld [vmem:[%s7 + $0x468] sm:$0xff]
  %v2890 = vld [vmem:[%s7 + $0x470] sm:$0xff]
  %v2891 = vld [vmem:[%s7 + $0x478] sm:$0xf]
  %v2892 = vld [vmem:[%s7 + $0x47c] sm:$0xff]
  %v2893 = vld [vmem:[%s7 + $0x484] sm:$0xff]
  %v2894 = vld [vmem:[%s7 + $0x48c] sm:$0xff]
  %v2895 = vld [vmem:[%s7 + $0x494] sm:$0xf]
  %v2896 = vld [vmem:[%s7 + $0x498] sm:$0xff]
  %v2897 = vld [vmem:[%s7 + $0x4a0] sm:$0xff]
  %v2898 = vld [vmem:[%s7 + $0x4a8] sm:$0xff]
  %v2899 = vld [vmem:[%s7 + $0x4b0] sm:$0xf]
  %v2900 = vld [vmem:[%s7 + $0x4b4] sm:$0xff]
  %v2901 = vld [vmem:[%s7 + $0x4bc] sm:$0xff]
  %v2902 = vld [vmem:[%s7 + $0x4c4] sm:$0xff]
  %v2903 = vld [vmem:[%s7 + $0x4cc] sm:$0xf]
  %v2904 = vld [vmem:[%s7 + $0x4d0] sm:$0xff]
  %v2905 = vld [vmem:[%s7 + $0x4d8] sm:$0xff]
  %v2906 = vld [vmem:[%s7 + $0x4e0] sm:$0xff]
  %v2907 = vld [vmem:[%s7 + $0x4e8] sm:$0xf]
  %v2908 = vld [vmem:[%s7 + $0x4ec] sm:$0xff]
  %v2909 = vld [vmem:[%s7 + $0x4f4] sm:$0xff]
  %v2910 = vld [vmem:[%s7 + $0x4fc] sm:$0xff]
  %v2911 = vld [vmem:[%s7 + $0x504] sm:$0xf]
  %v2912 = vld [vmem:[%s7 + $0x508] sm:$0xff]
  %v2913 = vld [vmem:[%s7 + $0x510] sm:$0xff]
  %v2914 = vld [vmem:[%s7 + $0x518] sm:$0xff]
  %v2915 = vld [vmem:[%s7 + $0x520] sm:$0xf]
  %v2916 = vld [vmem:[%s7 + $0x524] sm:$0xff]
  %v2917 = vld [vmem:[%s7 + $0x52c] sm:$0xff]
  %v2918 = vld [vmem:[%s7 + $0x534] sm:$0xff]
  %v2919 = vld [vmem:[%s7 + $0x53c] sm:$0xf]
  %v2920 = vld [vmem:[%s7 + $0x540] sm:$0xff]
  %v2921 = vld [vmem:[%s7 + $0x548] sm:$0xff]
  %v2922 = vld [vmem:[%s7 + $0x550] sm:$0xff]
  %v2923 = vld [vmem:[%s7 + $0x558] sm:$0xf]
  %v2924 = vld [vmem:[%s7 + $0x55c] sm:$0xff]
  %v2925 = vld [vmem:[%s7 + $0x564] sm:$0xff]
  %v2926 = vld [vmem:[%s7 + $0x56c] sm:$0xff]
  %v2927 = vld [vmem:[%s7 + $0x574] sm:$0xf]
  %v2928 = vld [vmem:[%s7 + $0x578] sm:$0xff]
  %v2929 = vld [vmem:[%s7 + $0x580] sm:$0xff]
  %v2930 = vld [vmem:[%s7 + $0x588] sm:$0xff]
  %v2931 = vld [vmem:[%s7 + $0x590] sm:$0xf]
  %v2932 = vld [vmem:[%s7 + $0x594] sm:$0xff]
  %v2933 = vld [vmem:[%s7 + $0x59c] sm:$0xff]
  %v2934 = vld [vmem:[%s7 + $0x5a4] sm:$0xff]
  %v2935 = vld [vmem:[%s7 + $0x5ac] sm:$0xf]
  %v2936 = vld [vmem:[%s7 + $0x5b0] sm:$0xff]
  %v2937 = vld [vmem:[%s7 + $0x5b8] sm:$0xff]
  %v2938 = vld [vmem:[%s7 + $0x5c0] sm:$0xff]
  %v2939 = vld [vmem:[%s7 + $0x5c8] sm:$0xf]
  %v2940 = vld [vmem:[%s7 + $0x5cc] sm:$0xff]
  %v2941 = vld [vmem:[%s7 + $0x5d4] sm:$0xff]
  %v2942 = vld [vmem:[%s7 + $0x5dc] sm:$0xff]
  %v2943 = vld [vmem:[%s7 + $0x5e4] sm:$0xf]
  %v2944 = vld [vmem:[%s7 + $0x5e8] sm:$0xff]
  %v2945 = vld [vmem:[%s7 + $0x5f0] sm:$0xff]
  %v2946 = vld [vmem:[%s7 + $0x5f8] sm:$0xff]
  %v2947 = vld [vmem:[%s7 + $0x600] sm:$0xf]
  %v2948 = vld [vmem:[%s7 + $0x604] sm:$0xff]
  %v2949 = vld [vmem:[%s7 + $0x60c] sm:$0xff]
  %v2950 = vld [vmem:[%s7 + $0x614] sm:$0xff]
  %v2951 = vld [vmem:[%s7 + $0x61c] sm:$0xf]
  %v2952 = vld [vmem:[%s7 + $0x620] sm:$0xff]
  %v2953 = vld [vmem:[%s7 + $0x628] sm:$0xff]
  %v2954 = vld [vmem:[%s7 + $0x630] sm:$0xff]
  %v2955 = vld [vmem:[%s7 + $0x638] sm:$0xf]
  %v2956 = vld [vmem:[%s7 + $0x63c] sm:$0xff]
  %v2957 = vld [vmem:[%s7 + $0x644] sm:$0xff]
  %v2958 = vld [vmem:[%s7 + $0x64c] sm:$0xff]
  %v2959 = vld [vmem:[%s7 + $0x654] sm:$0xf]
  %v2960 = vld [vmem:[%s7 + $0x658] sm:$0xff]
  %v2961 = vld [vmem:[%s7 + $0x660] sm:$0xff]
  %v2962 = vld [vmem:[%s7 + $0x668] sm:$0xff]
  %v2963 = vld [vmem:[%s7 + $0x670] sm:$0xf]
  %v2964 = vld [vmem:[%s7 + $0x674] sm:$0xff]
  %v2965 = vld [vmem:[%s7 + $0x67c] sm:$0xff]
  %v2966 = vld [vmem:[%s7 + $0x684] sm:$0xff]
  %v2967 = vld [vmem:[%s7 + $0x68c] sm:$0xf]
  %v2968 = vld [vmem:[%s7 + $0x690] sm:$0xff]
  %v2969 = vld [vmem:[%s7 + $0x698] sm:$0xff]
  %v2970 = vld [vmem:[%s7 + $0x6a0] sm:$0xff]
  %v2971 = vld [vmem:[%s7 + $0x6a8] sm:$0xf]
  %v2972 = vld [vmem:[%s7 + $0x6ac] sm:$0xff]
  %v2973 = vld [vmem:[%s7 + $0x6b4] sm:$0xff]
  %v2974 = vld [vmem:[%s7 + $0x6bc] sm:$0xff]
  %v2975 = vld [vmem:[%s7 + $0x6c4] sm:$0xf]
  %v2976 = vld [vmem:[%s7 + $0x6c8] sm:$0xff]
  %v2977 = vld [vmem:[%s7 + $0x6d0] sm:$0xff]
  %v2978 = vld [vmem:[%s7 + $0x6d8] sm:$0xff]
  %v2979 = vld [vmem:[%s7 + $0x6e0] sm:$0xf]
  %v2980 = vld [vmem:[%s7 + $0x6e4] sm:$0xff]
  %v2981 = vld [vmem:[%s7 + $0x6ec] sm:$0xff]
  %v2982 = vld [vmem:[%s7 + $0x6f4] sm:$0xff]
  %v2983 = vld [vmem:[%s7 + $0x6fc] sm:$0xf]
  %v2984 = vld [vmem:[%s7 + $0x700] sm:$0xff]
  %v2985 = vld [vmem:[%s7 + $0x708] sm:$0xff]
  %v2986 = vld [vmem:[%s7 + $0x710] sm:$0xff]
  %v2987 = vld [vmem:[%s7 + $0x718] sm:$0xf]
  %v2988 = vld [vmem:[%s7 + $0x71c] sm:$0xff]
  %v2989 = vld [vmem:[%s7 + $0x724] sm:$0xff]
  %v2990 = vld [vmem:[%s7 + $0x72c] sm:$0xff]
  %v2991 = vld [vmem:[%s7 + $0x734] sm:$0xf]
  %v2992 = vld [vmem:[%s7 + $0x738] sm:$0xff]
  %v2993 = vld [vmem:[%s7 + $0x740] sm:$0xff]
  %v2994 = vld [vmem:[%s7 + $0x748] sm:$0xff]
  %v2995 = vld [vmem:[%s7 + $0x750] sm:$0xf]
  %v2996 = vld [vmem:[%s7 + $0x754] sm:$0xff]
  %v2997 = vld [vmem:[%s7 + $0x75c] sm:$0xff]
  %v2998 = vld [vmem:[%s7 + $0x764] sm:$0xff]
  %v2999 = vld [vmem:[%s7 + $0x76c] sm:$0xf]
  %v3000 = vld [vmem:[%s7 + $0x770] sm:$0xff]
  %v3001 = vld [vmem:[%s7 + $0x778] sm:$0xff]
  %v3002 = vld [vmem:[%s7 + $0x780] sm:$0xff]
  %v3003 = vld [vmem:[%s7 + $0x788] sm:$0xf]
  %v3004 = vld [vmem:[%s7 + $0x78c] sm:$0xff]
  %v3005 = vld [vmem:[%s7 + $0x794] sm:$0xff]
  %v3006 = vld [vmem:[%s7 + $0x79c] sm:$0xff]
  %v3007 = vld [vmem:[%s7 + $0x7a4] sm:$0xf]
  %v3008 = vld [vmem:[%s7 + $0x7a8] sm:$0xff]
  %v3009 = vld [vmem:[%s7 + $0x7b0] sm:$0xff]
  %v3010 = vld [vmem:[%s7 + $0x7b8] sm:$0xff]
  %v3011 = vld [vmem:[%s7 + $0x7c0] sm:$0xf]
  %v3012 = vld [vmem:[%s7 + $0x7c4] sm:$0xff]
  %v3013 = vld [vmem:[%s7 + $0x7cc] sm:$0xff]
  %v3014 = vld [vmem:[%s7 + $0x7d4] sm:$0xff]
  %v3015 = vld [vmem:[%s7 + $0x7dc] sm:$0xf]
  %v3016 = vld [vmem:[%s7 + $0x7e0] sm:$0xff]
  %v3017 = vld [vmem:[%s7 + $0x7e8] sm:$0xff]
  %v3018 = vld [vmem:[%s7 + $0x7f0] sm:$0xff]
  %v3019 = vld [vmem:[%s7 + $0x7f8] sm:$0xf]
  %v3020 = vld [vmem:[%s7 + $0x7fc] sm:$0xff]
  %v3021 = vld [vmem:[%s7 + $0x804] sm:$0xff]
  %v3022 = vld [vmem:[%s7 + $0x80c] sm:$0xff]
  %v3023 = vld [vmem:[%s7 + $0x814] sm:$0xf]
  %v3024 = vld [vmem:[%s7 + $0x818] sm:$0xff]
  %v3025 = vld [vmem:[%s7 + $0x820] sm:$0xff]
  %v3026 = vld [vmem:[%s7 + $0x828] sm:$0xff]
  %v3027 = vld [vmem:[%s7 + $0x830] sm:$0xf]
  %v3028 = vld [vmem:[%s7 + $0x834] sm:$0xff]
  %v3029 = vld [vmem:[%s7 + $0x83c] sm:$0xff]
  %v3030 = vld [vmem:[%s7 + $0x844] sm:$0xff]
  %v3031 = vld [vmem:[%s7 + $0x84c] sm:$0xf]
  %v3032 = vld [vmem:[%s7 + $0x850] sm:$0xff]
  %v3033 = vld [vmem:[%s7 + $0x858] sm:$0xff]
  %v3034 = vld [vmem:[%s7 + $0x860] sm:$0xff]
  %v3035 = vld [vmem:[%s7 + $0x868] sm:$0xf]
  %v3036 = vld [vmem:[%s7 + $0x86c] sm:$0xff]
  %v3037 = vld [vmem:[%s7 + $0x874] sm:$0xff]
  %v3038 = vld [vmem:[%s7 + $0x87c] sm:$0xff]
  %v3039 = vld [vmem:[%s7 + $0x884] sm:$0xf]
  %v3040 = vld [vmem:[%s7 + $0x888] sm:$0xff]
  %v3041 = vld [vmem:[%s7 + $0x890] sm:$0xff]
  %v3042 = vld [vmem:[%s7 + $0x898] sm:$0xff]
  %v3043 = vld [vmem:[%s7 + $0x8a0] sm:$0xf]
  %v3044 = vld [vmem:[%s7 + $0x8a4] sm:$0xff]
  %v3045 = vld [vmem:[%s7 + $0x8ac] sm:$0xff]
  %v3046 = vld [vmem:[%s7 + $0x8b4] sm:$0xff]
  %v3047 = vld [vmem:[%s7 + $0x8bc] sm:$0xf]
  %v3048 = vld [vmem:[%s7 + $0x8c0] sm:$0xff]
  %v3049 = vld [vmem:[%s7 + $0x8c8] sm:$0xff]
  %v3050 = vld [vmem:[%s7 + $0x8d0] sm:$0xff]
  %v3051 = vld [vmem:[%s7 + $0x8d8] sm:$0xf]
  %v3052 = vld [vmem:[%s7 + $0x8dc] sm:$0xff]
  %v3053 = vld [vmem:[%s7 + $0x8e4] sm:$0xff]
  %v3054 = vld [vmem:[%s7 + $0x8ec] sm:$0xff]
  %v3055 = vld [vmem:[%s7 + $0x8f4] sm:$0xf]
  %v3056 = vld [vmem:[%s7 + $0x8f8] sm:$0xff]
  %v3057 = vld [vmem:[%s7 + $0x900] sm:$0xff]
  %v3058 = vld [vmem:[%s7 + $0x908] sm:$0xff]
  %v3059 = vld [vmem:[%s7 + $0x910] sm:$0xf]
  %v3060 = vld [vmem:[%s7 + $0x914] sm:$0xff]
  %v3061 = vld [vmem:[%s7 + $0x91c] sm:$0xff]
  %v3062 = vld [vmem:[%s7 + $0x924] sm:$0xff]
  %v3063 = vld [vmem:[%s7 + $0x92c] sm:$0xf]
  %v3064 = vld [vmem:[%s7 + $0x930] sm:$0xff]
  %v3065 = vld [vmem:[%s7 + $0x938] sm:$0xff]
  %v3066 = vld [vmem:[%s7 + $0x940] sm:$0xff]
  %v3067 = vld [vmem:[%s7 + $0x948] sm:$0xf]
  %v3068 = vld [vmem:[%s7 + $0x94c] sm:$0xff]
  %v3069 = vld [vmem:[%s7 + $0x954] sm:$0xff]
  %v3070 = vld [vmem:[%s7 + $0x95c] sm:$0xff]
  %v3071 = vld [vmem:[%s7 + $0x964] sm:$0xf]
  %v3072 = vld [vmem:[%s7 + $0x968] sm:$0xff]
  %v3073 = vld [vmem:[%s7 + $0x970] sm:$0xff]
  %v3074 = vld [vmem:[%s7 + $0x978] sm:$0xff]
  %v3075 = vld [vmem:[%s7 + $0x980] sm:$0xf]
  %v3076 = vld [vmem:[%s7 + $0x984] sm:$0xff]
  %v3077 = vld [vmem:[%s7 + $0x98c] sm:$0xff]
  %v3078 = vld [vmem:[%s7 + $0x994] sm:$0xff]
  %v3079 = vld [vmem:[%s7 + $0x99c] sm:$0xf]
  %v3080 = vld [vmem:[%s7 + $0x9a0] sm:$0xff]
  %v3081 = vld [vmem:[%s7 + $0x9a8] sm:$0xff]
  %v3082 = vld [vmem:[%s7 + $0x9b0] sm:$0xff]
  %v3083 = vld [vmem:[%s7 + $0x9b8] sm:$0xf]
  %v3084 = vld [vmem:[%s7 + $0x9bc] sm:$0xff]
  %v3085 = vld [vmem:[%s7 + $0x9c4] sm:$0xff]
  %v3086 = vld [vmem:[%s7 + $0x9cc] sm:$0xff]
  %v3087 = vld [vmem:[%s7 + $0x9d4] sm:$0xf]
  %v3088 = vld [vmem:[%s7 + $0x9d8] sm:$0xff]
  %v3089 = vld [vmem:[%s7 + $0x9e0] sm:$0xff]
  %v3090 = vld [vmem:[%s7 + $0x9e8] sm:$0xff]
  %v3091 = vld [vmem:[%s7 + $0x9f0] sm:$0xf]
  %v3092 = vld [vmem:[%s7 + $0x9f4] sm:$0xff]
  %v3093 = vld [vmem:[%s7 + $0x9fc] sm:$0xff]
  %v3094 = vld [vmem:[%s7 + $0xa04] sm:$0xff]
  %v3095 = vld [vmem:[%s7 + $0xa0c] sm:$0xf]
  %v3096 = vld [vmem:[%s7 + $0xa10] sm:$0xff]
  %v3097 = vld [vmem:[%s7 + $0xa18] sm:$0xff]
  %v3098 = vld [vmem:[%s7 + $0xa20] sm:$0xff]
  %v3099 = vld [vmem:[%s7 + $0xa28] sm:$0xf]
  %v3100 = vld [vmem:[%s7 + $0xa2c] sm:$0xff]
  %v3101 = vld [vmem:[%s7 + $0xa34] sm:$0xff]
  %v3102 = vld [vmem:[%s7 + $0xa3c] sm:$0xff]
  %v3103 = vld [vmem:[%s7 + $0xa44] sm:$0xf]
  %v3104 = vld [vmem:[%s7 + $0xa48] sm:$0xff]
  %v3105 = vld [vmem:[%s7 + $0xa50] sm:$0xff]
  %v3106 = vld [vmem:[%s7 + $0xa58] sm:$0xff]
  %v3107 = vld [vmem:[%s7 + $0xa60] sm:$0xf]
  %v3108 = vld [vmem:[%s7 + $0xa64] sm:$0xff]
  %v3109 = vld [vmem:[%s7 + $0xa6c] sm:$0xff]
  %v3110 = vld [vmem:[%s7 + $0xa74] sm:$0xff]
  %v3111 = vld [vmem:[%s7 + $0xa7c] sm:$0xf]
  %v3112 = vld [vmem:[%s7 + $0xa80] sm:$0xff]
  %v3113 = vld [vmem:[%s7 + $0xa88] sm:$0xff]
  %v3114 = vld [vmem:[%s7 + $0xa90] sm:$0xff]
  %v3115 = vld [vmem:[%s7 + $0xa98] sm:$0xf]
  %v3116 = vld [vmem:[%s7 + $0xa9c] sm:$0xff]
  %v3117 = vld [vmem:[%s7 + $0xaa4] sm:$0xff]
  %v3118 = vld [vmem:[%s7 + $0xaac] sm:$0xff]
  %v3119 = vld [vmem:[%s7 + $0xab4] sm:$0xf]
  %v3120 = vld [vmem:[%s7 + $0xab8] sm:$0xff]
  %v3121 = vld [vmem:[%s7 + $0xac0] sm:$0xff]
  %v3122 = vld [vmem:[%s7 + $0xac8] sm:$0xff]
  %v3123 = vld [vmem:[%s7 + $0xad0] sm:$0xf]
  %v3124 = vld [vmem:[%s7 + $0xad4] sm:$0xff]
  %v3125 = vld [vmem:[%s7 + $0xadc] sm:$0xff]
  %v3126 = vld [vmem:[%s7 + $0xae4] sm:$0xff]
  %v3127 = vld [vmem:[%s7 + $0xaec] sm:$0xf]
  %v3128 = vld [vmem:[%s7 + $0xaf0] sm:$0xff]
  %v3129 = vld [vmem:[%s7 + $0xaf8] sm:$0xff]
  %v3130 = vld [vmem:[%s7 + $0xb00] sm:$0xff]
  %v3131 = vld [vmem:[%s7 + $0xb08] sm:$0xf]
  %v3132 = vld [vmem:[%s7 + $0xb0c] sm:$0xff]
  %v3133 = vld [vmem:[%s7 + $0xb14] sm:$0xff]
  %v3134 = vld [vmem:[%s7 + $0xb1c] sm:$0xff]
  %v3135 = vld [vmem:[%s7 + $0xb24] sm:$0xf]
  %v3136 = vld [vmem:[%s7 + $0xb28] sm:$0xff]
  %v3137 = vld [vmem:[%s7 + $0xb30] sm:$0xff]
  %v3138 = vld [vmem:[%s7 + $0xb38] sm:$0xff]
  %v3139 = vld [vmem:[%s7 + $0xb40] sm:$0xf]
  %v3140 = vld [vmem:[%s7 + $0xb44] sm:$0xff]
  %v3141 = vld [vmem:[%s7 + $0xb4c] sm:$0xff]
  %v3142 = vld [vmem:[%s7 + $0xb54] sm:$0xff]
  %v3143 = vld [vmem:[%s7 + $0xb5c] sm:$0xf]
  %v3144 = vld [vmem:[%s7 + $0xb60] sm:$0xff]
  %v3145 = vld [vmem:[%s7 + $0xb68] sm:$0xff]
  %v3146 = vld [vmem:[%s7 + $0xb70] sm:$0xff]
  %v3147 = vld [vmem:[%s7 + $0xb78] sm:$0xf]
  %v3148 = vld [vmem:[%s7 + $0xb7c] sm:$0xff]
  %v3149 = vld [vmem:[%s7 + $0xb84] sm:$0xff]
  %v3150 = vld [vmem:[%s7 + $0xb8c] sm:$0xff]
  %v3151 = vld [vmem:[%s7 + $0xb94] sm:$0xf]
  %v3152 = vld [vmem:[%s7 + $0xb98] sm:$0xff]
  %v3153 = vld [vmem:[%s7 + $0xba0] sm:$0xff]
  %v3154 = vld [vmem:[%s7 + $0xba8] sm:$0xff]
  %v3155 = vld [vmem:[%s7 + $0xbb0] sm:$0xf]
  %v3156 = vld [vmem:[%s7 + $0xbb4] sm:$0xff]
  %v3157 = vld [vmem:[%s7 + $0xbbc] sm:$0xff]
  %v3158 = vld [vmem:[%s7 + $0xbc4] sm:$0xff]
  %v3159 = vld [vmem:[%s7 + $0xbcc] sm:$0xf]
  %v3160 = vld [vmem:[%s7 + $0xbd0] sm:$0xff]
  %v3161 = vld [vmem:[%s7 + $0xbd8] sm:$0xff]
  %v3162 = vld [vmem:[%s7 + $0xbe0] sm:$0xff]
  %v3163 = vld [vmem:[%s7 + $0xbe8] sm:$0xf]
  %v3164 = vld [vmem:[%s7 + $0xbec] sm:$0xff]
  %v3165 = vld [vmem:[%s7 + $0xbf4] sm:$0xff]
  %v3166 = vld [vmem:[%s7 + $0xbfc] sm:$0xff]
  %v3167 = vld [vmem:[%s7 + $0xc04] sm:$0xf]
  %v3168 = vld [vmem:[%s7 + $0xc08] sm:$0xff]
  %v3169 = vld [vmem:[%s7 + $0xc10] sm:$0xff]
  %v3170 = vld [vmem:[%s7 + $0xc18] sm:$0xff]
  %v3171 = vld [vmem:[%s7 + $0xc20] sm:$0xf]
  %v3172 = vld [vmem:[%s7 + $0xc24] sm:$0xff]
  %v3173 = vld [vmem:[%s7 + $0xc2c] sm:$0xff]
  %v3174 = vld [vmem:[%s7 + $0xc34] sm:$0xff]
  %v3175 = vld [vmem:[%s7 + $0xc3c] sm:$0xf]
  %v3176 = vld [vmem:[%s7 + $0xc40] sm:$0xff]
  %v3177 = vld [vmem:[%s7 + $0xc48] sm:$0xff]
  %v3178 = vld [vmem:[%s7 + $0xc50] sm:$0xff]
  %v3179 = vld [vmem:[%s7 + $0xc58] sm:$0xf]
  %v3180 = vld [vmem:[%s7 + $0xc5c] sm:$0xff]
  %v3181 = vld [vmem:[%s7 + $0xc64] sm:$0xff]
  %v3182 = vld [vmem:[%s7 + $0xc6c] sm:$0xff]
  %v3183 = vld [vmem:[%s7 + $0xc74] sm:$0xf]
  %v3184 = vld [vmem:[%s7 + $0xc78] sm:$0xff]
  %v3185 = vld [vmem:[%s7 + $0xc80] sm:$0xff]
  %v3186 = vld [vmem:[%s7 + $0xc88] sm:$0xff]
  %v3187 = vld [vmem:[%s7 + $0xc90] sm:$0xf]
  %v3188 = vld [vmem:[%s7 + $0xc94] sm:$0xff]
  %v3189 = vld [vmem:[%s7 + $0xc9c] sm:$0xff]
  %v3190 = vld [vmem:[%s7 + $0xca4] sm:$0xff]
  %v3191 = vld [vmem:[%s7 + $0xcac] sm:$0xf]
  %v3192 = vld [vmem:[%s7 + $0xcb0] sm:$0xff]
  %v3193 = vld [vmem:[%s7 + $0xcb8] sm:$0xff]
  %v3194 = vld [vmem:[%s7 + $0xcc0] sm:$0xff]
  %v3195 = vld [vmem:[%s7 + $0xcc8] sm:$0xf]
  %v3196 = vld [vmem:[%s7 + $0xccc] sm:$0xff]
  %v3197 = vld [vmem:[%s7 + $0xcd4] sm:$0xff]
  %v3198 = vld [vmem:[%s7 + $0xcdc] sm:$0xff]
  %v3199 = vld [vmem:[%s7 + $0xce4] sm:$0xf]
  %v3200 = vld [vmem:[%s7 + $0xce8] sm:$0xff]
  %v3201 = vld [vmem:[%s7 + $0xcf0] sm:$0xff]
  %v3202 = vld [vmem:[%s7 + $0xcf8] sm:$0xff]
  %v3203 = vld [vmem:[%s7 + $0xd00] sm:$0xf]
  %v3204 = vld [vmem:[%s7 + $0xd04] sm:$0xff]
  %v3205 = vld [vmem:[%s7 + $0xd0c] sm:$0xff]
  %v3206 = vld [vmem:[%s7 + $0xd14] sm:$0xff]
  %v3207 = vld [vmem:[%s7 + $0xd1c] sm:$0xf]
  %v3208 = vld [vmem:[%s7 + $0xd20] sm:$0xff]
  %v3209 = vld [vmem:[%s7 + $0xd28] sm:$0xff]
  %v3210 = vld [vmem:[%s7 + $0xd30] sm:$0xff]
  %v3211 = vld [vmem:[%s7 + $0xd38] sm:$0xf]
  %v3212 = vld [vmem:[%s7 + $0xd3c] sm:$0xff]
  %v3213 = vld [vmem:[%s7 + $0xd44] sm:$0xff]
  %v3214 = vld [vmem:[%s7 + $0xd4c] sm:$0xff]
  %v3215 = vld [vmem:[%s7 + $0xd54] sm:$0xf]
  %v3216 = vld [vmem:[%s7 + $0xd58] sm:$0xff]
  %v3217 = vld [vmem:[%s7 + $0xd60] sm:$0xff]
  %v3218 = vld [vmem:[%s7 + $0xd68] sm:$0xff]
  %v3219 = vld [vmem:[%s7 + $0xd70] sm:$0xf]
  %v3220 = vld [vmem:[%s7 + $0xd74] sm:$0xff]
  %v3221 = vld [vmem:[%s7 + $0xd7c] sm:$0xff]
  %v3222 = vld [vmem:[%s7 + $0xd84] sm:$0xff]
  %v3223 = vld [vmem:[%s7 + $0xd8c] sm:$0xf]
  %v3224 = vld [vmem:[%s7 + $0xd90] sm:$0xff]
  %v3225 = vld [vmem:[%s7 + $0xd98] sm:$0xff]
  %v3226 = vld [vmem:[%s7 + $0xda0] sm:$0xff]
  %v3227 = vld [vmem:[%s7 + $0xda8] sm:$0xf]
  %v3228 = vld [vmem:[%s7 + $0xdac] sm:$0xff]
  %v3229 = vld [vmem:[%s7 + $0xdb4] sm:$0xff]
  %v3230 = vld [vmem:[%s7 + $0xdbc] sm:$0xff]
  %v3231 = vld [vmem:[%s7 + $0xdc4] sm:$0xf]
  %v3232 = vld [vmem:[%s7 + $0xdc8] sm:$0xff]
  %v3233 = vld [vmem:[%s7 + $0xdd0] sm:$0xff]
  %v3234 = vld [vmem:[%s7 + $0xdd8] sm:$0xff]
  %v3235 = vld [vmem:[%s7 + $0xde0] sm:$0xf]
  %v3236 = vld [vmem:[%s7 + $0xde4] sm:$0xff]
  %v3237 = vld [vmem:[%s7 + $0xdec] sm:$0xff]
  %v3238 = vld [vmem:[%s7 + $0xdf4] sm:$0xff]
  %v3239 = vld [vmem:[%s7 + $0xdfc] sm:$0xf]
  %v3240 = vld [vmem:[%s8] sm:$0x7f]
  %v3242 = vperm.slane %v3240, 0
  %v3243 = vperm.slane %v3240, 1
  %v3244 = vperm.slane %v3240, 2
  %v3245 = vperm.slane %v3240, 3
  %v3246 = vperm.slane %v3240, 4
  %v3247 = vperm.slane %v3240, 5
  %v3248 = vperm.slane %v3240, 6
  %v3768 = vunpack.c.l.b16 %v2728
  %v3769 = vunpack.c.h.b16 %v2728
  %v3770 = vunpack.c.l.b16 %v2729
  %v3771 = vunpack.c.h.b16 %v2729
  %v3772 = vunpack.c.l.b16 %v2730
  %v3773 = vunpack.c.h.b16 %v2730
  %v3774 = vunpack.c.l.b16 %v2731
  %v3775 = vunpack.c.l.b16 %v2732
  %v3776 = vunpack.c.h.b16 %v2732
  %v3777 = vunpack.c.l.b16 %v2733
  %v3778 = vunpack.c.h.b16 %v2733
  %v3779 = vunpack.c.l.b16 %v2734
  %v3780 = vunpack.c.h.b16 %v2734
  %v3781 = vunpack.c.l.b16 %v2735
  %v3782 = vunpack.c.l.b16 %v2736
  %v3783 = vunpack.c.h.b16 %v2736
  %v3784 = vunpack.c.l.b16 %v2737
  %v3785 = vunpack.c.h.b16 %v2737
  %v3786 = vunpack.c.l.b16 %v2738
  %v3787 = vunpack.c.h.b16 %v2738
  %v3788 = vunpack.c.l.b16 %v2739
  %v3789 = vunpack.c.l.b16 %v2740
  %v3790 = vunpack.c.h.b16 %v2740
  %v3791 = vunpack.c.l.b16 %v2741
  %v3792 = vunpack.c.h.b16 %v2741
  %v3793 = vunpack.c.l.b16 %v2742
  %v3794 = vunpack.c.h.b16 %v2742
  %v3795 = vunpack.c.l.b16 %v2743
  %v3796 = vunpack.c.l.b16 %v2744
  %v3797 = vunpack.c.h.b16 %v2744
  %v3798 = vunpack.c.l.b16 %v2745
  %v3799 = vunpack.c.h.b16 %v2745
  %v3800 = vunpack.c.l.b16 %v2746
  %v3801 = vunpack.c.h.b16 %v2746
  %v3802 = vunpack.c.l.b16 %v2747
  %v3803 = vunpack.c.l.b16 %v2748
  %v3804 = vunpack.c.h.b16 %v2748
  %v3805 = vunpack.c.l.b16 %v2749
  %v3806 = vunpack.c.h.b16 %v2749
  %v3807 = vunpack.c.l.b16 %v2750
  %v3808 = vunpack.c.h.b16 %v2750
  %v3809 = vunpack.c.l.b16 %v2751
  %v3810 = vunpack.c.l.b16 %v2752
  %v3811 = vunpack.c.h.b16 %v2752
  %v3812 = vunpack.c.l.b16 %v2753
  %v3813 = vunpack.c.h.b16 %v2753
  %v3814 = vunpack.c.l.b16 %v2754
  %v3815 = vunpack.c.h.b16 %v2754
  %v3816 = vunpack.c.l.b16 %v2755
  %v3817 = vunpack.c.l.b16 %v2756
  %v3818 = vunpack.c.h.b16 %v2756
  %v3819 = vunpack.c.l.b16 %v2757
  %v3820 = vunpack.c.h.b16 %v2757
  %v3821 = vunpack.c.l.b16 %v2758
  %v3822 = vunpack.c.h.b16 %v2758
  %v3823 = vunpack.c.l.b16 %v2759
  %v3824 = vunpack.c.l.b16 %v2760
  %v3825 = vunpack.c.h.b16 %v2760
  %v3826 = vunpack.c.l.b16 %v2761
  %v3827 = vunpack.c.h.b16 %v2761
  %v3828 = vunpack.c.l.b16 %v2762
  %v3829 = vunpack.c.h.b16 %v2762
  %v3830 = vunpack.c.l.b16 %v2763
  %v3831 = vunpack.c.l.b16 %v2764
  %v3832 = vunpack.c.h.b16 %v2764
  %v3833 = vunpack.c.l.b16 %v2765
  %v3834 = vunpack.c.h.b16 %v2765
  %v3835 = vunpack.c.l.b16 %v2766
  %v3836 = vunpack.c.h.b16 %v2766
  %v3837 = vunpack.c.l.b16 %v2767
  %v3838 = vunpack.c.l.b16 %v2768
  %v3839 = vunpack.c.h.b16 %v2768
  %v3840 = vunpack.c.l.b16 %v2769
  %v3841 = vunpack.c.h.b16 %v2769
  %v3842 = vunpack.c.l.b16 %v2770
  %v3843 = vunpack.c.h.b16 %v2770
  %v3844 = vunpack.c.l.b16 %v2771
  %v3845 = vunpack.c.l.b16 %v2772
  %v3846 = vunpack.c.h.b16 %v2772
  %v3847 = vunpack.c.l.b16 %v2773
  %v3848 = vunpack.c.h.b16 %v2773
  %v3849 = vunpack.c.l.b16 %v2774
  %v3850 = vunpack.c.h.b16 %v2774
  %v3851 = vunpack.c.l.b16 %v2775
  %v3852 = vunpack.c.l.b16 %v2776
  %v3853 = vunpack.c.h.b16 %v2776
  %v3854 = vunpack.c.l.b16 %v2777
  %v3855 = vunpack.c.h.b16 %v2777
  %v3856 = vunpack.c.l.b16 %v2778
  %v3857 = vunpack.c.h.b16 %v2778
  %v3858 = vunpack.c.l.b16 %v2779
  %v3859 = vunpack.c.l.b16 %v2780
  %v3860 = vunpack.c.h.b16 %v2780
  %v3861 = vunpack.c.l.b16 %v2781
  %v3862 = vunpack.c.h.b16 %v2781
  %v3863 = vunpack.c.l.b16 %v2782
  %v3864 = vunpack.c.h.b16 %v2782
  %v3865 = vunpack.c.l.b16 %v2783
  %v3866 = vunpack.c.l.b16 %v2784
  %v3867 = vunpack.c.h.b16 %v2784
  %v3868 = vunpack.c.l.b16 %v2785
  %v3869 = vunpack.c.h.b16 %v2785
  %v3870 = vunpack.c.l.b16 %v2786
  %v3871 = vunpack.c.h.b16 %v2786
  %v3872 = vunpack.c.l.b16 %v2787
  %v3873 = vunpack.c.l.b16 %v2788
  %v3874 = vunpack.c.h.b16 %v2788
  %v3875 = vunpack.c.l.b16 %v2789
  %v3876 = vunpack.c.h.b16 %v2789
  %v3877 = vunpack.c.l.b16 %v2790
  %v3878 = vunpack.c.h.b16 %v2790
  %v3879 = vunpack.c.l.b16 %v2791
  %v3880 = vunpack.c.l.b16 %v2792
  %v3881 = vunpack.c.h.b16 %v2792
  %v3882 = vunpack.c.l.b16 %v2793
  %v3883 = vunpack.c.h.b16 %v2793
  %v3884 = vunpack.c.l.b16 %v2794
  %v3885 = vunpack.c.h.b16 %v2794
  %v3886 = vunpack.c.l.b16 %v2795
  %v3887 = vunpack.c.l.b16 %v2796
  %v3888 = vunpack.c.h.b16 %v2796
  %v3889 = vunpack.c.l.b16 %v2797
  %v3890 = vunpack.c.h.b16 %v2797
  %v3891 = vunpack.c.l.b16 %v2798
  %v3892 = vunpack.c.h.b16 %v2798
  %v3893 = vunpack.c.l.b16 %v2799
  %v3894 = vunpack.c.l.b16 %v2800
  %v3895 = vunpack.c.h.b16 %v2800
  %v3896 = vunpack.c.l.b16 %v2801
  %v3897 = vunpack.c.h.b16 %v2801
  %v3898 = vunpack.c.l.b16 %v2802
  %v3899 = vunpack.c.h.b16 %v2802
  %v3900 = vunpack.c.l.b16 %v2803
  %v3901 = vunpack.c.l.b16 %v2804
  %v3902 = vunpack.c.h.b16 %v2804
  %v3903 = vunpack.c.l.b16 %v2805
  %v3904 = vunpack.c.h.b16 %v2805
  %v3905 = vunpack.c.l.b16 %v2806
  %v3906 = vunpack.c.h.b16 %v2806
  %v3907 = vunpack.c.l.b16 %v2807
  %v3908 = vunpack.c.l.b16 %v2808
  %v3909 = vunpack.c.h.b16 %v2808
  %v3910 = vunpack.c.l.b16 %v2809
  %v3911 = vunpack.c.h.b16 %v2809
  %v3912 = vunpack.c.l.b16 %v2810
  %v3913 = vunpack.c.h.b16 %v2810
  %v3914 = vunpack.c.l.b16 %v2811
  %v3915 = vunpack.c.l.b16 %v2812
  %v3916 = vunpack.c.h.b16 %v2812
  %v3917 = vunpack.c.l.b16 %v2813
  %v3918 = vunpack.c.h.b16 %v2813
  %v3919 = vunpack.c.l.b16 %v2814
  %v3920 = vunpack.c.h.b16 %v2814
  %v3921 = vunpack.c.l.b16 %v2815
  %v3922 = vunpack.c.l.b16 %v2816
  %v3923 = vunpack.c.h.b16 %v2816
  %v3924 = vunpack.c.l.b16 %v2817
  %v3925 = vunpack.c.h.b16 %v2817
  %v3926 = vunpack.c.l.b16 %v2818
  %v3927 = vunpack.c.h.b16 %v2818
  %v3928 = vunpack.c.l.b16 %v2819
  %v3929 = vunpack.c.l.b16 %v2820
  %v3930 = vunpack.c.h.b16 %v2820
  %v3931 = vunpack.c.l.b16 %v2821
  %v3932 = vunpack.c.h.b16 %v2821
  %v3933 = vunpack.c.l.b16 %v2822
  %v3934 = vunpack.c.h.b16 %v2822
  %v3935 = vunpack.c.l.b16 %v2823
  %v3936 = vunpack.c.l.b16 %v2824
  %v3937 = vunpack.c.h.b16 %v2824
  %v3938 = vunpack.c.l.b16 %v2825
  %v3939 = vunpack.c.h.b16 %v2825
  %v3940 = vunpack.c.l.b16 %v2826
  %v3941 = vunpack.c.h.b16 %v2826
  %v3942 = vunpack.c.l.b16 %v2827
  %v3943 = vunpack.c.l.b16 %v2828
  %v3944 = vunpack.c.h.b16 %v2828
  %v3945 = vunpack.c.l.b16 %v2829
  %v3946 = vunpack.c.h.b16 %v2829
  %v3947 = vunpack.c.l.b16 %v2830
  %v3948 = vunpack.c.h.b16 %v2830
  %v3949 = vunpack.c.l.b16 %v2831
  %v3950 = vunpack.c.l.b16 %v2832
  %v3951 = vunpack.c.h.b16 %v2832
  %v3952 = vunpack.c.l.b16 %v2833
  %v3953 = vunpack.c.h.b16 %v2833
  %v3954 = vunpack.c.l.b16 %v2834
  %v3955 = vunpack.c.h.b16 %v2834
  %v3956 = vunpack.c.l.b16 %v2835
  %v3957 = vunpack.c.l.b16 %v2836
  %v3958 = vunpack.c.h.b16 %v2836
  %v3959 = vunpack.c.l.b16 %v2837
  %v3960 = vunpack.c.h.b16 %v2837
  %v3961 = vunpack.c.l.b16 %v2838
  %v3962 = vunpack.c.h.b16 %v2838
  %v3963 = vunpack.c.l.b16 %v2839
  %v3964 = vunpack.c.l.b16 %v2840
  %v3965 = vunpack.c.h.b16 %v2840
  %v3966 = vunpack.c.l.b16 %v2841
  %v3967 = vunpack.c.h.b16 %v2841
  %v3968 = vunpack.c.l.b16 %v2842
  %v3969 = vunpack.c.h.b16 %v2842
  %v3970 = vunpack.c.l.b16 %v2843
  %v3971 = vunpack.c.l.b16 %v2844
  %v3972 = vunpack.c.h.b16 %v2844
  %v3973 = vunpack.c.l.b16 %v2845
  %v3974 = vunpack.c.h.b16 %v2845
  %v3975 = vunpack.c.l.b16 %v2846
  %v3976 = vunpack.c.h.b16 %v2846
  %v3977 = vunpack.c.l.b16 %v2847
  %v3978 = vunpack.c.l.b16 %v2848
  %v3979 = vunpack.c.h.b16 %v2848
  %v3980 = vunpack.c.l.b16 %v2849
  %v3981 = vunpack.c.h.b16 %v2849
  %v3982 = vunpack.c.l.b16 %v2850
  %v3983 = vunpack.c.h.b16 %v2850
  %v3984 = vunpack.c.l.b16 %v2851
  %v3985 = vunpack.c.l.b16 %v2852
  %v3986 = vunpack.c.h.b16 %v2852
  %v3987 = vunpack.c.l.b16 %v2853
  %v3988 = vunpack.c.h.b16 %v2853
  %v3989 = vunpack.c.l.b16 %v2854
  %v3990 = vunpack.c.h.b16 %v2854
  %v3991 = vunpack.c.l.b16 %v2855
  %v3992 = vunpack.c.l.b16 %v2856
  %v3993 = vunpack.c.h.b16 %v2856
  %v3994 = vunpack.c.l.b16 %v2857
  %v3995 = vunpack.c.h.b16 %v2857
  %v3996 = vunpack.c.l.b16 %v2858
  %v3997 = vunpack.c.h.b16 %v2858
  %v3998 = vunpack.c.l.b16 %v2859
  %v3999 = vunpack.c.l.b16 %v2860
  %v4000 = vunpack.c.h.b16 %v2860
  %v4001 = vunpack.c.l.b16 %v2861
  %v4002 = vunpack.c.h.b16 %v2861
  %v4003 = vunpack.c.l.b16 %v2862
  %v4004 = vunpack.c.h.b16 %v2862
  %v4005 = vunpack.c.l.b16 %v2863
  %v4006 = vunpack.c.l.b16 %v2864
  %v4007 = vunpack.c.h.b16 %v2864
  %v4008 = vunpack.c.l.b16 %v2865
  %v4009 = vunpack.c.h.b16 %v2865
  %v4010 = vunpack.c.l.b16 %v2866
  %v4011 = vunpack.c.h.b16 %v2866
  %v4012 = vunpack.c.l.b16 %v2867
  %v4013 = vunpack.c.l.b16 %v2868
  %v4014 = vunpack.c.h.b16 %v2868
  %v4015 = vunpack.c.l.b16 %v2869
  %v4016 = vunpack.c.h.b16 %v2869
  %v4017 = vunpack.c.l.b16 %v2870
  %v4018 = vunpack.c.h.b16 %v2870
  %v4019 = vunpack.c.l.b16 %v2871
  %v4020 = vunpack.c.l.b16 %v2872
  %v4021 = vunpack.c.h.b16 %v2872
  %v4022 = vunpack.c.l.b16 %v2873
  %v4023 = vunpack.c.h.b16 %v2873
  %v4024 = vunpack.c.l.b16 %v2874
  %v4025 = vunpack.c.h.b16 %v2874
  %v4026 = vunpack.c.l.b16 %v2875
  %v4027 = vunpack.c.l.b16 %v2876
  %v4028 = vunpack.c.h.b16 %v2876
  %v4029 = vunpack.c.l.b16 %v2877
  %v4030 = vunpack.c.h.b16 %v2877
  %v4031 = vunpack.c.l.b16 %v2878
  %v4032 = vunpack.c.h.b16 %v2878
  %v4033 = vunpack.c.l.b16 %v2879
  %v4034 = vunpack.c.l.b16 %v2880
  %v4035 = vunpack.c.h.b16 %v2880
  %v4036 = vunpack.c.l.b16 %v2881
  %v4037 = vunpack.c.h.b16 %v2881
  %v4038 = vunpack.c.l.b16 %v2882
  %v4039 = vunpack.c.h.b16 %v2882
  %v4040 = vunpack.c.l.b16 %v2883
  %v4041 = vunpack.c.l.b16 %v2884
  %v4042 = vunpack.c.h.b16 %v2884
  %v4043 = vunpack.c.l.b16 %v2885
  %v4044 = vunpack.c.h.b16 %v2885
  %v4045 = vunpack.c.l.b16 %v2886
  %v4046 = vunpack.c.h.b16 %v2886
  %v4047 = vunpack.c.l.b16 %v2887
  %v4048 = vunpack.c.l.b16 %v2888
  %v4049 = vunpack.c.h.b16 %v2888
  %v4050 = vunpack.c.l.b16 %v2889
  %v4051 = vunpack.c.h.b16 %v2889
  %v4052 = vunpack.c.l.b16 %v2890
  %v4053 = vunpack.c.h.b16 %v2890
  %v4054 = vunpack.c.l.b16 %v2891
  %v4055 = vunpack.c.l.b16 %v2892
  %v4056 = vunpack.c.h.b16 %v2892
  %v4057 = vunpack.c.l.b16 %v2893
  %v4058 = vunpack.c.h.b16 %v2893
  %v4059 = vunpack.c.l.b16 %v2894
  %v4060 = vunpack.c.h.b16 %v2894
  %v4061 = vunpack.c.l.b16 %v2895
  %v4062 = vunpack.c.l.b16 %v2896
  %v4063 = vunpack.c.h.b16 %v2896
  %v4064 = vunpack.c.l.b16 %v2897
  %v4065 = vunpack.c.h.b16 %v2897
  %v4066 = vunpack.c.l.b16 %v2898
  %v4067 = vunpack.c.h.b16 %v2898
  %v4068 = vunpack.c.l.b16 %v2899
  %v4069 = vunpack.c.l.b16 %v2900
  %v4070 = vunpack.c.h.b16 %v2900
  %v4071 = vunpack.c.l.b16 %v2901
  %v4072 = vunpack.c.h.b16 %v2901
  %v4073 = vunpack.c.l.b16 %v2902
  %v4074 = vunpack.c.h.b16 %v2902
  %v4075 = vunpack.c.l.b16 %v2903
  %v4076 = vunpack.c.l.b16 %v2904
  %v4077 = vunpack.c.h.b16 %v2904
  %v4078 = vunpack.c.l.b16 %v2905
  %v4079 = vunpack.c.h.b16 %v2905
  %v4080 = vunpack.c.l.b16 %v2906
  %v4081 = vunpack.c.h.b16 %v2906
  %v4082 = vunpack.c.l.b16 %v2907
  %v4083 = vunpack.c.l.b16 %v2908
  %v4084 = vunpack.c.h.b16 %v2908
  %v4085 = vunpack.c.l.b16 %v2909
  %v4086 = vunpack.c.h.b16 %v2909
  %v4087 = vunpack.c.l.b16 %v2910
  %v4088 = vunpack.c.h.b16 %v2910
  %v4089 = vunpack.c.l.b16 %v2911
  %v4090 = vunpack.c.l.b16 %v2912
  %v4091 = vunpack.c.h.b16 %v2912
  %v4092 = vunpack.c.l.b16 %v2913
  %v4093 = vunpack.c.h.b16 %v2913
  %v4094 = vunpack.c.l.b16 %v2914
  %v4095 = vunpack.c.h.b16 %v2914
  %v4096 = vunpack.c.l.b16 %v2915
  %v4097 = vunpack.c.l.b16 %v2916
  %v4098 = vunpack.c.h.b16 %v2916
  %v4099 = vunpack.c.l.b16 %v2917
  %v4100 = vunpack.c.h.b16 %v2917
  %v4101 = vunpack.c.l.b16 %v2918
  %v4102 = vunpack.c.h.b16 %v2918
  %v4103 = vunpack.c.l.b16 %v2919
  %v4104 = vunpack.c.l.b16 %v2920
  %v4105 = vunpack.c.h.b16 %v2920
  %v4106 = vunpack.c.l.b16 %v2921
  %v4107 = vunpack.c.h.b16 %v2921
  %v4108 = vunpack.c.l.b16 %v2922
  %v4109 = vunpack.c.h.b16 %v2922
  %v4110 = vunpack.c.l.b16 %v2923
  %v4111 = vunpack.c.l.b16 %v2924
  %v4112 = vunpack.c.h.b16 %v2924
  %v4113 = vunpack.c.l.b16 %v2925
  %v4114 = vunpack.c.h.b16 %v2925
  %v4115 = vunpack.c.l.b16 %v2926
  %v4116 = vunpack.c.h.b16 %v2926
  %v4117 = vunpack.c.l.b16 %v2927
  %v4118 = vunpack.c.l.b16 %v2928
  %v4119 = vunpack.c.h.b16 %v2928
  %v4120 = vunpack.c.l.b16 %v2929
  %v4121 = vunpack.c.h.b16 %v2929
  %v4122 = vunpack.c.l.b16 %v2930
  %v4123 = vunpack.c.h.b16 %v2930
  %v4124 = vunpack.c.l.b16 %v2931
  %v4125 = vunpack.c.l.b16 %v2932
  %v4126 = vunpack.c.h.b16 %v2932
  %v4127 = vunpack.c.l.b16 %v2933
  %v4128 = vunpack.c.h.b16 %v2933
  %v4129 = vunpack.c.l.b16 %v2934
  %v4130 = vunpack.c.h.b16 %v2934
  %v4131 = vunpack.c.l.b16 %v2935
  %v4132 = vunpack.c.l.b16 %v2936
  %v4133 = vunpack.c.h.b16 %v2936
  %v4134 = vunpack.c.l.b16 %v2937
  %v4135 = vunpack.c.h.b16 %v2937
  %v4136 = vunpack.c.l.b16 %v2938
  %v4137 = vunpack.c.h.b16 %v2938
  %v4138 = vunpack.c.l.b16 %v2939
  %v4139 = vunpack.c.l.b16 %v2940
  %v4140 = vunpack.c.h.b16 %v2940
  %v4141 = vunpack.c.l.b16 %v2941
  %v4142 = vunpack.c.h.b16 %v2941
  %v4143 = vunpack.c.l.b16 %v2942
  %v4144 = vunpack.c.h.b16 %v2942
  %v4145 = vunpack.c.l.b16 %v2943
  %v4146 = vunpack.c.l.b16 %v2944
  %v4147 = vunpack.c.h.b16 %v2944
  %v4148 = vunpack.c.l.b16 %v2945
  %v4149 = vunpack.c.h.b16 %v2945
  %v4150 = vunpack.c.l.b16 %v2946
  %v4151 = vunpack.c.h.b16 %v2946
  %v4152 = vunpack.c.l.b16 %v2947
  %v4153 = vunpack.c.l.b16 %v2948
  %v4154 = vunpack.c.h.b16 %v2948
  %v4155 = vunpack.c.l.b16 %v2949
  %v4156 = vunpack.c.h.b16 %v2949
  %v4157 = vunpack.c.l.b16 %v2950
  %v4158 = vunpack.c.h.b16 %v2950
  %v4159 = vunpack.c.l.b16 %v2951
  %v4160 = vunpack.c.l.b16 %v2952
  %v4161 = vunpack.c.h.b16 %v2952
  %v4162 = vunpack.c.l.b16 %v2953
  %v4163 = vunpack.c.h.b16 %v2953
  %v4164 = vunpack.c.l.b16 %v2954
  %v4165 = vunpack.c.h.b16 %v2954
  %v4166 = vunpack.c.l.b16 %v2955
  %v4167 = vunpack.c.l.b16 %v2956
  %v4168 = vunpack.c.h.b16 %v2956
  %v4169 = vunpack.c.l.b16 %v2957
  %v4170 = vunpack.c.h.b16 %v2957
  %v4171 = vunpack.c.l.b16 %v2958
  %v4172 = vunpack.c.h.b16 %v2958
  %v4173 = vunpack.c.l.b16 %v2959
  %v4174 = vunpack.c.l.b16 %v2960
  %v4175 = vunpack.c.h.b16 %v2960
  %v4176 = vunpack.c.l.b16 %v2961
  %v4177 = vunpack.c.h.b16 %v2961
  %v4178 = vunpack.c.l.b16 %v2962
  %v4179 = vunpack.c.h.b16 %v2962
  %v4180 = vunpack.c.l.b16 %v2963
  %v4181 = vunpack.c.l.b16 %v2964
  %v4182 = vunpack.c.h.b16 %v2964
  %v4183 = vunpack.c.l.b16 %v2965
  %v4184 = vunpack.c.h.b16 %v2965
  %v4185 = vunpack.c.l.b16 %v2966
  %v4186 = vunpack.c.h.b16 %v2966
  %v4187 = vunpack.c.l.b16 %v2967
  %v4188 = vunpack.c.l.b16 %v2968
  %v4189 = vunpack.c.h.b16 %v2968
  %v4190 = vunpack.c.l.b16 %v2969
  %v4191 = vunpack.c.h.b16 %v2969
  %v4192 = vunpack.c.l.b16 %v2970
  %v4193 = vunpack.c.h.b16 %v2970
  %v4194 = vunpack.c.l.b16 %v2971
  %v4195 = vunpack.c.l.b16 %v2972
  %v4196 = vunpack.c.h.b16 %v2972
  %v4197 = vunpack.c.l.b16 %v2973
  %v4198 = vunpack.c.h.b16 %v2973
  %v4199 = vunpack.c.l.b16 %v2974
  %v4200 = vunpack.c.h.b16 %v2974
  %v4201 = vunpack.c.l.b16 %v2975
  %v4202 = vunpack.c.l.b16 %v2976
  %v4203 = vunpack.c.h.b16 %v2976
  %v4204 = vunpack.c.l.b16 %v2977
  %v4205 = vunpack.c.h.b16 %v2977
  %v4206 = vunpack.c.l.b16 %v2978
  %v4207 = vunpack.c.h.b16 %v2978
  %v4208 = vunpack.c.l.b16 %v2979
  %v4209 = vunpack.c.l.b16 %v2980
  %v4210 = vunpack.c.h.b16 %v2980
  %v4211 = vunpack.c.l.b16 %v2981
  %v4212 = vunpack.c.h.b16 %v2981
  %v4213 = vunpack.c.l.b16 %v2982
  %v4214 = vunpack.c.h.b16 %v2982
  %v4215 = vunpack.c.l.b16 %v2983
  %v4216 = vunpack.c.l.b16 %v2984
  %v4217 = vunpack.c.h.b16 %v2984
  %v4218 = vunpack.c.l.b16 %v2985
  %v4219 = vunpack.c.h.b16 %v2985
  %v4220 = vunpack.c.l.b16 %v2986
  %v4221 = vunpack.c.h.b16 %v2986
  %v4222 = vunpack.c.l.b16 %v2987
  %v4223 = vunpack.c.l.b16 %v2988
  %v4224 = vunpack.c.h.b16 %v2988
  %v4225 = vunpack.c.l.b16 %v2989
  %v4226 = vunpack.c.h.b16 %v2989
  %v4227 = vunpack.c.l.b16 %v2990
  %v4228 = vunpack.c.h.b16 %v2990
  %v4229 = vunpack.c.l.b16 %v2991
  %v4230 = vunpack.c.l.b16 %v2992
  %v4231 = vunpack.c.h.b16 %v2992
  %v4232 = vunpack.c.l.b16 %v2993
  %v4233 = vunpack.c.h.b16 %v2993
  %v4234 = vunpack.c.l.b16 %v2994
  %v4235 = vunpack.c.h.b16 %v2994
  %v4236 = vunpack.c.l.b16 %v2995
  %v4237 = vunpack.c.l.b16 %v2996
  %v4238 = vunpack.c.h.b16 %v2996
  %v4239 = vunpack.c.l.b16 %v2997
  %v4240 = vunpack.c.h.b16 %v2997
  %v4241 = vunpack.c.l.b16 %v2998
  %v4242 = vunpack.c.h.b16 %v2998
  %v4243 = vunpack.c.l.b16 %v2999
  %v4244 = vunpack.c.l.b16 %v3000
  %v4245 = vunpack.c.h.b16 %v3000
  %v4246 = vunpack.c.l.b16 %v3001
  %v4247 = vunpack.c.h.b16 %v3001
  %v4248 = vunpack.c.l.b16 %v3002
  %v4249 = vunpack.c.h.b16 %v3002
  %v4250 = vunpack.c.l.b16 %v3003
  %v4251 = vunpack.c.l.b16 %v3004
  %v4252 = vunpack.c.h.b16 %v3004
  %v4253 = vunpack.c.l.b16 %v3005
  %v4254 = vunpack.c.h.b16 %v3005
  %v4255 = vunpack.c.l.b16 %v3006
  %v4256 = vunpack.c.h.b16 %v3006
  %v4257 = vunpack.c.l.b16 %v3007
  %v4258 = vunpack.c.l.b16 %v3008
  %v4259 = vunpack.c.h.b16 %v3008
  %v4260 = vunpack.c.l.b16 %v3009
  %v4261 = vunpack.c.h.b16 %v3009
  %v4262 = vunpack.c.l.b16 %v3010
  %v4263 = vunpack.c.h.b16 %v3010
  %v4264 = vunpack.c.l.b16 %v3011
  %v4265 = vunpack.c.l.b16 %v3012
  %v4266 = vunpack.c.h.b16 %v3012
  %v4267 = vunpack.c.l.b16 %v3013
  %v4268 = vunpack.c.h.b16 %v3013
  %v4269 = vunpack.c.l.b16 %v3014
  %v4270 = vunpack.c.h.b16 %v3014
  %v4271 = vunpack.c.l.b16 %v3015
  %v4272 = vunpack.c.l.b16 %v3016
  %v4273 = vunpack.c.h.b16 %v3016
  %v4274 = vunpack.c.l.b16 %v3017
  %v4275 = vunpack.c.h.b16 %v3017
  %v4276 = vunpack.c.l.b16 %v3018
  %v4277 = vunpack.c.h.b16 %v3018
  %v4278 = vunpack.c.l.b16 %v3019
  %v4279 = vunpack.c.l.b16 %v3020
  %v4280 = vunpack.c.h.b16 %v3020
  %v4281 = vunpack.c.l.b16 %v3021
  %v4282 = vunpack.c.h.b16 %v3021
  %v4283 = vunpack.c.l.b16 %v3022
  %v4284 = vunpack.c.h.b16 %v3022
  %v4285 = vunpack.c.l.b16 %v3023
  %v4286 = vunpack.c.l.b16 %v3024
  %v4287 = vunpack.c.h.b16 %v3024
  %v4288 = vunpack.c.l.b16 %v3025
  %v4289 = vunpack.c.h.b16 %v3025
  %v4290 = vunpack.c.l.b16 %v3026
  %v4291 = vunpack.c.h.b16 %v3026
  %v4292 = vunpack.c.l.b16 %v3027
  %v4293 = vunpack.c.l.b16 %v3028
  %v4294 = vunpack.c.h.b16 %v3028
  %v4295 = vunpack.c.l.b16 %v3029
  %v4296 = vunpack.c.h.b16 %v3029
  %v4297 = vunpack.c.l.b16 %v3030
  %v4298 = vunpack.c.h.b16 %v3030
  %v4299 = vunpack.c.l.b16 %v3031
  %v4300 = vunpack.c.l.b16 %v3032
  %v4301 = vunpack.c.h.b16 %v3032
  %v4302 = vunpack.c.l.b16 %v3033
  %v4303 = vunpack.c.h.b16 %v3033
  %v4304 = vunpack.c.l.b16 %v3034
  %v4305 = vunpack.c.h.b16 %v3034
  %v4306 = vunpack.c.l.b16 %v3035
  %v4307 = vunpack.c.l.b16 %v3036
  %v4308 = vunpack.c.h.b16 %v3036
  %v4309 = vunpack.c.l.b16 %v3037
  %v4310 = vunpack.c.h.b16 %v3037
  %v4311 = vunpack.c.l.b16 %v3038
  %v4312 = vunpack.c.h.b16 %v3038
  %v4313 = vunpack.c.l.b16 %v3039
  %v4314 = vunpack.c.l.b16 %v3040
  %v4315 = vunpack.c.h.b16 %v3040
  %v4316 = vunpack.c.l.b16 %v3041
  %v4317 = vunpack.c.h.b16 %v3041
  %v4318 = vunpack.c.l.b16 %v3042
  %v4319 = vunpack.c.h.b16 %v3042
  %v4320 = vunpack.c.l.b16 %v3043
  %v4321 = vunpack.c.l.b16 %v3044
  %v4322 = vunpack.c.h.b16 %v3044
  %v4323 = vunpack.c.l.b16 %v3045
  %v4324 = vunpack.c.h.b16 %v3045
  %v4325 = vunpack.c.l.b16 %v3046
  %v4326 = vunpack.c.h.b16 %v3046
  %v4327 = vunpack.c.l.b16 %v3047
  %v4328 = vunpack.c.l.b16 %v3048
  %v4329 = vunpack.c.h.b16 %v3048
  %v4330 = vunpack.c.l.b16 %v3049
  %v4331 = vunpack.c.h.b16 %v3049
  %v4332 = vunpack.c.l.b16 %v3050
  %v4333 = vunpack.c.h.b16 %v3050
  %v4334 = vunpack.c.l.b16 %v3051
  %v4335 = vunpack.c.l.b16 %v3052
  %v4336 = vunpack.c.h.b16 %v3052
  %v4337 = vunpack.c.l.b16 %v3053
  %v4338 = vunpack.c.h.b16 %v3053
  %v4339 = vunpack.c.l.b16 %v3054
  %v4340 = vunpack.c.h.b16 %v3054
  %v4341 = vunpack.c.l.b16 %v3055
  %v4342 = vunpack.c.l.b16 %v3056
  %v4343 = vunpack.c.h.b16 %v3056
  %v4344 = vunpack.c.l.b16 %v3057
  %v4345 = vunpack.c.h.b16 %v3057
  %v4346 = vunpack.c.l.b16 %v3058
  %v4347 = vunpack.c.h.b16 %v3058
  %v4348 = vunpack.c.l.b16 %v3059
  %v4349 = vunpack.c.l.b16 %v3060
  %v4350 = vunpack.c.h.b16 %v3060
  %v4351 = vunpack.c.l.b16 %v3061
  %v4352 = vunpack.c.h.b16 %v3061
  %v4353 = vunpack.c.l.b16 %v3062
  %v4354 = vunpack.c.h.b16 %v3062
  %v4355 = vunpack.c.l.b16 %v3063
  %v4356 = vunpack.c.l.b16 %v3064
  %v4357 = vunpack.c.h.b16 %v3064
  %v4358 = vunpack.c.l.b16 %v3065
  %v4359 = vunpack.c.h.b16 %v3065
  %v4360 = vunpack.c.l.b16 %v3066
  %v4361 = vunpack.c.h.b16 %v3066
  %v4362 = vunpack.c.l.b16 %v3067
  %v4363 = vunpack.c.l.b16 %v3068
  %v4364 = vunpack.c.h.b16 %v3068
  %v4365 = vunpack.c.l.b16 %v3069
  %v4366 = vunpack.c.h.b16 %v3069
  %v4367 = vunpack.c.l.b16 %v3070
  %v4368 = vunpack.c.h.b16 %v3070
  %v4369 = vunpack.c.l.b16 %v3071
  %v4370 = vunpack.c.l.b16 %v3072
  %v4371 = vunpack.c.h.b16 %v3072
  %v4372 = vunpack.c.l.b16 %v3073
  %v4373 = vunpack.c.h.b16 %v3073
  %v4374 = vunpack.c.l.b16 %v3074
  %v4375 = vunpack.c.h.b16 %v3074
  %v4376 = vunpack.c.l.b16 %v3075
  %v4377 = vunpack.c.l.b16 %v3076
  %v4378 = vunpack.c.h.b16 %v3076
  %v4379 = vunpack.c.l.b16 %v3077
  %v4380 = vunpack.c.h.b16 %v3077
  %v4381 = vunpack.c.l.b16 %v3078
  %v4382 = vunpack.c.h.b16 %v3078
  %v4383 = vunpack.c.l.b16 %v3079
  %v4384 = vunpack.c.l.b16 %v3080
  %v4385 = vunpack.c.h.b16 %v3080
  %v4386 = vunpack.c.l.b16 %v3081
  %v4387 = vunpack.c.h.b16 %v3081
  %v4388 = vunpack.c.l.b16 %v3082
  %v4389 = vunpack.c.h.b16 %v3082
  %v4390 = vunpack.c.l.b16 %v3083
  %v4391 = vunpack.c.l.b16 %v3084
  %v4392 = vunpack.c.h.b16 %v3084
  %v4393 = vunpack.c.l.b16 %v3085
  %v4394 = vunpack.c.h.b16 %v3085
  %v4395 = vunpack.c.l.b16 %v3086
  %v4396 = vunpack.c.h.b16 %v3086
  %v4397 = vunpack.c.l.b16 %v3087
  %v4398 = vunpack.c.l.b16 %v3088
  %v4399 = vunpack.c.h.b16 %v3088
  %v4400 = vunpack.c.l.b16 %v3089
  %v4401 = vunpack.c.h.b16 %v3089
  %v4402 = vunpack.c.l.b16 %v3090
  %v4403 = vunpack.c.h.b16 %v3090
  %v4404 = vunpack.c.l.b16 %v3091
  %v4405 = vunpack.c.l.b16 %v3092
  %v4406 = vunpack.c.h.b16 %v3092
  %v4407 = vunpack.c.l.b16 %v3093
  %v4408 = vunpack.c.h.b16 %v3093
  %v4409 = vunpack.c.l.b16 %v3094
  %v4410 = vunpack.c.h.b16 %v3094
  %v4411 = vunpack.c.l.b16 %v3095
  %v4412 = vunpack.c.l.b16 %v3096
  %v4413 = vunpack.c.h.b16 %v3096
  %v4414 = vunpack.c.l.b16 %v3097
  %v4415 = vunpack.c.h.b16 %v3097
  %v4416 = vunpack.c.l.b16 %v3098
  %v4417 = vunpack.c.h.b16 %v3098
  %v4418 = vunpack.c.l.b16 %v3099
  %v4419 = vunpack.c.l.b16 %v3100
  %v4420 = vunpack.c.h.b16 %v3100
  %v4421 = vunpack.c.l.b16 %v3101
  %v4422 = vunpack.c.h.b16 %v3101
  %v4423 = vunpack.c.l.b16 %v3102
  %v4424 = vunpack.c.h.b16 %v3102
  %v4425 = vunpack.c.l.b16 %v3103
  %v4426 = vunpack.c.l.b16 %v3104
  %v4427 = vunpack.c.h.b16 %v3104
  %v4428 = vunpack.c.l.b16 %v3105
  %v4429 = vunpack.c.h.b16 %v3105
  %v4430 = vunpack.c.l.b16 %v3106
  %v4431 = vunpack.c.h.b16 %v3106
  %v4432 = vunpack.c.l.b16 %v3107
  %v4433 = vunpack.c.l.b16 %v3108
  %v4434 = vunpack.c.h.b16 %v3108
  %v4435 = vunpack.c.l.b16 %v3109
  %v4436 = vunpack.c.h.b16 %v3109
  %v4437 = vunpack.c.l.b16 %v3110
  %v4438 = vunpack.c.h.b16 %v3110
  %v4439 = vunpack.c.l.b16 %v3111
  %v4440 = vunpack.c.l.b16 %v3112
  %v4441 = vunpack.c.h.b16 %v3112
  %v4442 = vunpack.c.l.b16 %v3113
  %v4443 = vunpack.c.h.b16 %v3113
  %v4444 = vunpack.c.l.b16 %v3114
  %v4445 = vunpack.c.h.b16 %v3114
  %v4446 = vunpack.c.l.b16 %v3115
  %v4447 = vunpack.c.l.b16 %v3116
  %v4448 = vunpack.c.h.b16 %v3116
  %v4449 = vunpack.c.l.b16 %v3117
  %v4450 = vunpack.c.h.b16 %v3117
  %v4451 = vunpack.c.l.b16 %v3118
  %v4452 = vunpack.c.h.b16 %v3118
  %v4453 = vunpack.c.l.b16 %v3119
  %v4454 = vunpack.c.l.b16 %v3120
  %v4455 = vunpack.c.h.b16 %v3120
  %v4456 = vunpack.c.l.b16 %v3121
  %v4457 = vunpack.c.h.b16 %v3121
  %v4458 = vunpack.c.l.b16 %v3122
  %v4459 = vunpack.c.h.b16 %v3122
  %v4460 = vunpack.c.l.b16 %v3123
  %v4461 = vunpack.c.l.b16 %v3124
  %v4462 = vunpack.c.h.b16 %v3124
  %v4463 = vunpack.c.l.b16 %v3125
  %v4464 = vunpack.c.h.b16 %v3125
  %v4465 = vunpack.c.l.b16 %v3126
  %v4466 = vunpack.c.h.b16 %v3126
  %v4467 = vunpack.c.l.b16 %v3127
  %v4468 = vunpack.c.l.b16 %v3128
  %v4469 = vunpack.c.h.b16 %v3128
  %v4470 = vunpack.c.l.b16 %v3129
  %v4471 = vunpack.c.h.b16 %v3129
  %v4472 = vunpack.c.l.b16 %v3130
  %v4473 = vunpack.c.h.b16 %v3130
  %v4474 = vunpack.c.l.b16 %v3131
  %v4475 = vunpack.c.l.b16 %v3132
  %v4476 = vunpack.c.h.b16 %v3132
  %v4477 = vunpack.c.l.b16 %v3133
  %v4478 = vunpack.c.h.b16 %v3133
  %v4479 = vunpack.c.l.b16 %v3134
  %v4480 = vunpack.c.h.b16 %v3134
  %v4481 = vunpack.c.l.b16 %v3135
  %v4482 = vunpack.c.l.b16 %v3136
  %v4483 = vunpack.c.h.b16 %v3136
  %v4484 = vunpack.c.l.b16 %v3137
  %v4485 = vunpack.c.h.b16 %v3137
  %v4486 = vunpack.c.l.b16 %v3138
  %v4487 = vunpack.c.h.b16 %v3138
  %v4488 = vunpack.c.l.b16 %v3139
  %v4489 = vunpack.c.l.b16 %v3140
  %v4490 = vunpack.c.h.b16 %v3140
  %v4491 = vunpack.c.l.b16 %v3141
  %v4492 = vunpack.c.h.b16 %v3141
  %v4493 = vunpack.c.l.b16 %v3142
  %v4494 = vunpack.c.h.b16 %v3142
  %v4495 = vunpack.c.l.b16 %v3143
  %v4496 = vunpack.c.l.b16 %v3144
  %v4497 = vunpack.c.h.b16 %v3144
  %v4498 = vunpack.c.l.b16 %v3145
  %v4499 = vunpack.c.h.b16 %v3145
  %v4500 = vunpack.c.l.b16 %v3146
  %v4501 = vunpack.c.h.b16 %v3146
  %v4502 = vunpack.c.l.b16 %v3147
  %v4503 = vunpack.c.l.b16 %v3148
  %v4504 = vunpack.c.h.b16 %v3148
  %v4505 = vunpack.c.l.b16 %v3149
  %v4506 = vunpack.c.h.b16 %v3149
  %v4507 = vunpack.c.l.b16 %v3150
  %v4508 = vunpack.c.h.b16 %v3150
  %v4509 = vunpack.c.l.b16 %v3151
  %v4510 = vunpack.c.l.b16 %v3152
  %v4511 = vunpack.c.h.b16 %v3152
  %v4512 = vunpack.c.l.b16 %v3153
  %v4513 = vunpack.c.h.b16 %v3153
  %v4514 = vunpack.c.l.b16 %v3154
  %v4515 = vunpack.c.h.b16 %v3154
  %v4516 = vunpack.c.l.b16 %v3155
  %v4517 = vunpack.c.l.b16 %v3156
  %v4518 = vunpack.c.h.b16 %v3156
  %v4519 = vunpack.c.l.b16 %v3157
  %v4520 = vunpack.c.h.b16 %v3157
  %v4521 = vunpack.c.l.b16 %v3158
  %v4522 = vunpack.c.h.b16 %v3158
  %v4523 = vunpack.c.l.b16 %v3159
  %v4524 = vunpack.c.l.b16 %v3160
  %v4525 = vunpack.c.h.b16 %v3160
  %v4526 = vunpack.c.l.b16 %v3161
  %v4527 = vunpack.c.h.b16 %v3161
  %v4528 = vunpack.c.l.b16 %v3162
  %v4529 = vunpack.c.h.b16 %v3162
  %v4530 = vunpack.c.l.b16 %v3163
  %v4531 = vunpack.c.l.b16 %v3164
  %v4532 = vunpack.c.h.b16 %v3164
  %v4533 = vunpack.c.l.b16 %v3165
  %v4534 = vunpack.c.h.b16 %v3165
  %v4535 = vunpack.c.l.b16 %v3166
  %v4536 = vunpack.c.h.b16 %v3166
  %v4537 = vunpack.c.l.b16 %v3167
  %v4538 = vunpack.c.l.b16 %v3168
  %v4539 = vunpack.c.h.b16 %v3168
  %v4540 = vunpack.c.l.b16 %v3169
  %v4541 = vunpack.c.h.b16 %v3169
  %v4542 = vunpack.c.l.b16 %v3170
  %v4543 = vunpack.c.h.b16 %v3170
  %v4544 = vunpack.c.l.b16 %v3171
  %v4545 = vunpack.c.l.b16 %v3172
  %v4546 = vunpack.c.h.b16 %v3172
  %v4547 = vunpack.c.l.b16 %v3173
  %v4548 = vunpack.c.h.b16 %v3173
  %v4549 = vunpack.c.l.b16 %v3174
  %v4550 = vunpack.c.h.b16 %v3174
  %v4551 = vunpack.c.l.b16 %v3175
  %v4552 = vunpack.c.l.b16 %v3176
  %v4553 = vunpack.c.h.b16 %v3176
  %v4554 = vunpack.c.l.b16 %v3177
  %v4555 = vunpack.c.h.b16 %v3177
  %v4556 = vunpack.c.l.b16 %v3178
  %v4557 = vunpack.c.h.b16 %v3178
  %v4558 = vunpack.c.l.b16 %v3179
  %v4559 = vunpack.c.l.b16 %v3180
  %v4560 = vunpack.c.h.b16 %v3180
  %v4561 = vunpack.c.l.b16 %v3181
  %v4562 = vunpack.c.h.b16 %v3181
  %v4563 = vunpack.c.l.b16 %v3182
  %v4564 = vunpack.c.h.b16 %v3182
  %v4565 = vunpack.c.l.b16 %v3183
  %v4566 = vunpack.c.l.b16 %v3184
  %v4567 = vunpack.c.h.b16 %v3184
  %v4568 = vunpack.c.l.b16 %v3185
  %v4569 = vunpack.c.h.b16 %v3185
  %v4570 = vunpack.c.l.b16 %v3186
  %v4571 = vunpack.c.h.b16 %v3186
  %v4572 = vunpack.c.l.b16 %v3187
  %v4573 = vunpack.c.l.b16 %v3188
  %v4574 = vunpack.c.h.b16 %v3188
  %v4575 = vunpack.c.l.b16 %v3189
  %v4576 = vunpack.c.h.b16 %v3189
  %v4577 = vunpack.c.l.b16 %v3190
  %v4578 = vunpack.c.h.b16 %v3190
  %v4579 = vunpack.c.l.b16 %v3191
  %v4580 = vunpack.c.l.b16 %v3192
  %v4581 = vunpack.c.h.b16 %v3192
  %v4582 = vunpack.c.l.b16 %v3193
  %v4583 = vunpack.c.h.b16 %v3193
  %v4584 = vunpack.c.l.b16 %v3194
  %v4585 = vunpack.c.h.b16 %v3194
  %v4586 = vunpack.c.l.b16 %v3195
  %v4587 = vunpack.c.l.b16 %v3196
  %v4588 = vunpack.c.h.b16 %v3196
  %v4589 = vunpack.c.l.b16 %v3197
  %v4590 = vunpack.c.h.b16 %v3197
  %v4591 = vunpack.c.l.b16 %v3198
  %v4592 = vunpack.c.h.b16 %v3198
  %v4593 = vunpack.c.l.b16 %v3199
  %v4594 = vunpack.c.l.b16 %v3200
  %v4595 = vunpack.c.h.b16 %v3200
  %v4596 = vunpack.c.l.b16 %v3201
  %v4597 = vunpack.c.h.b16 %v3201
  %v4598 = vunpack.c.l.b16 %v3202
  %v4599 = vunpack.c.h.b16 %v3202
  %v4600 = vunpack.c.l.b16 %v3203
  %v4601 = vunpack.c.l.b16 %v3204
  %v4602 = vunpack.c.h.b16 %v3204
  %v4603 = vunpack.c.l.b16 %v3205
  %v4604 = vunpack.c.h.b16 %v3205
  %v4605 = vunpack.c.l.b16 %v3206
  %v4606 = vunpack.c.h.b16 %v3206
  %v4607 = vunpack.c.l.b16 %v3207
  %v4608 = vunpack.c.l.b16 %v3208
  %v4609 = vunpack.c.h.b16 %v3208
  %v4610 = vunpack.c.l.b16 %v3209
  %v4611 = vunpack.c.h.b16 %v3209
  %v4612 = vunpack.c.l.b16 %v3210
  %v4613 = vunpack.c.h.b16 %v3210
  %v4614 = vunpack.c.l.b16 %v3211
  %v4615 = vunpack.c.l.b16 %v3212
  %v4616 = vunpack.c.h.b16 %v3212
  %v4617 = vunpack.c.l.b16 %v3213
  %v4618 = vunpack.c.h.b16 %v3213
  %v4619 = vunpack.c.l.b16 %v3214
  %v4620 = vunpack.c.h.b16 %v3214
  %v4621 = vunpack.c.l.b16 %v3215
  %v4622 = vunpack.c.l.b16 %v3216
  %v4623 = vunpack.c.h.b16 %v3216
  %v4624 = vunpack.c.l.b16 %v3217
  %v4625 = vunpack.c.h.b16 %v3217
  %v4626 = vunpack.c.l.b16 %v3218
  %v4627 = vunpack.c.h.b16 %v3218
  %v4628 = vunpack.c.l.b16 %v3219
  %v4629 = vunpack.c.l.b16 %v3220
  %v4630 = vunpack.c.h.b16 %v3220
  %v4631 = vunpack.c.l.b16 %v3221
  %v4632 = vunpack.c.h.b16 %v3221
  %v4633 = vunpack.c.l.b16 %v3222
  %v4634 = vunpack.c.h.b16 %v3222
  %v4635 = vunpack.c.l.b16 %v3223
  %v4636 = vunpack.c.l.b16 %v3224
  %v4637 = vunpack.c.h.b16 %v3224
  %v4638 = vunpack.c.l.b16 %v3225
  %v4639 = vunpack.c.h.b16 %v3225
  %v4640 = vunpack.c.l.b16 %v3226
  %v4641 = vunpack.c.h.b16 %v3226
  %v4642 = vunpack.c.l.b16 %v3227
  %v4643 = vunpack.c.l.b16 %v3228
  %v4644 = vunpack.c.h.b16 %v3228
  %v4645 = vunpack.c.l.b16 %v3229
  %v4646 = vunpack.c.h.b16 %v3229
  %v4647 = vunpack.c.l.b16 %v3230
  %v4648 = vunpack.c.h.b16 %v3230
  %v4649 = vunpack.c.l.b16 %v3231
  %v4650 = vunpack.c.l.b16 %v3232
  %v4651 = vunpack.c.h.b16 %v3232
  %v4652 = vunpack.c.l.b16 %v3233
  %v4653 = vunpack.c.h.b16 %v3233
  %v4654 = vunpack.c.l.b16 %v3234
  %v4655 = vunpack.c.h.b16 %v3234
  %v4656 = vunpack.c.l.b16 %v3235
  %v4657 = vunpack.c.l.b16 %v3236
  %v4658 = vunpack.c.h.b16 %v3236
  %v4659 = vunpack.c.l.b16 %v3237
  %v4660 = vunpack.c.h.b16 %v3237
  %v4661 = vunpack.c.l.b16 %v3238
  %v4662 = vunpack.c.h.b16 %v3238
  %v4663 = vunpack.c.l.b16 %v3239
  %v4664 = vpack.c.b16 %v3775, %v3768
  %v4665 = vpack.c.b16 %v3776, %v3769
  %v4666 = vpack.c.b16 %v3777, %v3770
  %v4667 = vpack.c.b16 %v3778, %v3771
  %v4668 = vpack.c.b16 %v3779, %v3772
  %v4669 = vpack.c.b16 %v3780, %v3773
  %v4670 = vpack.c.b16 %v3781, %v3774
  %v4671 = vpack.c.b16 %v3789, %v3782
  %v4672 = vpack.c.b16 %v3790, %v3783
  %v4673 = vpack.c.b16 %v3791, %v3784
  %v4674 = vpack.c.b16 %v3792, %v3785
  %v4675 = vpack.c.b16 %v3793, %v3786
  %v4676 = vpack.c.b16 %v3794, %v3787
  %v4677 = vpack.c.b16 %v3795, %v3788
  %v4678 = vpack.c.b16 %v3803, %v3796
  %v4679 = vpack.c.b16 %v3804, %v3797
  %v4680 = vpack.c.b16 %v3805, %v3798
  %v4681 = vpack.c.b16 %v3806, %v3799
  %v4682 = vpack.c.b16 %v3807, %v3800
  %v4683 = vpack.c.b16 %v3808, %v3801
  %v4684 = vpack.c.b16 %v3809, %v3802
  %v4685 = vpack.c.b16 %v3817, %v3810
  %v4686 = vpack.c.b16 %v3818, %v3811
  %v4687 = vpack.c.b16 %v3819, %v3812
  %v4688 = vpack.c.b16 %v3820, %v3813
  %v4689 = vpack.c.b16 %v3821, %v3814
  %v4690 = vpack.c.b16 %v3822, %v3815
  %v4691 = vpack.c.b16 %v3823, %v3816
  %v4692 = vpack.c.b16 %v3831, %v3824
  %v4693 = vpack.c.b16 %v3832, %v3825
  %v4694 = vpack.c.b16 %v3833, %v3826
  %v4695 = vpack.c.b16 %v3834, %v3827
  %v4696 = vpack.c.b16 %v3835, %v3828
  %v4697 = vpack.c.b16 %v3836, %v3829
  %v4698 = vpack.c.b16 %v3837, %v3830
  %v4699 = vpack.c.b16 %v3845, %v3838
  %v4700 = vpack.c.b16 %v3846, %v3839
  %v4701 = vpack.c.b16 %v3847, %v3840
  %v4702 = vpack.c.b16 %v3848, %v3841
  %v4703 = vpack.c.b16 %v3849, %v3842
  %v4704 = vpack.c.b16 %v3850, %v3843
  %v4705 = vpack.c.b16 %v3851, %v3844
  %v4706 = vpack.c.b16 %v3859, %v3852
  %v4707 = vpack.c.b16 %v3860, %v3853
  %v4708 = vpack.c.b16 %v3861, %v3854
  %v4709 = vpack.c.b16 %v3862, %v3855
  %v4710 = vpack.c.b16 %v3863, %v3856
  %v4711 = vpack.c.b16 %v3864, %v3857
  %v4712 = vpack.c.b16 %v3865, %v3858
  %v4713 = vpack.c.b16 %v3873, %v3866
  %v4714 = vpack.c.b16 %v3874, %v3867
  %v4715 = vpack.c.b16 %v3875, %v3868
  %v4716 = vpack.c.b16 %v3876, %v3869
  %v4717 = vpack.c.b16 %v3877, %v3870
  %v4718 = vpack.c.b16 %v3878, %v3871
  %v4719 = vpack.c.b16 %v3879, %v3872
  %v4720 = vpack.c.b16 %v3887, %v3880
  %v4721 = vpack.c.b16 %v3888, %v3881
  %v4722 = vpack.c.b16 %v3889, %v3882
  %v4723 = vpack.c.b16 %v3890, %v3883
  %v4724 = vpack.c.b16 %v3891, %v3884
  %v4725 = vpack.c.b16 %v3892, %v3885
  %v4726 = vpack.c.b16 %v3893, %v3886
  %v4727 = vpack.c.b16 %v3901, %v3894
  %v4728 = vpack.c.b16 %v3902, %v3895
  %v4729 = vpack.c.b16 %v3903, %v3896
  %v4730 = vpack.c.b16 %v3904, %v3897
  %v4731 = vpack.c.b16 %v3905, %v3898
  %v4732 = vpack.c.b16 %v3906, %v3899
  %v4733 = vpack.c.b16 %v3907, %v3900
  %v4734 = vpack.c.b16 %v3915, %v3908
  %v4735 = vpack.c.b16 %v3916, %v3909
  %v4736 = vpack.c.b16 %v3917, %v3910
  %v4737 = vpack.c.b16 %v3918, %v3911
  %v4738 = vpack.c.b16 %v3919, %v3912
  %v4739 = vpack.c.b16 %v3920, %v3913
  %v4740 = vpack.c.b16 %v3921, %v3914
  %v4741 = vpack.c.b16 %v3929, %v3922
  %v4742 = vpack.c.b16 %v3930, %v3923
  %v4743 = vpack.c.b16 %v3931, %v3924
  %v4744 = vpack.c.b16 %v3932, %v3925
  %v4745 = vpack.c.b16 %v3933, %v3926
  %v4746 = vpack.c.b16 %v3934, %v3927
  %v4747 = vpack.c.b16 %v3935, %v3928
  %v4748 = vpack.c.b16 %v3943, %v3936
  %v4749 = vpack.c.b16 %v3944, %v3937
  %v4750 = vpack.c.b16 %v3945, %v3938
  %v4751 = vpack.c.b16 %v3946, %v3939
  %v4752 = vpack.c.b16 %v3947, %v3940
  %v4753 = vpack.c.b16 %v3948, %v3941
  %v4754 = vpack.c.b16 %v3949, %v3942
  %v4755 = vpack.c.b16 %v3957, %v3950
  %v4756 = vpack.c.b16 %v3958, %v3951
  %v4757 = vpack.c.b16 %v3959, %v3952
  %v4758 = vpack.c.b16 %v3960, %v3953
  %v4759 = vpack.c.b16 %v3961, %v3954
  %v4760 = vpack.c.b16 %v3962, %v3955
  %v4761 = vpack.c.b16 %v3963, %v3956
  %v4762 = vpack.c.b16 %v3971, %v3964
  %v4763 = vpack.c.b16 %v3972, %v3965
  %v4764 = vpack.c.b16 %v3973, %v3966
  %v4765 = vpack.c.b16 %v3974, %v3967
  %v4766 = vpack.c.b16 %v3975, %v3968
  %v4767 = vpack.c.b16 %v3976, %v3969
  %v4768 = vpack.c.b16 %v3977, %v3970
  %v4769 = vpack.c.b16 %v3985, %v3978
  %v4770 = vpack.c.b16 %v3986, %v3979
  %v4771 = vpack.c.b16 %v3987, %v3980
  %v4772 = vpack.c.b16 %v3988, %v3981
  %v4773 = vpack.c.b16 %v3989, %v3982
  %v4774 = vpack.c.b16 %v3990, %v3983
  %v4775 = vpack.c.b16 %v3991, %v3984
  %v4776 = vpack.c.b16 %v3999, %v3992
  %v4777 = vpack.c.b16 %v4000, %v3993
  %v4778 = vpack.c.b16 %v4001, %v3994
  %v4779 = vpack.c.b16 %v4002, %v3995
  %v4780 = vpack.c.b16 %v4003, %v3996
  %v4781 = vpack.c.b16 %v4004, %v3997
  %v4782 = vpack.c.b16 %v4005, %v3998
  %v4783 = vpack.c.b16 %v4013, %v4006
  %v4784 = vpack.c.b16 %v4014, %v4007
  %v4785 = vpack.c.b16 %v4015, %v4008
  %v4786 = vpack.c.b16 %v4016, %v4009
  %v4787 = vpack.c.b16 %v4017, %v4010
  %v4788 = vpack.c.b16 %v4018, %v4011
  %v4789 = vpack.c.b16 %v4019, %v4012
  %v4790 = vpack.c.b16 %v4027, %v4020
  %v4791 = vpack.c.b16 %v4028, %v4021
  %v4792 = vpack.c.b16 %v4029, %v4022
  %v4793 = vpack.c.b16 %v4030, %v4023
  %v4794 = vpack.c.b16 %v4031, %v4024
  %v4795 = vpack.c.b16 %v4032, %v4025
  %v4796 = vpack.c.b16 %v4033, %v4026
  %v4797 = vpack.c.b16 %v4041, %v4034
  %v4798 = vpack.c.b16 %v4042, %v4035
  %v4799 = vpack.c.b16 %v4043, %v4036
  %v4800 = vpack.c.b16 %v4044, %v4037
  %v4801 = vpack.c.b16 %v4045, %v4038
  %v4802 = vpack.c.b16 %v4046, %v4039
  %v4803 = vpack.c.b16 %v4047, %v4040
  %v4804 = vpack.c.b16 %v4055, %v4048
  %v4805 = vpack.c.b16 %v4056, %v4049
  %v4806 = vpack.c.b16 %v4057, %v4050
  %v4807 = vpack.c.b16 %v4058, %v4051
  %v4808 = vpack.c.b16 %v4059, %v4052
  %v4809 = vpack.c.b16 %v4060, %v4053
  %v4810 = vpack.c.b16 %v4061, %v4054
  %v4811 = vpack.c.b16 %v4069, %v4062
  %v4812 = vpack.c.b16 %v4070, %v4063
  %v4813 = vpack.c.b16 %v4071, %v4064
  %v4814 = vpack.c.b16 %v4072, %v4065
  %v4815 = vpack.c.b16 %v4073, %v4066
  %v4816 = vpack.c.b16 %v4074, %v4067
  %v4817 = vpack.c.b16 %v4075, %v4068
  %v4818 = vpack.c.b16 %v4083, %v4076
  %v4819 = vpack.c.b16 %v4084, %v4077
  %v4820 = vpack.c.b16 %v4085, %v4078
  %v4821 = vpack.c.b16 %v4086, %v4079
  %v4822 = vpack.c.b16 %v4087, %v4080
  %v4823 = vpack.c.b16 %v4088, %v4081
  %v4824 = vpack.c.b16 %v4089, %v4082
  %v4825 = vpack.c.b16 %v4097, %v4090
  %v4826 = vpack.c.b16 %v4098, %v4091
  %v4827 = vpack.c.b16 %v4099, %v4092
  %v4828 = vpack.c.b16 %v4100, %v4093
  %v4829 = vpack.c.b16 %v4101, %v4094
  %v4830 = vpack.c.b16 %v4102, %v4095
  %v4831 = vpack.c.b16 %v4103, %v4096
  %v4832 = vpack.c.b16 %v4111, %v4104
  %v4833 = vpack.c.b16 %v4112, %v4105
  %v4834 = vpack.c.b16 %v4113, %v4106
  %v4835 = vpack.c.b16 %v4114, %v4107
  %v4836 = vpack.c.b16 %v4115, %v4108
  %v4837 = vpack.c.b16 %v4116, %v4109
  %v4838 = vpack.c.b16 %v4117, %v4110
  %v4839 = vpack.c.b16 %v4125, %v4118
  %v4840 = vpack.c.b16 %v4126, %v4119
  %v4841 = vpack.c.b16 %v4127, %v4120
  %v4842 = vpack.c.b16 %v4128, %v4121
  %v4843 = vpack.c.b16 %v4129, %v4122
  %v4844 = vpack.c.b16 %v4130, %v4123
  %v4845 = vpack.c.b16 %v4131, %v4124
  %v4846 = vpack.c.b16 %v4139, %v4132
  %v4847 = vpack.c.b16 %v4140, %v4133
  %v4848 = vpack.c.b16 %v4141, %v4134
  %v4849 = vpack.c.b16 %v4142, %v4135
  %v4850 = vpack.c.b16 %v4143, %v4136
  %v4851 = vpack.c.b16 %v4144, %v4137
  %v4852 = vpack.c.b16 %v4145, %v4138
  %v4853 = vpack.c.b16 %v4153, %v4146
  %v4854 = vpack.c.b16 %v4154, %v4147
  %v4855 = vpack.c.b16 %v4155, %v4148
  %v4856 = vpack.c.b16 %v4156, %v4149
  %v4857 = vpack.c.b16 %v4157, %v4150
  %v4858 = vpack.c.b16 %v4158, %v4151
  %v4859 = vpack.c.b16 %v4159, %v4152
  %v4860 = vpack.c.b16 %v4167, %v4160
  %v4861 = vpack.c.b16 %v4168, %v4161
  %v4862 = vpack.c.b16 %v4169, %v4162
  %v4863 = vpack.c.b16 %v4170, %v4163
  %v4864 = vpack.c.b16 %v4171, %v4164
  %v4865 = vpack.c.b16 %v4172, %v4165
  %v4866 = vpack.c.b16 %v4173, %v4166
  %v4867 = vpack.c.b16 %v4181, %v4174
  %v4868 = vpack.c.b16 %v4182, %v4175
  %v4869 = vpack.c.b16 %v4183, %v4176
  %v4870 = vpack.c.b16 %v4184, %v4177
  %v4871 = vpack.c.b16 %v4185, %v4178
  %v4872 = vpack.c.b16 %v4186, %v4179
  %v4873 = vpack.c.b16 %v4187, %v4180
  %v4874 = vpack.c.b16 %v4195, %v4188
  %v4875 = vpack.c.b16 %v4196, %v4189
  %v4876 = vpack.c.b16 %v4197, %v4190
  %v4877 = vpack.c.b16 %v4198, %v4191
  %v4878 = vpack.c.b16 %v4199, %v4192
  %v4879 = vpack.c.b16 %v4200, %v4193
  %v4880 = vpack.c.b16 %v4201, %v4194
  %v4881 = vpack.c.b16 %v4209, %v4202
  %v4882 = vpack.c.b16 %v4210, %v4203
  %v4883 = vpack.c.b16 %v4211, %v4204
  %v4884 = vpack.c.b16 %v4212, %v4205
  %v4885 = vpack.c.b16 %v4213, %v4206
  %v4886 = vpack.c.b16 %v4214, %v4207
  %v4887 = vpack.c.b16 %v4215, %v4208
  %v4888 = vpack.c.b16 %v4223, %v4216
  %v4889 = vpack.c.b16 %v4224, %v4217
  %v4890 = vpack.c.b16 %v4225, %v4218
  %v4891 = vpack.c.b16 %v4226, %v4219
  %v4892 = vpack.c.b16 %v4227, %v4220
  %v4893 = vpack.c.b16 %v4228, %v4221
  %v4894 = vpack.c.b16 %v4229, %v4222
  %v4895 = vpack.c.b16 %v4237, %v4230
  %v4896 = vpack.c.b16 %v4238, %v4231
  %v4897 = vpack.c.b16 %v4239, %v4232
  %v4898 = vpack.c.b16 %v4240, %v4233
  %v4899 = vpack.c.b16 %v4241, %v4234
  %v4900 = vpack.c.b16 %v4242, %v4235
  %v4901 = vpack.c.b16 %v4243, %v4236
  %v4902 = vpack.c.b16 %v4251, %v4244
  %v4903 = vpack.c.b16 %v4252, %v4245
  %v4904 = vpack.c.b16 %v4253, %v4246
  %v4905 = vpack.c.b16 %v4254, %v4247
  %v4906 = vpack.c.b16 %v4255, %v4248
  %v4907 = vpack.c.b16 %v4256, %v4249
  %v4908 = vpack.c.b16 %v4257, %v4250
  %v4909 = vpack.c.b16 %v4265, %v4258
  %v4910 = vpack.c.b16 %v4266, %v4259
  %v4911 = vpack.c.b16 %v4267, %v4260
  %v4912 = vpack.c.b16 %v4268, %v4261
  %v4913 = vpack.c.b16 %v4269, %v4262
  %v4914 = vpack.c.b16 %v4270, %v4263
  %v4915 = vpack.c.b16 %v4271, %v4264
  %v4916 = vpack.c.b16 %v4279, %v4272
  %v4917 = vpack.c.b16 %v4280, %v4273
  %v4918 = vpack.c.b16 %v4281, %v4274
  %v4919 = vpack.c.b16 %v4282, %v4275
  %v4920 = vpack.c.b16 %v4283, %v4276
  %v4921 = vpack.c.b16 %v4284, %v4277
  %v4922 = vpack.c.b16 %v4285, %v4278
  %v4923 = vpack.c.b16 %v4293, %v4286
  %v4924 = vpack.c.b16 %v4294, %v4287
  %v4925 = vpack.c.b16 %v4295, %v4288
  %v4926 = vpack.c.b16 %v4296, %v4289
  %v4927 = vpack.c.b16 %v4297, %v4290
  %v4928 = vpack.c.b16 %v4298, %v4291
  %v4929 = vpack.c.b16 %v4299, %v4292
  %v4930 = vpack.c.b16 %v4307, %v4300
  %v4931 = vpack.c.b16 %v4308, %v4301
  %v4932 = vpack.c.b16 %v4309, %v4302
  %v4933 = vpack.c.b16 %v4310, %v4303
  %v4934 = vpack.c.b16 %v4311, %v4304
  %v4935 = vpack.c.b16 %v4312, %v4305
  %v4936 = vpack.c.b16 %v4313, %v4306
  %v4937 = vpack.c.b16 %v4321, %v4314
  %v4938 = vpack.c.b16 %v4322, %v4315
  %v4939 = vpack.c.b16 %v4323, %v4316
  %v4940 = vpack.c.b16 %v4324, %v4317
  %v4941 = vpack.c.b16 %v4325, %v4318
  %v4942 = vpack.c.b16 %v4326, %v4319
  %v4943 = vpack.c.b16 %v4327, %v4320
  %v4944 = vpack.c.b16 %v4335, %v4328
  %v4945 = vpack.c.b16 %v4336, %v4329
  %v4946 = vpack.c.b16 %v4337, %v4330
  %v4947 = vpack.c.b16 %v4338, %v4331
  %v4948 = vpack.c.b16 %v4339, %v4332
  %v4949 = vpack.c.b16 %v4340, %v4333
  %v4950 = vpack.c.b16 %v4341, %v4334
  %v4951 = vpack.c.b16 %v4349, %v4342
  %v4952 = vpack.c.b16 %v4350, %v4343
  %v4953 = vpack.c.b16 %v4351, %v4344
  %v4954 = vpack.c.b16 %v4352, %v4345
  %v4955 = vpack.c.b16 %v4353, %v4346
  %v4956 = vpack.c.b16 %v4354, %v4347
  %v4957 = vpack.c.b16 %v4355, %v4348
  %v4958 = vpack.c.b16 %v4363, %v4356
  %v4959 = vpack.c.b16 %v4364, %v4357
  %v4960 = vpack.c.b16 %v4365, %v4358
  %v4961 = vpack.c.b16 %v4366, %v4359
  %v4962 = vpack.c.b16 %v4367, %v4360
  %v4963 = vpack.c.b16 %v4368, %v4361
  %v4964 = vpack.c.b16 %v4369, %v4362
  %v4965 = vpack.c.b16 %v4377, %v4370
  %v4966 = vpack.c.b16 %v4378, %v4371
  %v4967 = vpack.c.b16 %v4379, %v4372
  %v4968 = vpack.c.b16 %v4380, %v4373
  %v4969 = vpack.c.b16 %v4381, %v4374
  %v4970 = vpack.c.b16 %v4382, %v4375
  %v4971 = vpack.c.b16 %v4383, %v4376
  %v4972 = vpack.c.b16 %v4391, %v4384
  %v4973 = vpack.c.b16 %v4392, %v4385
  %v4974 = vpack.c.b16 %v4393, %v4386
  %v4975 = vpack.c.b16 %v4394, %v4387
  %v4976 = vpack.c.b16 %v4395, %v4388
  %v4977 = vpack.c.b16 %v4396, %v4389
  %v4978 = vpack.c.b16 %v4397, %v4390
  %v4979 = vpack.c.b16 %v4405, %v4398
  %v4980 = vpack.c.b16 %v4406, %v4399
  %v4981 = vpack.c.b16 %v4407, %v4400
  %v4982 = vpack.c.b16 %v4408, %v4401
  %v4983 = vpack.c.b16 %v4409, %v4402
  %v4984 = vpack.c.b16 %v4410, %v4403
  %v4985 = vpack.c.b16 %v4411, %v4404
  %v4986 = vpack.c.b16 %v4419, %v4412
  %v4987 = vpack.c.b16 %v4420, %v4413
  %v4988 = vpack.c.b16 %v4421, %v4414
  %v4989 = vpack.c.b16 %v4422, %v4415
  %v4990 = vpack.c.b16 %v4423, %v4416
  %v4991 = vpack.c.b16 %v4424, %v4417
  %v4992 = vpack.c.b16 %v4425, %v4418
  %v4993 = vpack.c.b16 %v4433, %v4426
  %v4994 = vpack.c.b16 %v4434, %v4427
  %v4995 = vpack.c.b16 %v4435, %v4428
  %v4996 = vpack.c.b16 %v4436, %v4429
  %v4997 = vpack.c.b16 %v4437, %v4430
  %v4998 = vpack.c.b16 %v4438, %v4431
  %v4999 = vpack.c.b16 %v4439, %v4432
  %v5000 = vpack.c.b16 %v4447, %v4440
  %v5001 = vpack.c.b16 %v4448, %v4441
  %v5002 = vpack.c.b16 %v4449, %v4442
  %v5003 = vpack.c.b16 %v4450, %v4443
  %v5004 = vpack.c.b16 %v4451, %v4444
  %v5005 = vpack.c.b16 %v4452, %v4445
  %v5006 = vpack.c.b16 %v4453, %v4446
  %v5007 = vpack.c.b16 %v4461, %v4454
  %v5008 = vpack.c.b16 %v4462, %v4455
  %v5009 = vpack.c.b16 %v4463, %v4456
  %v5010 = vpack.c.b16 %v4464, %v4457
  %v5011 = vpack.c.b16 %v4465, %v4458
  %v5012 = vpack.c.b16 %v4466, %v4459
  %v5013 = vpack.c.b16 %v4467, %v4460
  %v5014 = vpack.c.b16 %v4475, %v4468
  %v5015 = vpack.c.b16 %v4476, %v4469
  %v5016 = vpack.c.b16 %v4477, %v4470
  %v5017 = vpack.c.b16 %v4478, %v4471
  %v5018 = vpack.c.b16 %v4479, %v4472
  %v5019 = vpack.c.b16 %v4480, %v4473
  %v5020 = vpack.c.b16 %v4481, %v4474
  %v5021 = vpack.c.b16 %v4489, %v4482
  %v5022 = vpack.c.b16 %v4490, %v4483
  %v5023 = vpack.c.b16 %v4491, %v4484
  %v5024 = vpack.c.b16 %v4492, %v4485
  %v5025 = vpack.c.b16 %v4493, %v4486
  %v5026 = vpack.c.b16 %v4494, %v4487
  %v5027 = vpack.c.b16 %v4495, %v4488
  %v5028 = vpack.c.b16 %v4503, %v4496
  %v5029 = vpack.c.b16 %v4504, %v4497
  %v5030 = vpack.c.b16 %v4505, %v4498
  %v5031 = vpack.c.b16 %v4506, %v4499
  %v5032 = vpack.c.b16 %v4507, %v4500
  %v5033 = vpack.c.b16 %v4508, %v4501
  %v5034 = vpack.c.b16 %v4509, %v4502
  %v5035 = vpack.c.b16 %v4517, %v4510
  %v5036 = vpack.c.b16 %v4518, %v4511
  %v5037 = vpack.c.b16 %v4519, %v4512
  %v5038 = vpack.c.b16 %v4520, %v4513
  %v5039 = vpack.c.b16 %v4521, %v4514
  %v5040 = vpack.c.b16 %v4522, %v4515
  %v5041 = vpack.c.b16 %v4523, %v4516
  %v5042 = vpack.c.b16 %v4531, %v4524
  %v5043 = vpack.c.b16 %v4532, %v4525
  %v5044 = vpack.c.b16 %v4533, %v4526
  %v5045 = vpack.c.b16 %v4534, %v4527
  %v5046 = vpack.c.b16 %v4535, %v4528
  %v5047 = vpack.c.b16 %v4536, %v4529
  %v5048 = vpack.c.b16 %v4537, %v4530
  %v5049 = vpack.c.b16 %v4545, %v4538
  %v5050 = vpack.c.b16 %v4546, %v4539
  %v5051 = vpack.c.b16 %v4547, %v4540
  %v5052 = vpack.c.b16 %v4548, %v4541
  %v5053 = vpack.c.b16 %v4549, %v4542
  %v5054 = vpack.c.b16 %v4550, %v4543
  %v5055 = vpack.c.b16 %v4551, %v4544
  %v5056 = vpack.c.b16 %v4559, %v4552
  %v5057 = vpack.c.b16 %v4560, %v4553
  %v5058 = vpack.c.b16 %v4561, %v4554
  %v5059 = vpack.c.b16 %v4562, %v4555
  %v5060 = vpack.c.b16 %v4563, %v4556
  %v5061 = vpack.c.b16 %v4564, %v4557
  %v5062 = vpack.c.b16 %v4565, %v4558
  %v5063 = vpack.c.b16 %v4573, %v4566
  %v5064 = vpack.c.b16 %v4574, %v4567
  %v5065 = vpack.c.b16 %v4575, %v4568
  %v5066 = vpack.c.b16 %v4576, %v4569
  %v5067 = vpack.c.b16 %v4577, %v4570
  %v5068 = vpack.c.b16 %v4578, %v4571
  %v5069 = vpack.c.b16 %v4579, %v4572
  %v5070 = vpack.c.b16 %v4587, %v4580
  %v5071 = vpack.c.b16 %v4588, %v4581
  %v5072 = vpack.c.b16 %v4589, %v4582
  %v5073 = vpack.c.b16 %v4590, %v4583
  %v5074 = vpack.c.b16 %v4591, %v4584
  %v5075 = vpack.c.b16 %v4592, %v4585
  %v5076 = vpack.c.b16 %v4593, %v4586
  %v5077 = vpack.c.b16 %v4601, %v4594
  %v5078 = vpack.c.b16 %v4602, %v4595
  %v5079 = vpack.c.b16 %v4603, %v4596
  %v5080 = vpack.c.b16 %v4604, %v4597
  %v5081 = vpack.c.b16 %v4605, %v4598
  %v5082 = vpack.c.b16 %v4606, %v4599
  %v5083 = vpack.c.b16 %v4607, %v4600
  %v5084 = vpack.c.b16 %v4615, %v4608
  %v5085 = vpack.c.b16 %v4616, %v4609
  %v5086 = vpack.c.b16 %v4617, %v4610
  %v5087 = vpack.c.b16 %v4618, %v4611
  %v5088 = vpack.c.b16 %v4619, %v4612
  %v5089 = vpack.c.b16 %v4620, %v4613
  %v5090 = vpack.c.b16 %v4621, %v4614
  %v5091 = vpack.c.b16 %v4629, %v4622
  %v5092 = vpack.c.b16 %v4630, %v4623
  %v5093 = vpack.c.b16 %v4631, %v4624
  %v5094 = vpack.c.b16 %v4632, %v4625
  %v5095 = vpack.c.b16 %v4633, %v4626
  %v5096 = vpack.c.b16 %v4634, %v4627
  %v5097 = vpack.c.b16 %v4635, %v4628
  %v5098 = vpack.c.b16 %v4643, %v4636
  %v5099 = vpack.c.b16 %v4644, %v4637
  %v5100 = vpack.c.b16 %v4645, %v4638
  %v5101 = vpack.c.b16 %v4646, %v4639
  %v5102 = vpack.c.b16 %v4647, %v4640
  %v5103 = vpack.c.b16 %v4648, %v4641
  %v5104 = vpack.c.b16 %v4649, %v4642
  %v5105 = vpack.c.b16 %v4657, %v4650
  %v5106 = vpack.c.b16 %v4658, %v4651
  %v5107 = vpack.c.b16 %v4659, %v4652
  %v5108 = vpack.c.b16 %v4660, %v4653
  %v5109 = vpack.c.b16 %v4661, %v4654
  %v5110 = vpack.c.b16 %v4662, %v4655
  %v5111 = vpack.c.b16 %v4663, %v4656
  %5560 = vmatpush.bf16.msra.mxu0 %v4713
  %5561 = vmatpush.bf16.msra.mxu0 %v4706
  %5562 = vmatpush.bf16.msra.mxu0 %v4699
  %5563 = vmatpush.bf16.msra.mxu0 %v4692
  %5564 = vmatpush.bf16.msra.mxu0 %v4685
  %5565 = vmatpush.bf16.msra.mxu0 %v4678
  %5566 = vmatpush.bf16.msra.mxu0 %v4671
  %5567 = vmatpush.bf16.msra.mxu0 %v4664
  %5568 = vmatmul.bf16.gmra.mxu0 %v2720
  %v5569 = vpop.f32.mrf.mxu0
  %v5570 = vadd.f32 %v3242, %v5569
  %v5571 = vpop.f32.mrf.mxu0
  %v5572 = vadd.f32 %v3242, %v5571
  %5573 = vdwg.mxu0
  %5574 = vmatpush.bf16.msra.mxu0 %v4769
  %5575 = vmatpush.bf16.msra.mxu0 %v4762
  %5576 = vmatpush.bf16.msra.mxu0 %v4755
  %5577 = vmatpush.bf16.msra.mxu0 %v4748
  %5578 = vmatpush.bf16.msra.mxu0 %v4741
  %5579 = vmatpush.bf16.msra.mxu0 %v4734
  %5580 = vmatpush.bf16.msra.mxu0 %v4727
  %5581 = vmatpush.bf16.msra.mxu0 %v4720
  %5582 = vmatmul.bf16.gmra.mxu0 %v2721
  %v5583 = vpop.f32.mrf.mxu0
  %v5584 = vadd.f32 %v5570, %v5583
  %v5585 = vpop.f32.mrf.mxu0
  %v5586 = vadd.f32 %v5572, %v5585
  %5587 = vdwg.mxu0
  %5588 = vmatpush.bf16.msra.mxu0 %v4825
  %5589 = vmatpush.bf16.msra.mxu0 %v4818
  %5590 = vmatpush.bf16.msra.mxu0 %v4811
  %5591 = vmatpush.bf16.msra.mxu0 %v4804
  %5592 = vmatpush.bf16.msra.mxu0 %v4797
  %5593 = vmatpush.bf16.msra.mxu0 %v4790
  %5594 = vmatpush.bf16.msra.mxu0 %v4783
  %5595 = vmatpush.bf16.msra.mxu0 %v4776
  %5596 = vmatmul.bf16.gmra.mxu0 %v2722
  %v5597 = vpop.f32.mrf.mxu0
  %v5598 = vadd.f32 %v5584, %v5597
  %v5599 = vpop.f32.mrf.mxu0
  %v5600 = vadd.f32 %v5586, %v5599
  %5601 = vdwg.mxu0
  %5602 = vmatpush.bf16.msra.mxu0 %v4881
  %5603 = vmatpush.bf16.msra.mxu0 %v4874
  %5604 = vmatpush.bf16.msra.mxu0 %v4867
  %5605 = vmatpush.bf16.msra.mxu0 %v4860
  %5606 = vmatpush.bf16.msra.mxu0 %v4853
  %5607 = vmatpush.bf16.msra.mxu0 %v4846
  %5608 = vmatpush.bf16.msra.mxu0 %v4839
  %5609 = vmatpush.bf16.msra.mxu0 %v4832
  %5610 = vmatmul.bf16.gmra.mxu0 %v2723
  %v5611 = vpop.f32.mrf.mxu0
  %v5612 = vadd.f32 %v5598, %v5611
  %v5613 = vpop.f32.mrf.mxu0
  %v5614 = vadd.f32 %v5600, %v5613
  %5615 = vdwg.mxu0
  %5616 = vmatpush.bf16.msra.mxu0 %v4937
  %5617 = vmatpush.bf16.msra.mxu0 %v4930
  %5618 = vmatpush.bf16.msra.mxu0 %v4923
  %5619 = vmatpush.bf16.msra.mxu0 %v4916
  %5620 = vmatpush.bf16.msra.mxu0 %v4909
  %5621 = vmatpush.bf16.msra.mxu0 %v4902
  %5622 = vmatpush.bf16.msra.mxu0 %v4895
  %5623 = vmatpush.bf16.msra.mxu0 %v4888
  %5624 = vmatmul.bf16.gmra.mxu0 %v2724
  %v5625 = vpop.f32.mrf.mxu0
  %v5626 = vadd.f32 %v5612, %v5625
  %v5627 = vpop.f32.mrf.mxu0
  %v5628 = vadd.f32 %v5614, %v5627
  %5629 = vdwg.mxu0
  %5630 = vmatpush.bf16.msra.mxu0 %v4993
  %5631 = vmatpush.bf16.msra.mxu0 %v4986
  %5632 = vmatpush.bf16.msra.mxu0 %v4979
  %5633 = vmatpush.bf16.msra.mxu0 %v4972
  %5634 = vmatpush.bf16.msra.mxu0 %v4965
  %5635 = vmatpush.bf16.msra.mxu0 %v4958
  %5636 = vmatpush.bf16.msra.mxu0 %v4951
  %5637 = vmatpush.bf16.msra.mxu0 %v4944
  %5638 = vmatmul.bf16.gmra.mxu0 %v2725
  %v5639 = vpop.f32.mrf.mxu0
  %v5640 = vadd.f32 %v5626, %v5639
  %v5641 = vpop.f32.mrf.mxu0
  %v5642 = vadd.f32 %v5628, %v5641
  %5643 = vdwg.mxu0
  %5644 = vmatpush.bf16.msra.mxu0 %v5049
  %5645 = vmatpush.bf16.msra.mxu0 %v5042
  %5646 = vmatpush.bf16.msra.mxu0 %v5035
  %5647 = vmatpush.bf16.msra.mxu0 %v5028
  %5648 = vmatpush.bf16.msra.mxu0 %v5021
  %5649 = vmatpush.bf16.msra.mxu0 %v5014
  %5650 = vmatpush.bf16.msra.mxu0 %v5007
  %5651 = vmatpush.bf16.msra.mxu0 %v5000
  %5652 = vmatmul.bf16.gmra.mxu0 %v2726
  %v5653 = vpop.f32.mrf.mxu0
  %v5654 = vadd.f32 %v5640, %v5653
  %v5655 = vpop.f32.mrf.mxu0
  %v5656 = vadd.f32 %v5642, %v5655
  %5657 = vdwg.mxu0
  %5658 = vmatpush.bf16.msra.mxu0 %v5105
  %5659 = vmatpush.bf16.msra.mxu0 %v5098
  %5660 = vmatpush.bf16.msra.mxu0 %v5091
  %5661 = vmatpush.bf16.msra.mxu0 %v5084
  %5662 = vmatpush.bf16.msra.mxu0 %v5077
  %5663 = vmatpush.bf16.msra.mxu0 %v5070
  %5664 = vmatpush.bf16.msra.mxu0 %v5063
  %5665 = vmatpush.bf16.msra.mxu0 %v5056
  %5666 = vmatmul.bf16.gmra.mxu0 %v2727
  %v5667 = vpop.f32.mrf.mxu0
  %v5668 = vadd.f32 %v5654, %v5667
  %v5669 = vpop.f32.mrf.mxu0
  %v5670 = vadd.f32 %v5656, %v5669
  %5671 = vdwg.mxu0
  %5672 = vmatpush.bf16.msra.mxu0 %v4714
  %5673 = vmatpush.bf16.msra.mxu0 %v4707
  %5674 = vmatpush.bf16.msra.mxu0 %v4700
  %5675 = vmatpush.bf16.msra.mxu0 %v4693
  %5676 = vmatpush.bf16.msra.mxu0 %v4686
  %5677 = vmatpush.bf16.msra.mxu0 %v4679
  %5678 = vmatpush.bf16.msra.mxu0 %v4672
  %5679 = vmatpush.bf16.msra.mxu0 %v4665
  %5680 = vmatmul.bf16.gmra.mxu0 %v2720
  %v5681 = vpop.f32.mrf.mxu0
  %v5682 = vadd.f32 %v3243, %v5681
  %v5683 = vpop.f32.mrf.mxu0
  %v5684 = vadd.f32 %v3243, %v5683
  %5685 = vdwg.mxu0
  %5686 = vmatpush.bf16.msra.mxu0 %v4770
  %5687 = vmatpush.bf16.msra.mxu0 %v4763
  %5688 = vmatpush.bf16.msra.mxu0 %v4756
  %5689 = vmatpush.bf16.msra.mxu0 %v4749
  %5690 = vmatpush.bf16.msra.mxu0 %v4742
  %5691 = vmatpush.bf16.msra.mxu0 %v4735
  %5692 = vmatpush.bf16.msra.mxu0 %v4728
  %5693 = vmatpush.bf16.msra.mxu0 %v4721
  %5694 = vmatmul.bf16.gmra.mxu0 %v2721
  %v5695 = vpop.f32.mrf.mxu0
  %v5696 = vadd.f32 %v5682, %v5695
  %v5697 = vpop.f32.mrf.mxu0
  %v5698 = vadd.f32 %v5684, %v5697
  %5699 = vdwg.mxu0
  %5700 = vmatpush.bf16.msra.mxu0 %v4826
  %5701 = vmatpush.bf16.msra.mxu0 %v4819
  %5702 = vmatpush.bf16.msra.mxu0 %v4812
  %5703 = vmatpush.bf16.msra.mxu0 %v4805
  %5704 = vmatpush.bf16.msra.mxu0 %v4798
  %5705 = vmatpush.bf16.msra.mxu0 %v4791
  %5706 = vmatpush.bf16.msra.mxu0 %v4784
  %5707 = vmatpush.bf16.msra.mxu0 %v4777
  %5708 = vmatmul.bf16.gmra.mxu0 %v2722
  %v5709 = vpop.f32.mrf.mxu0
  %v5710 = vadd.f32 %v5696, %v5709
  %v5711 = vpop.f32.mrf.mxu0
  %v5712 = vadd.f32 %v5698, %v5711
  %5713 = vdwg.mxu0
  %5714 = vmatpush.bf16.msra.mxu0 %v4882
  %5715 = vmatpush.bf16.msra.mxu0 %v4875
  %5716 = vmatpush.bf16.msra.mxu0 %v4868
  %5717 = vmatpush.bf16.msra.mxu0 %v4861
  %5718 = vmatpush.bf16.msra.mxu0 %v4854
  %5719 = vmatpush.bf16.msra.mxu0 %v4847
  %5720 = vmatpush.bf16.msra.mxu0 %v4840
  %5721 = vmatpush.bf16.msra.mxu0 %v4833
  %5722 = vmatmul.bf16.gmra.mxu0 %v2723
  %v5723 = vpop.f32.mrf.mxu0
  %v5724 = vadd.f32 %v5710, %v5723
  %v5725 = vpop.f32.mrf.mxu0
  %v5726 = vadd.f32 %v5712, %v5725
  %5727 = vdwg.mxu0
  %5728 = vmatpush.bf16.msra.mxu0 %v4938
  %5729 = vmatpush.bf16.msra.mxu0 %v4931
  %5730 = vmatpush.bf16.msra.mxu0 %v4924
  %5731 = vmatpush.bf16.msra.mxu0 %v4917
  %5732 = vmatpush.bf16.msra.mxu0 %v4910
  %5733 = vmatpush.bf16.msra.mxu0 %v4903
  %5734 = vmatpush.bf16.msra.mxu0 %v4896
  %5735 = vmatpush.bf16.msra.mxu0 %v4889
  %5736 = vmatmul.bf16.gmra.mxu0 %v2724
  %v5737 = vpop.f32.mrf.mxu0
  %v5738 = vadd.f32 %v5724, %v5737
  %v5739 = vpop.f32.mrf.mxu0
  %v5740 = vadd.f32 %v5726, %v5739
  %5741 = vdwg.mxu0
  %5742 = vmatpush.bf16.msra.mxu0 %v4994
  %5743 = vmatpush.bf16.msra.mxu0 %v4987
  %5744 = vmatpush.bf16.msra.mxu0 %v4980
  %5745 = vmatpush.bf16.msra.mxu0 %v4973
  %5746 = vmatpush.bf16.msra.mxu0 %v4966
  %5747 = vmatpush.bf16.msra.mxu0 %v4959
  %5748 = vmatpush.bf16.msra.mxu0 %v4952
  %5749 = vmatpush.bf16.msra.mxu0 %v4945
  %5750 = vmatmul.bf16.gmra.mxu0 %v2725
  %v5751 = vpop.f32.mrf.mxu0
  %v5752 = vadd.f32 %v5738, %v5751
  %v5753 = vpop.f32.mrf.mxu0
  %v5754 = vadd.f32 %v5740, %v5753
  %5755 = vdwg.mxu0
  %5756 = vmatpush.bf16.msra.mxu0 %v5050
  %5757 = vmatpush.bf16.msra.mxu0 %v5043
  %5758 = vmatpush.bf16.msra.mxu0 %v5036
  %5759 = vmatpush.bf16.msra.mxu0 %v5029
  %5760 = vmatpush.bf16.msra.mxu0 %v5022
  %5761 = vmatpush.bf16.msra.mxu0 %v5015
  %5762 = vmatpush.bf16.msra.mxu0 %v5008
  %5763 = vmatpush.bf16.msra.mxu0 %v5001
  %5764 = vmatmul.bf16.gmra.mxu0 %v2726
  %v5765 = vpop.f32.mrf.mxu0
  %v5766 = vadd.f32 %v5752, %v5765
  %v5767 = vpop.f32.mrf.mxu0
  %v5768 = vadd.f32 %v5754, %v5767
  %5769 = vdwg.mxu0
  %5770 = vmatpush.bf16.msra.mxu0 %v5106
  %5771 = vmatpush.bf16.msra.mxu0 %v5099
  %5772 = vmatpush.bf16.msra.mxu0 %v5092
  %5773 = vmatpush.bf16.msra.mxu0 %v5085
  %5774 = vmatpush.bf16.msra.mxu0 %v5078
  %5775 = vmatpush.bf16.msra.mxu0 %v5071
  %5776 = vmatpush.bf16.msra.mxu0 %v5064
  %5777 = vmatpush.bf16.msra.mxu0 %v5057
  %5778 = vmatmul.bf16.gmra.mxu0 %v2727
  %v5779 = vpop.f32.mrf.mxu0
  %v5780 = vadd.f32 %v5766, %v5779
  %v5781 = vpop.f32.mrf.mxu0
  %v5782 = vadd.f32 %v5768, %v5781
  %5783 = vdwg.mxu0
  %5784 = vmatpush.bf16.msra.mxu0 %v4715
  %5785 = vmatpush.bf16.msra.mxu0 %v4708
  %5786 = vmatpush.bf16.msra.mxu0 %v4701
  %5787 = vmatpush.bf16.msra.mxu0 %v4694
  %5788 = vmatpush.bf16.msra.mxu0 %v4687
  %5789 = vmatpush.bf16.msra.mxu0 %v4680
  %5790 = vmatpush.bf16.msra.mxu0 %v4673
  %5791 = vmatpush.bf16.msra.mxu0 %v4666
  %5792 = vmatmul.bf16.gmra.mxu0 %v2720
  %v5793 = vpop.f32.mrf.mxu0
  %v5794 = vadd.f32 %v3244, %v5793
  %v5795 = vpop.f32.mrf.mxu0
  %v5796 = vadd.f32 %v3244, %v5795
  %5797 = vdwg.mxu0
  %5798 = vmatpush.bf16.msra.mxu0 %v4771
  %5799 = vmatpush.bf16.msra.mxu0 %v4764
  %5800 = vmatpush.bf16.msra.mxu0 %v4757
  %5801 = vmatpush.bf16.msra.mxu0 %v4750
  %5802 = vmatpush.bf16.msra.mxu0 %v4743
  %5803 = vmatpush.bf16.msra.mxu0 %v4736
  %5804 = vmatpush.bf16.msra.mxu0 %v4729
  %5805 = vmatpush.bf16.msra.mxu0 %v4722
  %5806 = vmatmul.bf16.gmra.mxu0 %v2721
  %v5807 = vpop.f32.mrf.mxu0
  %v5808 = vadd.f32 %v5794, %v5807
  %v5809 = vpop.f32.mrf.mxu0
  %v5810 = vadd.f32 %v5796, %v5809
  %5811 = vdwg.mxu0
  %5812 = vmatpush.bf16.msra.mxu0 %v4827
  %5813 = vmatpush.bf16.msra.mxu0 %v4820
  %5814 = vmatpush.bf16.msra.mxu0 %v4813
  %5815 = vmatpush.bf16.msra.mxu0 %v4806
  %5816 = vmatpush.bf16.msra.mxu0 %v4799
  %5817 = vmatpush.bf16.msra.mxu0 %v4792
  %5818 = vmatpush.bf16.msra.mxu0 %v4785
  %5819 = vmatpush.bf16.msra.mxu0 %v4778
  %5820 = vmatmul.bf16.gmra.mxu0 %v2722
  %v5821 = vpop.f32.mrf.mxu0
  %v5822 = vadd.f32 %v5808, %v5821
  %v5823 = vpop.f32.mrf.mxu0
  %v5824 = vadd.f32 %v5810, %v5823
  %5825 = vdwg.mxu0
  %5826 = vmatpush.bf16.msra.mxu0 %v4883
  %5827 = vmatpush.bf16.msra.mxu0 %v4876
  %5828 = vmatpush.bf16.msra.mxu0 %v4869
  %5829 = vmatpush.bf16.msra.mxu0 %v4862
  %5830 = vmatpush.bf16.msra.mxu0 %v4855
  %5831 = vmatpush.bf16.msra.mxu0 %v4848
  %5832 = vmatpush.bf16.msra.mxu0 %v4841
  %5833 = vmatpush.bf16.msra.mxu0 %v4834
  %5834 = vmatmul.bf16.gmra.mxu0 %v2723
  %v5835 = vpop.f32.mrf.mxu0
  %v5836 = vadd.f32 %v5822, %v5835
  %v5837 = vpop.f32.mrf.mxu0
  %v5838 = vadd.f32 %v5824, %v5837
  %5839 = vdwg.mxu0
  %5840 = vmatpush.bf16.msra.mxu0 %v4939
  %5841 = vmatpush.bf16.msra.mxu0 %v4932
  %5842 = vmatpush.bf16.msra.mxu0 %v4925
  %5843 = vmatpush.bf16.msra.mxu0 %v4918
  %5844 = vmatpush.bf16.msra.mxu0 %v4911
  %5845 = vmatpush.bf16.msra.mxu0 %v4904
  %5846 = vmatpush.bf16.msra.mxu0 %v4897
  %5847 = vmatpush.bf16.msra.mxu0 %v4890
  %5848 = vmatmul.bf16.gmra.mxu0 %v2724
  %v5849 = vpop.f32.mrf.mxu0
  %v5850 = vadd.f32 %v5836, %v5849
  %v5851 = vpop.f32.mrf.mxu0
  %v5852 = vadd.f32 %v5838, %v5851
  %5853 = vdwg.mxu0
  %5854 = vmatpush.bf16.msra.mxu0 %v4995
  %5855 = vmatpush.bf16.msra.mxu0 %v4988
  %5856 = vmatpush.bf16.msra.mxu0 %v4981
  %5857 = vmatpush.bf16.msra.mxu0 %v4974
  %5858 = vmatpush.bf16.msra.mxu0 %v4967
  %5859 = vmatpush.bf16.msra.mxu0 %v4960
  %5860 = vmatpush.bf16.msra.mxu0 %v4953
  %5861 = vmatpush.bf16.msra.mxu0 %v4946
  %5862 = vmatmul.bf16.gmra.mxu0 %v2725
  %v5863 = vpop.f32.mrf.mxu0
  %v5864 = vadd.f32 %v5850, %v5863
  %v5865 = vpop.f32.mrf.mxu0
  %v5866 = vadd.f32 %v5852, %v5865
  %5867 = vdwg.mxu0
  %5868 = vmatpush.bf16.msra.mxu0 %v5051
  %5869 = vmatpush.bf16.msra.mxu0 %v5044
  %5870 = vmatpush.bf16.msra.mxu0 %v5037
  %5871 = vmatpush.bf16.msra.mxu0 %v5030
  %5872 = vmatpush.bf16.msra.mxu0 %v5023
  %5873 = vmatpush.bf16.msra.mxu0 %v5016
  %5874 = vmatpush.bf16.msra.mxu0 %v5009
  %5875 = vmatpush.bf16.msra.mxu0 %v5002
  %5876 = vmatmul.bf16.gmra.mxu0 %v2726
  %v5877 = vpop.f32.mrf.mxu0
  %v5878 = vadd.f32 %v5864, %v5877
  %v5879 = vpop.f32.mrf.mxu0
  %v5880 = vadd.f32 %v5866, %v5879
  %5881 = vdwg.mxu0
  %5882 = vmatpush.bf16.msra.mxu0 %v5107
  %5883 = vmatpush.bf16.msra.mxu0 %v5100
  %5884 = vmatpush.bf16.msra.mxu0 %v5093
  %5885 = vmatpush.bf16.msra.mxu0 %v5086
  %5886 = vmatpush.bf16.msra.mxu0 %v5079
  %5887 = vmatpush.bf16.msra.mxu0 %v5072
  %5888 = vmatpush.bf16.msra.mxu0 %v5065
  %5889 = vmatpush.bf16.msra.mxu0 %v5058
  %5890 = vmatmul.bf16.gmra.mxu0 %v2727
  %v5891 = vpop.f32.mrf.mxu0
  %v5892 = vadd.f32 %v5878, %v5891
  %v5893 = vpop.f32.mrf.mxu0
  %v5894 = vadd.f32 %v5880, %v5893
  %5895 = vdwg.mxu0
  %5896 = vmatpush.bf16.msra.mxu0 %v4716
  %5897 = vmatpush.bf16.msra.mxu0 %v4709
  %5898 = vmatpush.bf16.msra.mxu0 %v4702
  %5899 = vmatpush.bf16.msra.mxu0 %v4695
  %5900 = vmatpush.bf16.msra.mxu0 %v4688
  %5901 = vmatpush.bf16.msra.mxu0 %v4681
  %5902 = vmatpush.bf16.msra.mxu0 %v4674
  %5903 = vmatpush.bf16.msra.mxu0 %v4667
  %5904 = vmatmul.bf16.gmra.mxu0 %v2720
  %v5905 = vpop.f32.mrf.mxu0
  %v5906 = vadd.f32 %v3245, %v5905
  %v5907 = vpop.f32.mrf.mxu0
  %v5908 = vadd.f32 %v3245, %v5907
  %5909 = vdwg.mxu0
  %5910 = vmatpush.bf16.msra.mxu0 %v4772
  %5911 = vmatpush.bf16.msra.mxu0 %v4765
  %5912 = vmatpush.bf16.msra.mxu0 %v4758
  %5913 = vmatpush.bf16.msra.mxu0 %v4751
  %5914 = vmatpush.bf16.msra.mxu0 %v4744
  %5915 = vmatpush.bf16.msra.mxu0 %v4737
  %5916 = vmatpush.bf16.msra.mxu0 %v4730
  %5917 = vmatpush.bf16.msra.mxu0 %v4723
  %5918 = vmatmul.bf16.gmra.mxu0 %v2721
  %v5919 = vpop.f32.mrf.mxu0
  %v5920 = vadd.f32 %v5906, %v5919
  %v5921 = vpop.f32.mrf.mxu0
  %v5922 = vadd.f32 %v5908, %v5921
  %5923 = vdwg.mxu0
  %5924 = vmatpush.bf16.msra.mxu0 %v4828
  %5925 = vmatpush.bf16.msra.mxu0 %v4821
  %5926 = vmatpush.bf16.msra.mxu0 %v4814
  %5927 = vmatpush.bf16.msra.mxu0 %v4807
  %5928 = vmatpush.bf16.msra.mxu0 %v4800
  %5929 = vmatpush.bf16.msra.mxu0 %v4793
  %5930 = vmatpush.bf16.msra.mxu0 %v4786
  %5931 = vmatpush.bf16.msra.mxu0 %v4779
  %5932 = vmatmul.bf16.gmra.mxu0 %v2722
  %v5933 = vpop.f32.mrf.mxu0
  %v5934 = vadd.f32 %v5920, %v5933
  %v5935 = vpop.f32.mrf.mxu0
  %v5936 = vadd.f32 %v5922, %v5935
  %5937 = vdwg.mxu0
  %5938 = vmatpush.bf16.msra.mxu0 %v4884
  %5939 = vmatpush.bf16.msra.mxu0 %v4877
  %5940 = vmatpush.bf16.msra.mxu0 %v4870
  %5941 = vmatpush.bf16.msra.mxu0 %v4863
  %5942 = vmatpush.bf16.msra.mxu0 %v4856
  %5943 = vmatpush.bf16.msra.mxu0 %v4849
  %5944 = vmatpush.bf16.msra.mxu0 %v4842
  %5945 = vmatpush.bf16.msra.mxu0 %v4835
  %5946 = vmatmul.bf16.gmra.mxu0 %v2723
  %v5947 = vpop.f32.mrf.mxu0
  %v5948 = vadd.f32 %v5934, %v5947
  %v5949 = vpop.f32.mrf.mxu0
  %v5950 = vadd.f32 %v5936, %v5949
  %5951 = vdwg.mxu0
  %5952 = vmatpush.bf16.msra.mxu0 %v4940
  %5953 = vmatpush.bf16.msra.mxu0 %v4933
  %5954 = vmatpush.bf16.msra.mxu0 %v4926
  %5955 = vmatpush.bf16.msra.mxu0 %v4919
  %5956 = vmatpush.bf16.msra.mxu0 %v4912
  %5957 = vmatpush.bf16.msra.mxu0 %v4905
  %5958 = vmatpush.bf16.msra.mxu0 %v4898
  %5959 = vmatpush.bf16.msra.mxu0 %v4891
  %5960 = vmatmul.bf16.gmra.mxu0 %v2724
  %v5961 = vpop.f32.mrf.mxu0
  %v5962 = vadd.f32 %v5948, %v5961
  %v5963 = vpop.f32.mrf.mxu0
  %v5964 = vadd.f32 %v5950, %v5963
  %5965 = vdwg.mxu0
  %5966 = vmatpush.bf16.msra.mxu0 %v4996
  %5967 = vmatpush.bf16.msra.mxu0 %v4989
  %5968 = vmatpush.bf16.msra.mxu0 %v4982
  %5969 = vmatpush.bf16.msra.mxu0 %v4975
  %5970 = vmatpush.bf16.msra.mxu0 %v4968
  %5971 = vmatpush.bf16.msra.mxu0 %v4961
  %5972 = vmatpush.bf16.msra.mxu0 %v4954
  %5973 = vmatpush.bf16.msra.mxu0 %v4947
  %5974 = vmatmul.bf16.gmra.mxu0 %v2725
  %v5975 = vpop.f32.mrf.mxu0
  %v5976 = vadd.f32 %v5962, %v5975
  %v5977 = vpop.f32.mrf.mxu0
  %v5978 = vadd.f32 %v5964, %v5977
  %5979 = vdwg.mxu0
  %5980 = vmatpush.bf16.msra.mxu0 %v5052
  %5981 = vmatpush.bf16.msra.mxu0 %v5045
  %5982 = vmatpush.bf16.msra.mxu0 %v5038
  %5983 = vmatpush.bf16.msra.mxu0 %v5031
  %5984 = vmatpush.bf16.msra.mxu0 %v5024
  %5985 = vmatpush.bf16.msra.mxu0 %v5017
  %5986 = vmatpush.bf16.msra.mxu0 %v5010
  %5987 = vmatpush.bf16.msra.mxu0 %v5003
  %5988 = vmatmul.bf16.gmra.mxu0 %v2726
  %v5989 = vpop.f32.mrf.mxu0
  %v5990 = vadd.f32 %v5976, %v5989
  %v5991 = vpop.f32.mrf.mxu0
  %v5992 = vadd.f32 %v5978, %v5991
  %5993 = vdwg.mxu0
  %5994 = vmatpush.bf16.msra.mxu0 %v5108
  %5995 = vmatpush.bf16.msra.mxu0 %v5101
  %5996 = vmatpush.bf16.msra.mxu0 %v5094
  %5997 = vmatpush.bf16.msra.mxu0 %v5087
  %5998 = vmatpush.bf16.msra.mxu0 %v5080
  %5999 = vmatpush.bf16.msra.mxu0 %v5073
  %6000 = vmatpush.bf16.msra.mxu0 %v5066
  %6001 = vmatpush.bf16.msra.mxu0 %v5059
  %6002 = vmatmul.bf16.gmra.mxu0 %v2727
  %v6003 = vpop.f32.mrf.mxu0
  %v6004 = vadd.f32 %v5990, %v6003
  %v6005 = vpop.f32.mrf.mxu0
  %v6006 = vadd.f32 %v5992, %v6005
  %6007 = vdwg.mxu0
  %6008 = vmatpush.bf16.msra.mxu0 %v4717
  %6009 = vmatpush.bf16.msra.mxu0 %v4710
  %6010 = vmatpush.bf16.msra.mxu0 %v4703
  %6011 = vmatpush.bf16.msra.mxu0 %v4696
  %6012 = vmatpush.bf16.msra.mxu0 %v4689
  %6013 = vmatpush.bf16.msra.mxu0 %v4682
  %6014 = vmatpush.bf16.msra.mxu0 %v4675
  %6015 = vmatpush.bf16.msra.mxu0 %v4668
  %6016 = vmatmul.bf16.gmra.mxu0 %v2720
  %v6017 = vpop.f32.mrf.mxu0
  %v6018 = vadd.f32 %v3246, %v6017
  %v6019 = vpop.f32.mrf.mxu0
  %v6020 = vadd.f32 %v3246, %v6019
  %6021 = vdwg.mxu0
  %6022 = vmatpush.bf16.msra.mxu0 %v4773
  %6023 = vmatpush.bf16.msra.mxu0 %v4766
  %6024 = vmatpush.bf16.msra.mxu0 %v4759
  %6025 = vmatpush.bf16.msra.mxu0 %v4752
  %6026 = vmatpush.bf16.msra.mxu0 %v4745
  %6027 = vmatpush.bf16.msra.mxu0 %v4738
  %6028 = vmatpush.bf16.msra.mxu0 %v4731
  %6029 = vmatpush.bf16.msra.mxu0 %v4724
  %6030 = vmatmul.bf16.gmra.mxu0 %v2721
  %v6031 = vpop.f32.mrf.mxu0
  %v6032 = vadd.f32 %v6018, %v6031
  %v6033 = vpop.f32.mrf.mxu0
  %v6034 = vadd.f32 %v6020, %v6033
  %6035 = vdwg.mxu0
  %6036 = vmatpush.bf16.msra.mxu0 %v4829
  %6037 = vmatpush.bf16.msra.mxu0 %v4822
  %6038 = vmatpush.bf16.msra.mxu0 %v4815
  %6039 = vmatpush.bf16.msra.mxu0 %v4808
  %6040 = vmatpush.bf16.msra.mxu0 %v4801
  %6041 = vmatpush.bf16.msra.mxu0 %v4794
  %6042 = vmatpush.bf16.msra.mxu0 %v4787
  %6043 = vmatpush.bf16.msra.mxu0 %v4780
  %6044 = vmatmul.bf16.gmra.mxu0 %v2722
  %v6045 = vpop.f32.mrf.mxu0
  %v6046 = vadd.f32 %v6032, %v6045
  %v6047 = vpop.f32.mrf.mxu0
  %v6048 = vadd.f32 %v6034, %v6047
  %6049 = vdwg.mxu0
  %6050 = vmatpush.bf16.msra.mxu0 %v4885
  %6051 = vmatpush.bf16.msra.mxu0 %v4878
  %6052 = vmatpush.bf16.msra.mxu0 %v4871
  %6053 = vmatpush.bf16.msra.mxu0 %v4864
  %6054 = vmatpush.bf16.msra.mxu0 %v4857
  %6055 = vmatpush.bf16.msra.mxu0 %v4850
  %6056 = vmatpush.bf16.msra.mxu0 %v4843
  %6057 = vmatpush.bf16.msra.mxu0 %v4836
  %6058 = vmatmul.bf16.gmra.mxu0 %v2723
  %v6059 = vpop.f32.mrf.mxu0
  %v6060 = vadd.f32 %v6046, %v6059
  %v6061 = vpop.f32.mrf.mxu0
  %v6062 = vadd.f32 %v6048, %v6061
  %6063 = vdwg.mxu0
  %6064 = vmatpush.bf16.msra.mxu0 %v4941
  %6065 = vmatpush.bf16.msra.mxu0 %v4934
  %6066 = vmatpush.bf16.msra.mxu0 %v4927
  %6067 = vmatpush.bf16.msra.mxu0 %v4920
  %6068 = vmatpush.bf16.msra.mxu0 %v4913
  %6069 = vmatpush.bf16.msra.mxu0 %v4906
  %6070 = vmatpush.bf16.msra.mxu0 %v4899
  %6071 = vmatpush.bf16.msra.mxu0 %v4892
  %6072 = vmatmul.bf16.gmra.mxu0 %v2724
  %v6073 = vpop.f32.mrf.mxu0
  %v6074 = vadd.f32 %v6060, %v6073
  %v6075 = vpop.f32.mrf.mxu0
  %v6076 = vadd.f32 %v6062, %v6075
  %6077 = vdwg.mxu0
  %6078 = vmatpush.bf16.msra.mxu0 %v4997
  %6079 = vmatpush.bf16.msra.mxu0 %v4990
  %6080 = vmatpush.bf16.msra.mxu0 %v4983
  %6081 = vmatpush.bf16.msra.mxu0 %v4976
  %6082 = vmatpush.bf16.msra.mxu0 %v4969
  %6083 = vmatpush.bf16.msra.mxu0 %v4962
  %6084 = vmatpush.bf16.msra.mxu0 %v4955
  %6085 = vmatpush.bf16.msra.mxu0 %v4948
  %6086 = vmatmul.bf16.gmra.mxu0 %v2725
  %v6087 = vpop.f32.mrf.mxu0
  %v6088 = vadd.f32 %v6074, %v6087
  %v6089 = vpop.f32.mrf.mxu0
  %v6090 = vadd.f32 %v6076, %v6089
  %6091 = vdwg.mxu0
  %6092 = vmatpush.bf16.msra.mxu0 %v5053
  %6093 = vmatpush.bf16.msra.mxu0 %v5046
  %6094 = vmatpush.bf16.msra.mxu0 %v5039
  %6095 = vmatpush.bf16.msra.mxu0 %v5032
  %6096 = vmatpush.bf16.msra.mxu0 %v5025
  %6097 = vmatpush.bf16.msra.mxu0 %v5018
  %6098 = vmatpush.bf16.msra.mxu0 %v5011
  %6099 = vmatpush.bf16.msra.mxu0 %v5004
  %6100 = vmatmul.bf16.gmra.mxu0 %v2726
  %v6101 = vpop.f32.mrf.mxu0
  %v6102 = vadd.f32 %v6088, %v6101
  %v6103 = vpop.f32.mrf.mxu0
  %v6104 = vadd.f32 %v6090, %v6103
  %6105 = vdwg.mxu0
  %6106 = vmatpush.bf16.msra.mxu0 %v5109
  %6107 = vmatpush.bf16.msra.mxu0 %v5102
  %6108 = vmatpush.bf16.msra.mxu0 %v5095
  %6109 = vmatpush.bf16.msra.mxu0 %v5088
  %6110 = vmatpush.bf16.msra.mxu0 %v5081
  %6111 = vmatpush.bf16.msra.mxu0 %v5074
  %6112 = vmatpush.bf16.msra.mxu0 %v5067
  %6113 = vmatpush.bf16.msra.mxu0 %v5060
  %6114 = vmatmul.bf16.gmra.mxu0 %v2727
  %v6115 = vpop.f32.mrf.mxu0
  %v6116 = vadd.f32 %v6102, %v6115
  %v6117 = vpop.f32.mrf.mxu0
  %v6118 = vadd.f32 %v6104, %v6117
  %6119 = vdwg.mxu0
  %6120 = vmatpush.bf16.msra.mxu0 %v4718
  %6121 = vmatpush.bf16.msra.mxu0 %v4711
  %6122 = vmatpush.bf16.msra.mxu0 %v4704
  %6123 = vmatpush.bf16.msra.mxu0 %v4697
  %6124 = vmatpush.bf16.msra.mxu0 %v4690
  %6125 = vmatpush.bf16.msra.mxu0 %v4683
  %6126 = vmatpush.bf16.msra.mxu0 %v4676
  %6127 = vmatpush.bf16.msra.mxu0 %v4669
  %6128 = vmatmul.bf16.gmra.mxu0 %v2720
  %v6129 = vpop.f32.mrf.mxu0
  %v6130 = vadd.f32 %v3247, %v6129
  %v6131 = vpop.f32.mrf.mxu0
  %v6132 = vadd.f32 %v3247, %v6131
  %6133 = vdwg.mxu0
  %6134 = vmatpush.bf16.msra.mxu0 %v4774
  %6135 = vmatpush.bf16.msra.mxu0 %v4767
  %6136 = vmatpush.bf16.msra.mxu0 %v4760
  %6137 = vmatpush.bf16.msra.mxu0 %v4753
  %6138 = vmatpush.bf16.msra.mxu0 %v4746
  %6139 = vmatpush.bf16.msra.mxu0 %v4739
  %6140 = vmatpush.bf16.msra.mxu0 %v4732
  %6141 = vmatpush.bf16.msra.mxu0 %v4725
  %6142 = vmatmul.bf16.gmra.mxu0 %v2721
  %v6143 = vpop.f32.mrf.mxu0
  %v6144 = vadd.f32 %v6130, %v6143
  %v6145 = vpop.f32.mrf.mxu0
  %v6146 = vadd.f32 %v6132, %v6145
  %6147 = vdwg.mxu0
  %6148 = vmatpush.bf16.msra.mxu0 %v4830
  %6149 = vmatpush.bf16.msra.mxu0 %v4823
  %6150 = vmatpush.bf16.msra.mxu0 %v4816
  %6151 = vmatpush.bf16.msra.mxu0 %v4809
  %6152 = vmatpush.bf16.msra.mxu0 %v4802
  %6153 = vmatpush.bf16.msra.mxu0 %v4795
  %6154 = vmatpush.bf16.msra.mxu0 %v4788
  %6155 = vmatpush.bf16.msra.mxu0 %v4781
  %6156 = vmatmul.bf16.gmra.mxu0 %v2722
  %v6157 = vpop.f32.mrf.mxu0
  %v6158 = vadd.f32 %v6144, %v6157
  %v6159 = vpop.f32.mrf.mxu0
  %v6160 = vadd.f32 %v6146, %v6159
  %6161 = vdwg.mxu0
  %6162 = vmatpush.bf16.msra.mxu0 %v4886
  %6163 = vmatpush.bf16.msra.mxu0 %v4879
  %6164 = vmatpush.bf16.msra.mxu0 %v4872
  %6165 = vmatpush.bf16.msra.mxu0 %v4865
  %6166 = vmatpush.bf16.msra.mxu0 %v4858
  %6167 = vmatpush.bf16.msra.mxu0 %v4851
  %6168 = vmatpush.bf16.msra.mxu0 %v4844
  %6169 = vmatpush.bf16.msra.mxu0 %v4837
  %6170 = vmatmul.bf16.gmra.mxu0 %v2723
  %v6171 = vpop.f32.mrf.mxu0
  %v6172 = vadd.f32 %v6158, %v6171
  %v6173 = vpop.f32.mrf.mxu0
  %v6174 = vadd.f32 %v6160, %v6173
  %6175 = vdwg.mxu0
  %6176 = vmatpush.bf16.msra.mxu0 %v4942
  %6177 = vmatpush.bf16.msra.mxu0 %v4935
  %6178 = vmatpush.bf16.msra.mxu0 %v4928
  %6179 = vmatpush.bf16.msra.mxu0 %v4921
  %6180 = vmatpush.bf16.msra.mxu0 %v4914
  %6181 = vmatpush.bf16.msra.mxu0 %v4907
  %6182 = vmatpush.bf16.msra.mxu0 %v4900
  %6183 = vmatpush.bf16.msra.mxu0 %v4893
  %6184 = vmatmul.bf16.gmra.mxu0 %v2724
  %v6185 = vpop.f32.mrf.mxu0
  %v6186 = vadd.f32 %v6172, %v6185
  %v6187 = vpop.f32.mrf.mxu0
  %v6188 = vadd.f32 %v6174, %v6187
  %6189 = vdwg.mxu0
  %6190 = vmatpush.bf16.msra.mxu0 %v4998
  %6191 = vmatpush.bf16.msra.mxu0 %v4991
  %6192 = vmatpush.bf16.msra.mxu0 %v4984
  %6193 = vmatpush.bf16.msra.mxu0 %v4977
  %6194 = vmatpush.bf16.msra.mxu0 %v4970
  %6195 = vmatpush.bf16.msra.mxu0 %v4963
  %6196 = vmatpush.bf16.msra.mxu0 %v4956
  %6197 = vmatpush.bf16.msra.mxu0 %v4949
  %6198 = vmatmul.bf16.gmra.mxu0 %v2725
  %v6199 = vpop.f32.mrf.mxu0
  %v6200 = vadd.f32 %v6186, %v6199
  %v6201 = vpop.f32.mrf.mxu0
  %v6202 = vadd.f32 %v6188, %v6201
  %6203 = vdwg.mxu0
  %6204 = vmatpush.bf16.msra.mxu0 %v5054
  %6205 = vmatpush.bf16.msra.mxu0 %v5047
  %6206 = vmatpush.bf16.msra.mxu0 %v5040
  %6207 = vmatpush.bf16.msra.mxu0 %v5033
  %6208 = vmatpush.bf16.msra.mxu0 %v5026
  %6209 = vmatpush.bf16.msra.mxu0 %v5019
  %6210 = vmatpush.bf16.msra.mxu0 %v5012
  %6211 = vmatpush.bf16.msra.mxu0 %v5005
  %6212 = vmatmul.bf16.gmra.mxu0 %v2726
  %v6213 = vpop.f32.mrf.mxu0
  %v6214 = vadd.f32 %v6200, %v6213
  %v6215 = vpop.f32.mrf.mxu0
  %v6216 = vadd.f32 %v6202, %v6215
  %6217 = vdwg.mxu0
  %6218 = vmatpush.bf16.msra.mxu0 %v5110
  %6219 = vmatpush.bf16.msra.mxu0 %v5103
  %6220 = vmatpush.bf16.msra.mxu0 %v5096
  %6221 = vmatpush.bf16.msra.mxu0 %v5089
  %6222 = vmatpush.bf16.msra.mxu0 %v5082
  %6223 = vmatpush.bf16.msra.mxu0 %v5075
  %6224 = vmatpush.bf16.msra.mxu0 %v5068
  %6225 = vmatpush.bf16.msra.mxu0 %v5061
  %6226 = vmatmul.bf16.gmra.mxu0 %v2727
  %v6227 = vpop.f32.mrf.mxu0
  %v6228 = vadd.f32 %v6214, %v6227
  %v6229 = vpop.f32.mrf.mxu0
  %v6230 = vadd.f32 %v6216, %v6229
  %6231 = vdwg.mxu0
  %6232 = vmatpush.bf16.msra.mxu0 %v4719
  %6233 = vmatpush.bf16.msra.mxu0 %v4712
  %6234 = vmatpush.bf16.msra.mxu0 %v4705
  %6235 = vmatpush.bf16.msra.mxu0 %v4698
  %6236 = vmatpush.bf16.msra.mxu0 %v4691
  %6237 = vmatpush.bf16.msra.mxu0 %v4684
  %6238 = vmatpush.bf16.msra.mxu0 %v4677
  %6239 = vmatpush.bf16.msra.mxu0 %v4670
  %6240 = vmatmul.bf16.gmra.mxu0 %v2720
  %v6241 = vpop.f32.mrf.mxu0
  %v6242 = vadd.f32 %v3248, %v6241
  %v6243 = vpop.f32.mrf.mxu0
  %v6244 = vadd.f32 %v3248, %v6243
  %6245 = vdwg.mxu0
  %6246 = vmatpush.bf16.msra.mxu0 %v4775
  %6247 = vmatpush.bf16.msra.mxu0 %v4768
  %6248 = vmatpush.bf16.msra.mxu0 %v4761
  %6249 = vmatpush.bf16.msra.mxu0 %v4754
  %6250 = vmatpush.bf16.msra.mxu0 %v4747
  %6251 = vmatpush.bf16.msra.mxu0 %v4740
  %6252 = vmatpush.bf16.msra.mxu0 %v4733
  %6253 = vmatpush.bf16.msra.mxu0 %v4726
  %6254 = vmatmul.bf16.gmra.mxu0 %v2721
  %v6255 = vpop.f32.mrf.mxu0
  %v6256 = vadd.f32 %v6242, %v6255
  %v6257 = vpop.f32.mrf.mxu0
  %v6258 = vadd.f32 %v6244, %v6257
  %6259 = vdwg.mxu0
  %6260 = vmatpush.bf16.msra.mxu0 %v4831
  %6261 = vmatpush.bf16.msra.mxu0 %v4824
  %6262 = vmatpush.bf16.msra.mxu0 %v4817
  %6263 = vmatpush.bf16.msra.mxu0 %v4810
  %6264 = vmatpush.bf16.msra.mxu0 %v4803
  %6265 = vmatpush.bf16.msra.mxu0 %v4796
  %6266 = vmatpush.bf16.msra.mxu0 %v4789
  %6267 = vmatpush.bf16.msra.mxu0 %v4782
  %6268 = vmatmul.bf16.gmra.mxu0 %v2722
  %v6269 = vpop.f32.mrf.mxu0
  %v6270 = vadd.f32 %v6256, %v6269
  %v6271 = vpop.f32.mrf.mxu0
  %v6272 = vadd.f32 %v6258, %v6271
  %6273 = vdwg.mxu0
  %6274 = vmatpush.bf16.msra.mxu0 %v4887
  %6275 = vmatpush.bf16.msra.mxu0 %v4880
  %6276 = vmatpush.bf16.msra.mxu0 %v4873
  %6277 = vmatpush.bf16.msra.mxu0 %v4866
  %6278 = vmatpush.bf16.msra.mxu0 %v4859
  %6279 = vmatpush.bf16.msra.mxu0 %v4852
  %6280 = vmatpush.bf16.msra.mxu0 %v4845
  %6281 = vmatpush.bf16.msra.mxu0 %v4838
  %6282 = vmatmul.bf16.gmra.mxu0 %v2723
  %v6283 = vpop.f32.mrf.mxu0
  %v6284 = vadd.f32 %v6270, %v6283
  %v6285 = vpop.f32.mrf.mxu0
  %v6286 = vadd.f32 %v6272, %v6285
  %6287 = vdwg.mxu0
  %6288 = vmatpush.bf16.msra.mxu0 %v4943
  %6289 = vmatpush.bf16.msra.mxu0 %v4936
  %6290 = vmatpush.bf16.msra.mxu0 %v4929
  %6291 = vmatpush.bf16.msra.mxu0 %v4922
  %6292 = vmatpush.bf16.msra.mxu0 %v4915
  %6293 = vmatpush.bf16.msra.mxu0 %v4908
  %6294 = vmatpush.bf16.msra.mxu0 %v4901
  %6295 = vmatpush.bf16.msra.mxu0 %v4894
  %6296 = vmatmul.bf16.gmra.mxu0 %v2724
  %v6297 = vpop.f32.mrf.mxu0
  %v6298 = vadd.f32 %v6284, %v6297
  %v6299 = vpop.f32.mrf.mxu0
  %v6300 = vadd.f32 %v6286, %v6299
  %6301 = vdwg.mxu0
  %6302 = vmatpush.bf16.msra.mxu0 %v4999
  %6303 = vmatpush.bf16.msra.mxu0 %v4992
  %6304 = vmatpush.bf16.msra.mxu0 %v4985
  %6305 = vmatpush.bf16.msra.mxu0 %v4978
  %6306 = vmatpush.bf16.msra.mxu0 %v4971
  %6307 = vmatpush.bf16.msra.mxu0 %v4964
  %6308 = vmatpush.bf16.msra.mxu0 %v4957
  %6309 = vmatpush.bf16.msra.mxu0 %v4950
  %6310 = vmatmul.bf16.gmra.mxu0 %v2725
  %v6311 = vpop.f32.mrf.mxu0
  %v6312 = vadd.f32 %v6298, %v6311
  %v6313 = vpop.f32.mrf.mxu0
  %v6314 = vadd.f32 %v6300, %v6313
  %6315 = vdwg.mxu0
  %6316 = vmatpush.bf16.msra.mxu0 %v5055
  %6317 = vmatpush.bf16.msra.mxu0 %v5048
  %6318 = vmatpush.bf16.msra.mxu0 %v5041
  %6319 = vmatpush.bf16.msra.mxu0 %v5034
  %6320 = vmatpush.bf16.msra.mxu0 %v5027
  %6321 = vmatpush.bf16.msra.mxu0 %v5020
  %6322 = vmatpush.bf16.msra.mxu0 %v5013
  %6323 = vmatpush.bf16.msra.mxu0 %v5006
  %6324 = vmatmul.bf16.gmra.mxu0 %v2726
  %v6325 = vpop.f32.mrf.mxu0
  %v6326 = vadd.f32 %v6312, %v6325
  %v6327 = vpop.f32.mrf.mxu0
  %v6328 = vadd.f32 %v6314, %v6327
  %6329 = vdwg.mxu0
  %6330 = vmatpush.bf16.msra.mxu0 %v5111
  %6331 = vmatpush.bf16.msra.mxu0 %v5104
  %6332 = vmatpush.bf16.msra.mxu0 %v5097
  %6333 = vmatpush.bf16.msra.mxu0 %v5090
  %6334 = vmatpush.bf16.msra.mxu0 %v5083
  %6335 = vmatpush.bf16.msra.mxu0 %v5076
  %6336 = vmatpush.bf16.msra.mxu0 %v5069
  %6337 = vmatpush.bf16.msra.mxu0 %v5062
  %6338 = vmatmul.bf16.gmra.mxu0 %v2727
  %v6339 = vpop.f32.mrf.mxu0
  %v6340 = vadd.f32 %v6326, %v6339
  %v6341 = vpop.f32.mrf.mxu0
  %v6342 = vadd.f32 %v6328, %v6341
  %6343 = vdwg.mxu0
  %v6344 = vtanh.pop %v5668
  %v6345 = vtanh.pop %v5780
  %v6346 = vtanh.pop %v5892
  %v6347 = vtanh.pop %v6004
  %v6348 = vtanh.pop %v6116
  %v6349 = vtanh.pop %v6228
  %v6350 = vtanh.pop %v6340
  %v6351 = vtanh.pop %v5670
  %v6352 = vtanh.pop %v5782
  %v6353 = vtanh.pop %v5894
  %v6354 = vtanh.pop %v6006
  %v6355 = vtanh.pop %v6118
  %v6356 = vtanh.pop %v6230
  %v6357 = vtanh.pop %v6342
  %6358 = vst [vmem:[%s9] sm:$0xff] %v6344
  %6359 = vst [vmem:[%s9 + $0x8] sm:$0xff] %v6345
  %6360 = vst [vmem:[%s9 + $0x10] sm:$0xff] %v6346
  %6361 = vst [vmem:[%s9 + $0x18] sm:$0xff] %v6347
  %6362 = vst [vmem:[%s9 + $0x20] sm:$0xff] %v6348
  %6363 = vst [vmem:[%s9 + $0x28] sm:$0xff] %v6349
  %vm6364 = vcmask 130048
  %6365 = vst.msk [vmem:[%s9 + $0x30] sm:$0xff] %vm6364, %v6350
  %6366 = vst [vmem:[%s9 + $0x38] sm:$0xff] %v6351
  %6367 = vst [vmem:[%s9 + $0x40] sm:$0xff] %v6352
  %6368 = vst [vmem:[%s9 + $0x48] sm:$0xff] %v6353
  %6369 = vst [vmem:[%s9 + $0x50] sm:$0xff] %v6354
  %6370 = vst [vmem:[%s9 + $0x58] sm:$0xff] %v6355
  %6371 = vst [vmem:[%s9 + $0x60] sm:$0xff] %v6356
  %6372 = vst.msk [vmem:[%s9 + $0x68] sm:$0xff] %vm6364, %v6357
  // Predicated region
  $region38: #{generator_forward.1} parent=0 // pred_check
    _
  $region39: #{generator_forward.1} parent=0 // pred_check_branch
    %6374 = sbr.rel (0) target = $region41
  $region40: #{generator_forward.1} parent=0 // pred_region
    _
  $region41: #{generator_forward.1} parent=0 // pred_fallthru
    _
  // Predicated region
  $region42: #{generator_forward.1} parent=0 // pred_check
    _
  $region43: #{generator_forward.1} parent=0 // pred_check_branch
    %6376 = sbr.rel (0) target = $region45
  $region44: #{generator_forward.1} parent=0 // pred_region
    _
  $region45: #{generator_forward.1} parent=0 // pred_fallthru
    _

</llo_original>
